<compile_context>
chip_gen: v5e
topology: v5e:2x2
jax: 0.10.0
libtpu: 0.0.40
codegen_flags: <defaults>
</compile_context>

<pallas_src>
import numpy as np
import jax
import jax.numpy as jnp
from jax.experimental import pallas as pl
from jax.experimental.pallas import tpu as pltpu


# ----------------------------- Pallas kernel ---------------------------------
def interdomain_gp_kernel(t_ref, thets_ref, betas_ref, ws_ref, qs_ref, zs_ref,
                          inv_l_ref, out_ref):
    # t_ref     : (mc, d, tT)  current T-tile of inputs, all MC samples (T on lanes)
    # thets_ref : (mc, n, d)   RFF frequencies (already / process lengthscale) [resident]
    # betas_ref : (mc, n, 1)   RFF phases                                      [resident]
    # ws_ref    : (mc, n, 1)   RFF weights                                     [resident]
    # qs_ref    : (mc, M, 1)   cross_amp * variational update vector           [resident]
    # zs_ref    : (1,  M, d)   inducing inputs pre-scaled by 1/cross_lengthscale [resident]
    # inv_l_ref : (1,  d, 1)   1 / cross_lengthscale (ARD)                     [resident]
    # out_ref   : (mc, tT)     T on the lane axis (lane-dense store)
    t = t_ref[...]                                    # (mc, d, tT)
    th = thets_ref[...]                               # (mc, n, d)
    zs = zs_ref[...]                                  # (1, M, d)
    d = t.shape[1]

    # ---- random-feature branch: ws . cos(t @ thets + betas) ----
    # K = d contraction unrolled on the VPU; intermediates are (mc, n, tT) so cos runs
    # on fully lane-occupied vregs and the reduction is a sublane accumulate.
    proj = betas_ref[...]                             # (mc, n, 1); broadcasts on 1st FMA
    for dd in range(d):
        proj = proj + th[:, :, dd:dd + 1] * t[:, dd:dd + 1, :]    # (mc, n, tT)
    phit = jnp.cos(proj)                              # (mc, n, tT)   EUP
    random_part = jnp.sum(ws_ref[...] * phit, axis=1)              # (mc, tT)

    # ---- basis branch: qs . K_rbf(t, z), ARD RBF in direct-difference form ----
    ts = t * inv_l_ref[...]                           # (mc, d, tT)
    sq = None
    for dd in range(d):
        diff = ts[:, dd:dd + 1, :] - zs[:, :, dd:dd + 1]           # (mc, M, tT)
        sq = diff * diff if sq is None else sq + diff * diff
    Ktz = jnp.exp(-0.5 * sq)                          # (mc, M, tT)   EUP
    basis_part = jnp.sum(qs_ref[...] * Ktz, axis=1)                # (mc, tT)

    out_ref[...] = (basis_part + random_part).astype(out_ref.dtype)


def interdomain_gp_forward_pallas(t, thets, betas, ws, qs, z, cross_lengthscale,
                                  cross_amp=1.0, t_tile=1024):
    """t: (mc, T, d); thets: (mc, d, n); betas/ws: (mc, n); qs: (mc, M); z: (M, d)."""
    mc, T, d = t.shape
    n = thets.shape[-1]
    M = z.shape[0]

    inv_l = (1.0 / jnp.asarray(cross_lengthscale, jnp.float32)).reshape(d)     # (d,)

    # Grid-constant prep hoisted out of the kernel.  All small operands are laid out so
    # in-kernel broadcasts are pure sublane / lane / leading-dim broadcasts with T on
    # the lane axis.
    t_t = jnp.transpose(t.astype(jnp.float32), (0, 2, 1))                      # (mc, d, T)
    thets_t = jnp.transpose(thets.astype(jnp.float32), (0, 2, 1))              # (mc, n, d)
    betas3 = betas.astype(jnp.float32).reshape(mc, n, 1)
    ws3 = ws.astype(jnp.float32).reshape(mc, n, 1)
    qs3 = (cross_amp * qs).astype(jnp.float32).reshape(mc, M, 1)               # fold amp
    zs = (z.astype(jnp.float32) * inv_l[None, :]).reshape(1, M, d)             # (1, M, d)
    inv_l3 = inv_l.reshape(1, d, 1)                                            # (1, d, 1)

    # Tile only over T (lane axis). When tiling, tT is a multiple of 128 (lane-dense
    # stores) and capped at ~T/2 so there are >=2 "parallel" grid steps where possible
    # (keeps both v7x TensorCores busy; no effect on v5e/v6e).
    t_tile = max(128, (int(t_tile) // 128) * 128)
    if T <= 128:
        tT = T
    else:
        half = 128 * pl.cdiv(pl.cdiv(T, 2), 128)
        tT = max(128, min(t_tile, half))
    grid = (pl.cdiv(T, tT),)

    return pl.pallas_call(
        interdomain_gp_kernel,
        out_shape=jax.ShapeDtypeStruct((mc, T), jnp.float32),
        grid=grid,
        in_specs=[
            pl.BlockSpec((mc, d, tT), lambda i: (0, 0, i)),   # t       : tiled over T
            pl.BlockSpec((mc, n, d), lambda i: (0, 0, 0)),    # thets   : VMEM-resident
            pl.BlockSpec((mc, n, 1), lambda i: (0, 0, 0)),    # betas   : VMEM-resident
            pl.BlockSpec((mc, n, 1), lambda i: (0, 0, 0)),    # ws      : VMEM-resident
            pl.BlockSpec((mc, M, 1), lambda i: (0, 0, 0)),    # amp*qs  : VMEM-resident
            pl.BlockSpec((1, M, d), lambda i: (0, 0, 0)),     # z / l   : VMEM-resident
            pl.BlockSpec((1, d, 1), lambda i: (0, 0, 0)),     # 1 / l   : VMEM-resident
        ],
        out_specs=pl.BlockSpec((mc, tT), lambda i: (0, i)),
        compiler_params=pltpu.CompilerParams(
            dimension_semantics=("parallel",)),
    )(t_t, thets_t, betas3, ws3, qs3, zs, inv_l3)


# ------------------------------- JAX glue -------------------------------------
def ls2pr(l):
    return 1.0 / (l * l)


def pr2ls(p):
    return 1.0 / jnp.sqrt(p)


def rbf_ard(x1, x2, lengthscale):
    # gpytorch RBFKernel: exp(-0.5 * ||(x1 - x2) / l||^2), ARD lengthscale.
    a = x1 / lengthscale
    b = x2 / lengthscale
    sq = jnp.sum((a[..., :, None, :] - b[..., None, :, :]) ** 2, axis=-1)
    return jnp.exp(-0.5 * sq)


def compute_q(z, thets, betas, ws, eps_u, var_mean, chol_var, lengthscale, jitter):
    """Wilson et al. (2020) variational update vector — plain JAX (Cholesky solve)."""
    # TODO(synk): interdomain transform helpers (ls2pr/pr2ls/I_interdom) for phiz and
    #             the interdomain prior amplitude are gpytorch-external; the standard
    #             RBF prior form + whitening is used here.
    M = z.shape[0]
    Kzz = rbf_ard(z, z, lengthscale) + jitter * jnp.eye(M, dtype=jnp.float32)
    L = jnp.linalg.cholesky(Kzz)
    phiz = jnp.cos(jnp.einsum('md,bdn->bmn', z, thets) + betas[:, None, :])  # (mc, M, n)
    us = var_mean[None, :] + jnp.einsum('ij,bj->bi', chol_var, eps_u)        # (mc, M)
    us = jnp.einsum('bi,ij->bj', us, L)                                      # whitening
    x = us - jnp.einsum('bmn,bn->bm', phiz, ws)                              # (mc, M)
    qs = jax.vmap(lambda xb: jax.scipy.linalg.cho_solve((L, True), xb))(x)
    return qs


def reference_forward(t, thets, betas, ws, qs, z, lengthscale, cross_amp=1.0):
    phit = jnp.cos(jnp.einsum('btd,bdn->btn', t, thets) + betas[:, None, :])
    Ktz = cross_amp * rbf_ard(t, z[None, :, :], lengthscale)    # (mc, T, M)
    basis_part = jnp.einsum('bz,btz->bt', qs, Ktz)
    random_part = jnp.einsum('bn,btn->bt', ws, phit)
    return basis_part + random_part


# --------------------------------- main ----------------------------------------
if __name__ == "__main__":
    # Small, module-consistent shapes (num_gps = 1, squeezed).
    mc_samples = 4            # module default 11; small for test
    T = 256                   # number of GP input points (exercises T-tiling, grid=(2,))
    d_in = 2                  # inducing-input dimensionality
    M = 16                    # num_inducing_points (4x4 regular grid)
    n_basis = 32              # num_basis_functions
    process_ls_val = 0.5      # process lengthscale (> 0.1 constraint); keeps Kzz
                              # well-conditioned so qs stays O(1) — avoids f32
                              # summation-order noise masking the comparison.
    transform_ls_val = 0.7    # transform lengthscale (< 0.8 constraint)
    cross_amp = 1.0           # transform_amp init
    jitter = 1e-6
    prior_mean_factor = 0.5
    prior_cov_factor = 1.0

    process_ls = jnp.full((d_in,), process_ls_val, dtype=jnp.float32)
    transform_ls = jnp.full((d_in,), transform_ls_val, dtype=jnp.float32)
    # cross_kernel lengthscale: pr2ls(1/(1/ls2pr(ls_f) + 1/ls2pr(ls_g))) = sqrt(lf^2+lg^2)
    cross_ls = pr2ls(1.0 / (1.0 / ls2pr(process_ls) + 1.0 / ls2pr(transform_ls)))

    # Deterministic parameter init (matches __init__ shapes).
    g = jnp.linspace(-1.0, 1.0, 4)
    zz, yy = jnp.meshgrid(g, g, indexing="ij")
    inducing_inputs = jnp.stack([zz.ravel(), yy.ravel()], axis=-1).astype(jnp.float32)  # (M, d_in)
    var_mean = prior_mean_factor * jnp.ones((M,), dtype=jnp.float32)
    chol_var = prior_cov_factor * jnp.eye(M, dtype=jnp.float32)   # CholeskyVariationalDistribution init

    # Deterministic "sample_basis" + variational-rsample noise.
    key = jax.random.PRNGKey(0)
    k_t, k_th, k_w, k_b, k_u = jax.random.split(key, 5)
    t = jax.random.normal(k_t, (mc_samples, T, d_in), dtype=jnp.float32)
    thets = jax.random.normal(k_th, (mc_samples, d_in, n_basis), dtype=jnp.float32) \
        / process_ls[None, :, None]
    ws = jnp.sqrt(2.0 / n_basis) * jax.random.normal(k_w, (mc_samples, n_basis), dtype=jnp.float32)
    betas = 2.0 * jnp.pi * jax.random.uniform(k_b, (mc_samples, n_basis), dtype=jnp.float32)
    eps_u = jax.random.normal(k_u, (mc_samples, M), dtype=jnp.float32)

    # compute_q (glue: Cholesky + cholesky_solve).
    qs = compute_q(inducing_inputs, thets, betas, ws, eps_u,
                   var_mean, chol_var, process_ls, jitter)

    # Pallas forward (t_tile=128 so the test exercises 2 lane-dense T tiles / grid steps).
    out = interdomain_gp_forward_pallas(t, thets, betas, ws, qs, inducing_inputs,
                                        cross_ls, cross_amp=cross_amp, t_tile=128)
    out = jax.block_until_ready(out)

    # Verify against a pure-JAX reference of the torch forward.  Tolerance 1e-3 absorbs
    # f32 summation-order differences and EUP-vs-XLA transcendental ULP differences.
    ref = reference_forward(t, thets, betas, ws, qs, inducing_inputs, cross_ls,
                            cross_amp=cross_amp)
    assert out.shape == (mc_samples, T)
    np.testing.assert_allclose(np.asarray(out), np.asarray(ref), rtol=1e-3, atol=1e-3)

    print("KERNEL_OK")
</pallas_src>

<mosaic_0001>
module attributes {stable_mosaic.version = 11 : i64} {
  func.func @interdomain_gp_kernel(%arg0: i32, %arg1: memref<4x2x128xf32, #tpu.memory_space<vmem>>, %arg2: memref<4x32x2xf32, #tpu.memory_space<vmem>>, %arg3: memref<4x32x1xf32, #tpu.memory_space<vmem>>, %arg4: memref<4x32x1xf32, #tpu.memory_space<vmem>>, %arg5: memref<4x16x1xf32, #tpu.memory_space<vmem>>, %arg6: memref<1x16x2xf32, #tpu.memory_space<vmem>>, %arg7: memref<1x2x1xf32, #tpu.memory_space<vmem>>, %arg8: memref<4x128xf32, #tpu.memory_space<vmem>>) attributes {dimension_semantics = [#tpu.dimension_semantics<parallel>], iteration_bounds = array<i64: 2>, scalar_prefetch = 0 : i64, scratch_operands = 0 : i64, tpu.core_type = #tpu.core_type<tc>, window_params = [{transform_indices = @transform_0, window_bounds = array<i64: 4, 2, 128>}, {pipeline_mode = #tpu.pipeline_mode<synchronous>, transform_indices = @transform_1, window_bounds = array<i64: 4, 32, 2>}, {pipeline_mode = #tpu.pipeline_mode<synchronous>, transform_indices = @transform_2, window_bounds = array<i64: 4, 32, 1>}, {pipeline_mode = #tpu.pipeline_mode<synchronous>, transform_indices = @transform_3, window_bounds = array<i64: 4, 32, 1>}, {pipeline_mode = #tpu.pipeline_mode<synchronous>, transform_indices = @transform_4, window_bounds = array<i64: 4, 16, 1>}, {pipeline_mode = #tpu.pipeline_mode<synchronous>, transform_indices = @transform_5, window_bounds = array<i64: 1, 16, 2>}, {pipeline_mode = #tpu.pipeline_mode<synchronous>, transform_indices = @transform_6, window_bounds = array<i64: 1, 2, 1>}, {transform_indices = @transform_7, window_bounds = array<i64: 4, 128>}]} {
    %c0 = arith.constant 0 : index
    %c0_0 = arith.constant 0 : index
    %c0_1 = arith.constant 0 : index
    %0 = vector.load %arg1[%c0, %c0_0, %c0_1] : memref<4x2x128xf32, #tpu.memory_space<vmem>>, vector<4x2x128xf32>
    %c0_2 = arith.constant 0 : index
    %c0_3 = arith.constant 0 : index
    %c0_4 = arith.constant 0 : index
    %1 = vector.load %arg2[%c0_2, %c0_3, %c0_4] : memref<4x32x2xf32, #tpu.memory_space<vmem>>, vector<4x32x2xf32>
    %c0_5 = arith.constant 0 : index
    %c0_6 = arith.constant 0 : index
    %c0_7 = arith.constant 0 : index
    %2 = vector.load %arg6[%c0_5, %c0_6, %c0_7] : memref<1x16x2xf32, #tpu.memory_space<vmem>>, vector<1x16x2xf32>
    %c0_8 = arith.constant 0 : index
    %c0_9 = arith.constant 0 : index
    %c0_10 = arith.constant 0 : index
    %3 = vector.load %arg3[%c0_8, %c0_9, %c0_10] : memref<4x32x1xf32, #tpu.memory_space<vmem>>, vector<4x32x1xf32>
    %4 = vector.extract_strided_slice %1 {offsets = [0, 0, 0], sizes = [4, 32, 1], strides = [1, 1, 1]} : vector<4x32x2xf32> to vector<4x32x1xf32>
    %5 = vector.extract_strided_slice %0 {offsets = [0, 0, 0], sizes = [4, 1, 128], strides = [1, 1, 1]} : vector<4x2x128xf32> to vector<4x1x128xf32>
    %6 = vector.broadcast %4 : vector<4x32x1xf32> to vector<4x32x128xf32>
    %7 = vector.broadcast %5 : vector<4x1x128xf32> to vector<4x32x128xf32>
    %8 = arith.mulf %6, %7 : vector<4x32x128xf32>
    %9 = vector.broadcast %3 : vector<4x32x1xf32> to vector<4x32x128xf32>
    %10 = arith.addf %9, %8 : vector<4x32x128xf32>
    %11 = vector.extract_strided_slice %1 {offsets = [0, 0, 1], sizes = [4, 32, 1], strides = [1, 1, 1]} : vector<4x32x2xf32> to vector<4x32x1xf32>
    %12 = vector.extract_strided_slice %0 {offsets = [0, 1, 0], sizes = [4, 1, 128], strides = [1, 1, 1]} : vector<4x2x128xf32> to vector<4x1x128xf32>
    %13 = vector.broadcast %11 : vector<4x32x1xf32> to vector<4x32x128xf32>
    %14 = vector.broadcast %12 : vector<4x1x128xf32> to vector<4x32x128xf32>
    %15 = arith.mulf %13, %14 : vector<4x32x128xf32>
    %16 = arith.addf %10, %15 : vector<4x32x128xf32>
    %17 = math.cos %16 : vector<4x32x128xf32>
    %c0_11 = arith.constant 0 : index
    %c0_12 = arith.constant 0 : index
    %c0_13 = arith.constant 0 : index
    %18 = vector.load %arg4[%c0_11, %c0_12, %c0_13] : memref<4x32x1xf32, #tpu.memory_space<vmem>>, vector<4x32x1xf32>
    %19 = vector.broadcast %18 : vector<4x32x1xf32> to vector<4x32x128xf32>
    %20 = arith.mulf %19, %17 : vector<4x32x128xf32>
    %cst = arith.constant dense<0.000000e+00> : vector<4x128xf32>
    %21 = vector.multi_reduction <add>, %20, %cst [1] : vector<4x32x128xf32> to vector<4x128xf32>
    %c0_14 = arith.constant 0 : index
    %c0_15 = arith.constant 0 : index
    %c0_16 = arith.constant 0 : index
    %22 = vector.load %arg7[%c0_14, %c0_15, %c0_16] : memref<1x2x1xf32, #tpu.memory_space<vmem>>, vector<1x2x1xf32>
    %23 = vector.broadcast %22 : vector<1x2x1xf32> to vector<4x2x128xf32>
    %24 = arith.mulf %0, %23 : vector<4x2x128xf32>
    %25 = vector.extract_strided_slice %24 {offsets = [0, 0, 0], sizes = [4, 1, 128], strides = [1, 1, 1]} : vector<4x2x128xf32> to vector<4x1x128xf32>
    %26 = vector.extract_strided_slice %2 {offsets = [0, 0, 0], sizes = [1, 16, 1], strides = [1, 1, 1]} : vector<1x16x2xf32> to vector<1x16x1xf32>
    %27 = vector.broadcast %25 : vector<4x1x128xf32> to vector<4x16x128xf32>
    %28 = vector.broadcast %26 : vector<1x16x1xf32> to vector<4x16x128xf32>
    %29 = arith.subf %27, %28 : vector<4x16x128xf32>
    %30 = arith.mulf %29, %29 : vector<4x16x128xf32>
    %31 = vector.extract_strided_slice %24 {offsets = [0, 1, 0], sizes = [4, 1, 128], strides = [1, 1, 1]} : vector<4x2x128xf32> to vector<4x1x128xf32>
    %32 = vector.extract_strided_slice %2 {offsets = [0, 0, 1], sizes = [1, 16, 1], strides = [1, 1, 1]} : vector<1x16x2xf32> to vector<1x16x1xf32>
    %33 = vector.broadcast %31 : vector<4x1x128xf32> to vector<4x16x128xf32>
    %34 = vector.broadcast %32 : vector<1x16x1xf32> to vector<4x16x128xf32>
    %35 = arith.subf %33, %34 : vector<4x16x128xf32>
    %36 = arith.mulf %35, %35 : vector<4x16x128xf32>
    %37 = arith.addf %30, %36 : vector<4x16x128xf32>
    %cst_17 = arith.constant -5.000000e-01 : f32
    %38 = vector.broadcast %cst_17 : f32 to vector<4x16x128xf32>
    %39 = arith.mulf %38, %37 : vector<4x16x128xf32>
    %40 = math.exp %39 : vector<4x16x128xf32>
    %c0_18 = arith.constant 0 : index
    %c0_19 = arith.constant 0 : index
    %c0_20 = arith.constant 0 : index
    %41 = vector.load %arg5[%c0_18, %c0_19, %c0_20] : memref<4x16x1xf32, #tpu.memory_space<vmem>>, vector<4x16x1xf32>
    %42 = vector.broadcast %41 : vector<4x16x1xf32> to vector<4x16x128xf32>
    %43 = arith.mulf %42, %40 : vector<4x16x128xf32>
    %cst_21 = arith.constant dense<0.000000e+00> : vector<4x128xf32>
    %44 = vector.multi_reduction <add>, %43, %cst_21 [1] : vector<4x16x128xf32> to vector<4x128xf32>
    %45 = arith.addf %44, %21 : vector<4x128xf32>
    %c0_22 = arith.constant 0 : index
    %c0_23 = arith.constant 0 : index
    %46 = vector.load %arg8[%c0_22, %c0_23] : memref<4x128xf32, #tpu.memory_space<vmem>>, vector<4x128xf32>
    tpu.vector_store %arg8[%c0_22, %c0_23], %45 {strides = array<i32>} : memref<4x128xf32, #tpu.memory_space<vmem>>, vector<4x128xf32>,
    return
  }
  func.func @transform_0(%arg0: i32) -> (i32, i32, i32) {
    %c0_i32 = arith.constant 0 : i32
    %c0_i32_0 = arith.constant 0 : i32
    %c0_i32_1 = arith.constant 0 : i32
    return %c0_i32, %c0_i32_0, %arg0 : i32, i32, i32
  }
  func.func @transform_1(%arg0: i32) -> (i32, i32, i32) {
    %c0_i32 = arith.constant 0 : i32
    %c0_i32_0 = arith.constant 0 : i32
    %c0_i32_1 = arith.constant 0 : i32
    %c0_i32_2 = arith.constant 0 : i32
    return %c0_i32, %c0_i32_0, %c0_i32_1 : i32, i32, i32
  }
  func.func @transform_2(%arg0: i32) -> (i32, i32, i32) {
    %c0_i32 = arith.constant 0 : i32
    %c0_i32_0 = arith.constant 0 : i32
    %c0_i32_1 = arith.constant 0 : i32
    %c0_i32_2 = arith.constant 0 : i32
    return %c0_i32, %c0_i32_0, %c0_i32_1 : i32, i32, i32
  }
  func.func @transform_3(%arg0: i32) -> (i32, i32, i32) {
    %c0_i32 = arith.constant 0 : i32
    %c0_i32_0 = arith.constant 0 : i32
    %c0_i32_1 = arith.constant 0 : i32
    %c0_i32_2 = arith.constant 0 : i32
    return %c0_i32, %c0_i32_0, %c0_i32_1 : i32, i32, i32
  }
  func.func @transform_4(%arg0: i32) -> (i32, i32, i32) {
    %c0_i32 = arith.constant 0 : i32
    %c0_i32_0 = arith.constant 0 : i32
    %c0_i32_1 = arith.constant 0 : i32
    %c0_i32_2 = arith.constant 0 : i32
    return %c0_i32, %c0_i32_0, %c0_i32_1 : i32, i32, i32
  }
  func.func @transform_5(%arg0: i32) -> (i32, i32, i32) {
    %c0_i32 = arith.constant 0 : i32
    %c0_i32_0 = arith.constant 0 : i32
    %c0_i32_1 = arith.constant 0 : i32
    %c0_i32_2 = arith.constant 0 : i32
    return %c0_i32, %c0_i32_0, %c0_i32_1 : i32, i32, i32
  }
  func.func @transform_6(%arg0: i32) -> (i32, i32, i32) {
    %c0_i32 = arith.constant 0 : i32
    %c0_i32_0 = arith.constant 0 : i32
    %c0_i32_1 = arith.constant 0 : i32
    %c0_i32_2 = arith.constant 0 : i32
    return %c0_i32, %c0_i32_0, %c0_i32_1 : i32, i32, i32
  }
  func.func @transform_7(%arg0: i32) -> (i32, i32) {
    %c0_i32 = arith.constant 0 : i32
    %c0_i32_0 = arith.constant 0 : i32
    return %c0_i32, %arg0 : i32, i32
  }
}

</mosaic_0001>

<llo_original>
// kernel: tpu_custom_call.1
$region0: #{tpu_custom_call.1}
  #allocation0 [shape = 'u32[]', space=smem, size = 0x4, offset = 0x4, fixed_abs, tag = 'smem constant byte address 0x4 - core index']
  #allocation1 [shape = 'u32[72,128]{1,0:T(1,128)}', space=vmem, size = 0x9000, scoped, tag = 'internal scratch']
  %s0 = inlined_call_operand.vmem [shape: f32[4,2,256], index: 0, kind: input, shape index: {}]
  %s1 = inlined_call_operand.vmem [shape: f32[4,32,2], index: 1, kind: input, shape index: {}]
  %s2 = inlined_call_operand.vmem [shape: f32[4,32,1], index: 2, kind: input, shape index: {}]
  %s3 = inlined_call_operand.vmem [shape: f32[4,32,1], index: 3, kind: input, shape index: {}]
  %s4 = inlined_call_operand.vmem [shape: f32[4,16,1], index: 4, kind: input, shape index: {}]
  %s5 = inlined_call_operand.vmem [shape: f32[1,16,2], index: 5, kind: input, shape index: {}]
  %s6 = inlined_call_operand.vmem [shape: f32[1,2,1], index: 6, kind: input, shape index: {}]
  %s7 = inlined_call_operand.hbm [shape: f32[4,256], index: 7, kind: output, shape index: {}]
  %s8 = sld [smem:[#allocation0]]
  $region102: #{tpu_custom_call.1} parent=0
    _
  %s10 = ssub.s32 1, %s8
  %s11 = scalar_select 0, %s10, %s8
  $region1: #{tpu_custom_call.1} parent=0
    #allocation2 [shape = 'u8[8192]{0}', space=vmem, size = 0x2000, scoped, tag = 'input window, operand 0']
    #allocation3 [shape = 'u8[4096]{0}', space=vmem, size = 0x1000, scoped, tag = 'output window, operand 0']
    #allocation4 [shape = 's32[2]{0}', space=sflag, size = 0x8, scoped, tag = 'scoped memory for tpu_custom_call.1']
    %12 = vsyncpa [#allocation4], 0
    %s13 = scalar_lea.sflag [#allocation4], 1
    %14 = vsyncpa %s13, 0
    loop: start=0, step=1, limit=4
    $region2: #{tpu_custom_call.1} parent=1 // loop_pre_header
      _
    $region3: #{tpu_custom_call.1} parent=1 // loop_header
      %s16 = sphi 0, %s20
      %p17 = scmp.ge.s32.totalorder %s16, 4
      %s26 = sphi 0, %s28
      %s29 = sphi 0, %s26
      %s30 = sphi 0, %s29
      %s46 = sphi 0, %s30
      %s50 = sphi 0, %s50
      %s52 = sphi 0, %s50
      %s53 = sphi 0, %s52
      %s67 = sphi 0, %s53
      %s71 = sphi 0, %s71
      %s73 = sphi 0, %s71
      %s74 = sphi 0, %s73
      %s88 = sphi 0, %s74
      %s92 = sphi 0, %s92
      %s94 = sphi 0, %s92
      %s95 = sphi 0, %s94
      %s109 = sphi 0, %s95
      %s113 = sphi 0, %s113
      %s115 = sphi 0, %s113
      %s116 = sphi 0, %s115
      %s130 = sphi 0, %s116
      %s134 = sphi 0, %s134
      %s136 = sphi 0, %s134
      %s137 = sphi 0, %s136
      %s151 = sphi 0, %s137
      %s155 = sphi 0, %s155
      %s157 = sphi 0, %s155
      %s158 = sphi 0, %s157
      %s172 = sphi 0, %s158
      %s178 = sphi 0, %s180
      %s181 = sphi 0, %s178
      %s182 = sphi 0, %s181
      %s198 = sphi 0, %s182
    $region4: #{tpu_custom_call.1} parent=1 // loop_header_branch
      %19 = sbr.rel (%p17) target = $region8
    $region5: #{tpu_custom_call.1} parent=1 // loop_body
      %s21 = ssub.s32 %s16, 1
      %s22 = ssub.s32 %s16, 2
      %s23 = sadd.s32 %s16, 1
      %s24 = ssub.s32 %s16, %s23
      %p25 = scmp.eq.s32.totalorder %s24, 0
      %s27 = sadd.s32 %s26, 1
      %s28 = scalar_select %p25, %s26, %s27
      %p31 = pneg %p25
      %p32 = scmp.eq.s32.totalorder %s16, 1
      %p33 = por %p31, %p32
      %p34 = scmp.ne.s32.totalorder %s26, %s29
      %p35 = scmp.eq.s32.totalorder %s16, 0
      %p36 = por %p34, %p35
      %p37 = scmp.ne.s32.totalorder %s26, %s29
      %p38 = scmp.eq.s32.totalorder %s21, 1
      %p39 = por %p37, %p38
      %p40 = scmp.ne.s32.totalorder %s29, %s30
      %p41 = scmp.eq.s32.totalorder %s21, 0
      %p42 = por %p40, %p41
      %p43 = scmp.ne.s32.totalorder %s29, %s30
      %p44 = scmp.eq.s32.totalorder %s22, 1
      %p45 = por %p43, %p44
      %p47 = scmp.ne.s32.totalorder %s30, %s46
      %p48 = scmp.eq.s32.totalorder %s22, 0
      %p49 = por %p47, %p48
      %s51 = sadd.s32 %s50, 1
      %p54 = scmp.eq.s32.totalorder %s16, 1
      %p55 = scmp.ne.s32.totalorder %s50, %s52
      %p56 = scmp.eq.s32.totalorder %s16, 0
      %p57 = por %p55, %p56
      %p58 = scmp.ne.s32.totalorder %s50, %s52
      %p59 = scmp.eq.s32.totalorder %s21, 1
      %p60 = por %p58, %p59
      %p61 = scmp.ne.s32.totalorder %s52, %s53
      %p62 = scmp.eq.s32.totalorder %s21, 0
      %p63 = por %p61, %p62
      %p64 = scmp.ne.s32.totalorder %s52, %s53
      %p65 = scmp.eq.s32.totalorder %s22, 1
      %p66 = por %p64, %p65
      %p68 = scmp.ne.s32.totalorder %s53, %s67
      %p69 = scmp.eq.s32.totalorder %s22, 0
      %p70 = por %p68, %p69
      %s72 = sadd.s32 %s71, 1
      %p75 = scmp.eq.s32.totalorder %s16, 1
      %p76 = scmp.ne.s32.totalorder %s71, %s73
      %p77 = scmp.eq.s32.totalorder %s16, 0
      %p78 = por %p76, %p77
      %p79 = scmp.ne.s32.totalorder %s71, %s73
      %p80 = scmp.eq.s32.totalorder %s21, 1
      %p81 = por %p79, %p80
      %p82 = scmp.ne.s32.totalorder %s73, %s74
      %p83 = scmp.eq.s32.totalorder %s21, 0
      %p84 = por %p82, %p83
      %p85 = scmp.ne.s32.totalorder %s73, %s74
      %p86 = scmp.eq.s32.totalorder %s22, 1
      %p87 = por %p85, %p86
      %p89 = scmp.ne.s32.totalorder %s74, %s88
      %p90 = scmp.eq.s32.totalorder %s22, 0
      %p91 = por %p89, %p90
      %s93 = sadd.s32 %s92, 1
      %p96 = scmp.eq.s32.totalorder %s16, 1
      %p97 = scmp.ne.s32.totalorder %s92, %s94
      %p98 = scmp.eq.s32.totalorder %s16, 0
      %p99 = por %p97, %p98
      %p100 = scmp.ne.s32.totalorder %s92, %s94
      %p101 = scmp.eq.s32.totalorder %s21, 1
      %p102 = por %p100, %p101
      %p103 = scmp.ne.s32.totalorder %s94, %s95
      %p104 = scmp.eq.s32.totalorder %s21, 0
      %p105 = por %p103, %p104
      %p106 = scmp.ne.s32.totalorder %s94, %s95
      %p107 = scmp.eq.s32.totalorder %s22, 1
      %p108 = por %p106, %p107
      %p110 = scmp.ne.s32.totalorder %s95, %s109
      %p111 = scmp.eq.s32.totalorder %s22, 0
      %p112 = por %p110, %p111
      %s114 = sadd.s32 %s113, 1
      %p117 = scmp.eq.s32.totalorder %s16, 1
      %p118 = scmp.ne.s32.totalorder %s113, %s115
      %p119 = scmp.eq.s32.totalorder %s16, 0
      %p120 = por %p118, %p119
      %p121 = scmp.ne.s32.totalorder %s113, %s115
      %p122 = scmp.eq.s32.totalorder %s21, 1
      %p123 = por %p121, %p122
      %p124 = scmp.ne.s32.totalorder %s115, %s116
      %p125 = scmp.eq.s32.totalorder %s21, 0
      %p126 = por %p124, %p125
      %p127 = scmp.ne.s32.totalorder %s115, %s116
      %p128 = scmp.eq.s32.totalorder %s22, 1
      %p129 = por %p127, %p128
      %p131 = scmp.ne.s32.totalorder %s116, %s130
      %p132 = scmp.eq.s32.totalorder %s22, 0
      %p133 = por %p131, %p132
      %s135 = sadd.s32 %s134, 1
      %p138 = scmp.eq.s32.totalorder %s16, 1
      %p139 = scmp.ne.s32.totalorder %s134, %s136
      %p140 = scmp.eq.s32.totalorder %s16, 0
      %p141 = por %p139, %p140
      %p142 = scmp.ne.s32.totalorder %s134, %s136
      %p143 = scmp.eq.s32.totalorder %s21, 1
      %p144 = por %p142, %p143
      %p145 = scmp.ne.s32.totalorder %s136, %s137
      %p146 = scmp.eq.s32.totalorder %s21, 0
      %p147 = por %p145, %p146
      %p148 = scmp.ne.s32.totalorder %s136, %s137
      %p149 = scmp.eq.s32.totalorder %s22, 1
      %p150 = por %p148, %p149
      %p152 = scmp.ne.s32.totalorder %s137, %s151
      %p153 = scmp.eq.s32.totalorder %s22, 0
      %p154 = por %p152, %p153
      %s156 = sadd.s32 %s155, 1
      %p159 = scmp.eq.s32.totalorder %s16, 1
      %p160 = scmp.ne.s32.totalorder %s155, %s157
      %p161 = scmp.eq.s32.totalorder %s16, 0
      %p162 = por %p160, %p161
      %p163 = scmp.ne.s32.totalorder %s155, %s157
      %p164 = scmp.eq.s32.totalorder %s21, 1
      %p165 = por %p163, %p164
      %p166 = scmp.ne.s32.totalorder %s157, %s158
      %p167 = scmp.eq.s32.totalorder %s21, 0
      %p168 = por %p166, %p167
      %p169 = scmp.ne.s32.totalorder %s157, %s158
      %p170 = scmp.eq.s32.totalorder %s22, 1
      %p171 = por %p169, %p170
      %p173 = scmp.ne.s32.totalorder %s158, %s172
      %p174 = scmp.eq.s32.totalorder %s22, 0
      %p175 = por %p173, %p174
      %s176 = ssub.s32 %s16, %s23
      %p177 = scmp.eq.s32.totalorder %s176, 0
      %s179 = sadd.s32 %s178, 1
      %s180 = scalar_select %p177, %s178, %s179
      %p183 = pneg %p177
      %p184 = scmp.eq.s32.totalorder %s16, 1
      %p185 = por %p183, %p184
      %p186 = scmp.ne.s32.totalorder %s178, %s181
      %p187 = scmp.eq.s32.totalorder %s16, 0
      %p188 = por %p186, %p187
      %p189 = scmp.ne.s32.totalorder %s178, %s181
      %p190 = scmp.eq.s32.totalorder %s21, 1
      %p191 = por %p189, %p190
      %p192 = scmp.ne.s32.totalorder %s181, %s182
      %p193 = scmp.eq.s32.totalorder %s21, 0
      %p194 = por %p192, %p193
      %p195 = scmp.ne.s32.totalorder %s181, %s182
      %p196 = scmp.eq.s32.totalorder %s22, 1
      %p197 = por %p195, %p196
      %p199 = scmp.ne.s32.totalorder %s182, %s198
      %p200 = scmp.eq.s32.totalorder %s22, 0
      %p201 = por %p199, %p200
      %p202 = scmp.le.s32.totalorder 1, %s16
      %p203 = scmp.lt.s32.totalorder %s16, 3
      %p204 = pnand %p202, %p203
      %p205 = pneg %p204
      // Predicated region
      $region9: #{tpu_custom_call.1} parent=5 // pred_check
        _
      $region10: #{tpu_custom_call.1} parent=5 // pred_check_branch
        %207 = sbr.rel (%p204) target = $region12
      $region11: #{tpu_custom_call.1} parent=5 // pred_region
        %s208 = ssub.s32 %s16, 1
        // Predicated region
        $region13: #{tpu_custom_call.1} parent=11 // pred_check
          %p209 = pneg %p63
        $region14: #{tpu_custom_call.1} parent=11 // pred_check_branch
          %211 = sbr.rel (%p209) target = $region16
        $region15: #{tpu_custom_call.1} parent=11 // pred_region
          _
        $region16: #{tpu_custom_call.1} parent=11 // pred_fallthru
          _
        // Predicated region
        $region17: #{tpu_custom_call.1} parent=11 // pred_check
          %p212 = pneg %p84
        $region18: #{tpu_custom_call.1} parent=11 // pred_check_branch
          %214 = sbr.rel (%p212) target = $region20
        $region19: #{tpu_custom_call.1} parent=11 // pred_region
          _
        $region20: #{tpu_custom_call.1} parent=11 // pred_fallthru
          _
        // Predicated region
        $region21: #{tpu_custom_call.1} parent=11 // pred_check
          %p215 = pneg %p105
        $region22: #{tpu_custom_call.1} parent=11 // pred_check_branch
          %217 = sbr.rel (%p215) target = $region24
        $region23: #{tpu_custom_call.1} parent=11 // pred_region
          _
        $region24: #{tpu_custom_call.1} parent=11 // pred_fallthru
          _
        // Predicated region
        $region25: #{tpu_custom_call.1} parent=11 // pred_check
          %p218 = pneg %p126
        $region26: #{tpu_custom_call.1} parent=11 // pred_check_branch
          %220 = sbr.rel (%p218) target = $region28
        $region27: #{tpu_custom_call.1} parent=11 // pred_region
          _
        $region28: #{tpu_custom_call.1} parent=11 // pred_fallthru
          _
        // Predicated region
        $region29: #{tpu_custom_call.1} parent=11 // pred_check
          %p221 = pneg %p147
        $region30: #{tpu_custom_call.1} parent=11 // pred_check_branch
          %223 = sbr.rel (%p221) target = $region32
        $region31: #{tpu_custom_call.1} parent=11 // pred_region
          _
        $region32: #{tpu_custom_call.1} parent=11 // pred_fallthru
          _
        // Predicated region
        $region33: #{tpu_custom_call.1} parent=11 // pred_check
          %p224 = pneg %p168
        $region34: #{tpu_custom_call.1} parent=11 // pred_check_branch
          %226 = sbr.rel (%p224) target = $region36
        $region35: #{tpu_custom_call.1} parent=11 // pred_region
          _
        $region36: #{tpu_custom_call.1} parent=11 // pred_fallthru
          _
      $region12: #{tpu_custom_call.1} parent=5 // pred_fallthru
        _
      %p227 = scmp.lt.s32.totalorder %s16, 2
      // Predicated region
      $region37: #{tpu_custom_call.1} parent=5 // pred_check
        %p228 = pneg %p227
      $region38: #{tpu_custom_call.1} parent=5 // pred_check_branch
        %230 = sbr.rel (%p228) target = $region40
      $region39: #{tpu_custom_call.1} parent=5 // pred_region
        // Predicated region
        $region41: #{tpu_custom_call.1} parent=39 // pred_check
          %p231 = pneg %p36
        $region42: #{tpu_custom_call.1} parent=39 // pred_check_branch
          %233 = sbr.rel (%p231) target = $region44
        $region43: #{tpu_custom_call.1} parent=39 // pred_region
          %s234 = sand.u32 %s26, 1
          %s235 = sand.u32 %s26, 1
          %s236 = smul.addr %s235, 8
          %s237 = scalar_lea.vmem [#allocation2], %s236
          %s238 = smul.addr %s16, 2
          %s239 = scalar_lea.vmem %s0, %s238
          // Predicated region
          $region45: #{tpu_custom_call.1} parent=43 // pred_check
            _
          $region46: #{tpu_custom_call.1} parent=43 // pred_check_branch
            %241 = sbr.rel (0) target = $region48
          $region47: #{tpu_custom_call.1} parent=43 // pred_region
            // Predicated region
            $region49: #{tpu_custom_call.1} parent=47 // pred_check
              _
            $region50: #{tpu_custom_call.1} parent=47 // pred_check_branch
              %243 = sbr.rel target = $region52
            $region51: #{tpu_custom_call.1} parent=47 // pred_region
              // Predicated region
              $region64: #{tpu_custom_call.1} parent=51 // pred_check
                _
              $region65: #{tpu_custom_call.1} parent=51 // pred_check_branch
                %265 = sbr.rel (0) target = $region67
              $region66: #{tpu_custom_call.1} parent=51 // pred_region
                loop: start=0, step=1, limit=1
                $region68: #{tpu_custom_call.1} parent=66 // loop_pre_header
                  _
                $region69: #{tpu_custom_call.1} parent=66 // loop_header
                  %s267 = sphi 0, %s271
                  %p268 = scmp.ge.s32.totalorder %s267, 1
                  %s272 = sphi %s239, %s239
                  %s273 = sphi %s237, %s237
                $region70: #{tpu_custom_call.1} parent=66 // loop_header_branch
                  %270 = sbr.rel (%p268) target = $region74
                $region71: #{tpu_custom_call.1} parent=66 // loop_body
                  _
                $region72: #{tpu_custom_call.1} parent=66 // loop_footer
                  %s271 = sadd.s32 1, %s267
                $region73: #{tpu_custom_call.1} parent=66 // loop_footer_branch
                  %266 = sbr.rel target = $region69
                $region74: #{tpu_custom_call.1} parent=66 // loop_exit
                  _
                %s275 = ssub.s32 4, 1
                loop: start=0, step=1, limit=1
                $region75: #{tpu_custom_call.1} parent=66 // loop_pre_header
                  _
                $region76: #{tpu_custom_call.1} parent=66 // loop_header
                  %s277 = sphi 0, %s281
                  %p278 = scmp.ge.s32.totalorder %s277, 1
                  %s282 = sphi %s239, %s239
                  %s283 = sphi %s237, %s237
                $region77: #{tpu_custom_call.1} parent=66 // loop_header_branch
                  %280 = sbr.rel (%p278) target = $region81
                $region78: #{tpu_custom_call.1} parent=66 // loop_body
                  %v284 = vld [vmem:[%s282] sm:%s275]
                  %285 = vst [vmem:[%s283] sm:%s275] %v284
                  %v286 = vld [vmem:[%s282 + $0x4] sm:%s275]
                  %287 = vst [vmem:[%s283 + $0x2] sm:%s275] %v286
                  %v288 = vld [vmem:[%s282 + $0x8] sm:%s275]
                  %289 = vst [vmem:[%s283 + $0x4] sm:%s275] %v288
                  %v290 = vld [vmem:[%s282 + $0xc] sm:%s275]
                  %291 = vst [vmem:[%s283 + $0x6] sm:%s275] %v290
                $region79: #{tpu_custom_call.1} parent=66 // loop_footer
                  %s281 = sadd.s32 1, %s277
                $region80: #{tpu_custom_call.1} parent=66 // loop_footer_branch
                  %276 = sbr.rel target = $region76
                $region81: #{tpu_custom_call.1} parent=66 // loop_exit
                  _
              $region67: #{tpu_custom_call.1} parent=51 // pred_fallthru
                _
            $region52: #{tpu_custom_call.1} parent=47 // pred_fallthru
              _
            // Predicated region
            $region53: #{tpu_custom_call.1} parent=47 // pred_check
              _
            $region54: #{tpu_custom_call.1} parent=47 // pred_check_branch
              %245 = sbr.rel (0) target = $region56
            $region55: #{tpu_custom_call.1} parent=47 // pred_region
              %s247 = ssub.s32 4, 1
              loop: start=0, step=1, limit=1
              $region57: #{tpu_custom_call.1} parent=55 // loop_pre_header
                _
              $region58: #{tpu_custom_call.1} parent=55 // loop_header
                %s249 = sphi 0, %s253
                %p250 = scmp.ge.s32.totalorder %s249, 1
                %s254 = sphi %s239, %s239
                %s255 = sphi %s237, %s237
              $region59: #{tpu_custom_call.1} parent=55 // loop_header_branch
                %252 = sbr.rel (%p250) target = $region63
              $region60: #{tpu_custom_call.1} parent=55 // loop_body
                %v256 = vld [vmem:[%s254] sm:%s247]
                %257 = vst [vmem:[%s255] sm:%s247] %v256
                %v258 = vld [vmem:[%s254 + $0x4] sm:%s247]
                %259 = vst [vmem:[%s255 + $0x2] sm:%s247] %v258
                %v260 = vld [vmem:[%s254 + $0x8] sm:%s247]
                %261 = vst [vmem:[%s255 + $0x4] sm:%s247] %v260
                %v262 = vld [vmem:[%s254 + $0xc] sm:%s247]
                %263 = vst [vmem:[%s255 + $0x6] sm:%s247] %v262
              $region61: #{tpu_custom_call.1} parent=55 // loop_footer
                %s253 = sadd.s32 1, %s249
              $region62: #{tpu_custom_call.1} parent=55 // loop_footer_branch
                %248 = sbr.rel target = $region58
              $region63: #{tpu_custom_call.1} parent=55 // loop_exit
                _
            $region56: #{tpu_custom_call.1} parent=47 // pred_fallthru
              _
          $region48: #{tpu_custom_call.1} parent=43 // pred_fallthru
            _
          %292 = vnop
        $region44: #{tpu_custom_call.1} parent=39 // pred_fallthru
          _
      $region40: #{tpu_custom_call.1} parent=5 // pred_fallthru
        _
      %p293 = scmp.le.s32.totalorder 1, %s16
      %p294 = scmp.lt.s32.totalorder %s16, 3
      %p295 = pnand %p293, %p294
      %p296 = pneg %p295
      // Predicated region
      $region82: #{tpu_custom_call.1} parent=5 // pred_check
        _
      $region83: #{tpu_custom_call.1} parent=5 // pred_check_branch
        %298 = sbr.rel (%p295) target = $region85
      $region84: #{tpu_custom_call.1} parent=5 // pred_region
        %s299 = ssub.s32 %s16, 1
        %s300 = sand.u32 %s29, 1
        %s301 = sand.u32 %s29, 1
        %s302 = smul.addr %s301, 8
        %s303 = scalar_lea.vmem [#allocation2], %s302
        // Predicated region
        $region86: #{tpu_custom_call.1} parent=84 // pred_check
          %p304 = pneg %p42
        $region87: #{tpu_custom_call.1} parent=84 // pred_check_branch
          %306 = sbr.rel (%p304) target = $region89
        $region88: #{tpu_custom_call.1} parent=84 // pred_region
          _
        $region89: #{tpu_custom_call.1} parent=84 // pred_fallthru
          _
        %s307 = sand.u32 %s29, 1
        %s308 = sand.u32 %s29, 1
        %s309 = smul.addr %s308, 8
        %s310 = scalar_lea.vmem [#allocation2], %s309
        %p311 = pneg %p42
        %p312 = pneg %p39
        %p313 = pneg %p63
        %p314 = pneg %p60
        %p315 = pneg %p84
        %p316 = pneg %p81
        %p317 = pneg %p105
        %p318 = pneg %p102
        %p319 = pneg %p126
        %p320 = pneg %p123
        %p321 = pneg %p147
        %p322 = pneg %p144
        %p323 = pneg %p168
        %p324 = pneg %p165
        %p325 = pneg %p194
        %p326 = pneg %p191
        %s327 = sand.u32 %s181, 1
        %s328 = scalar_lea.sflag [#allocation4], %s327
        %s329 = sand.u32 %s181, 1
        %s330 = smul.addr %s329, 4
        %s331 = scalar_lea.vmem [#allocation3], %s330
        %v332 = vld [vmem:[%s303] sm:$0x3]
        %v333 = vld [vmem:[%s303 + $0x2] sm:$0x3]
        %v334 = vld [vmem:[%s303 + $0x4] sm:$0x3]
        %v335 = vld [vmem:[%s303 + $0x6] sm:$0x3]
        %v336 = vld [vmem:[%s1] sm:$0xff]
        %v337 = vld [vmem:[%s1 + $0x8] sm:$0xff]
        %v338 = vld [vmem:[%s1 + $0x10] sm:$0xff]
        %v339 = vld [vmem:[%s1 + $0x18] sm:$0xff]
        %v340 = vld [vmem:[%s1 + $0x20] sm:$0xff]
        %v341 = vld [vmem:[%s1 + $0x28] sm:$0xff]
        %v342 = vld [vmem:[%s1 + $0x30] sm:$0xff]
        %v343 = vld [vmem:[%s1 + $0x38] sm:$0xff]
        %v344 = vld [vmem:[%s1 + $0x40] sm:$0xff]
        %v345 = vld [vmem:[%s1 + $0x48] sm:$0xff]
        %v346 = vld [vmem:[%s1 + $0x50] sm:$0xff]
        %v347 = vld [vmem:[%s1 + $0x58] sm:$0xff]
        %v348 = vld [vmem:[%s1 + $0x60] sm:$0xff]
        %v349 = vld [vmem:[%s1 + $0x68] sm:$0xff]
        %v350 = vld [vmem:[%s1 + $0x70] sm:$0xff]
        %v351 = vld [vmem:[%s1 + $0x78] sm:$0xff]
        %v352 = vld [vmem:[%s5] sm:$0xff]
        %v353 = vld [vmem:[%s5 + $0x8] sm:$0xff]
        %v354 = vld [vmem:[%s2] sm:$0xff]
        %v355 = vld [vmem:[%s2 + $0x8] sm:$0xff]
        %v356 = vld [vmem:[%s2 + $0x10] sm:$0xff]
        %v357 = vld [vmem:[%s2 + $0x18] sm:$0xff]
        %v358 = vld [vmem:[%s2 + $0x20] sm:$0xff]
        %v359 = vld [vmem:[%s2 + $0x28] sm:$0xff]
        %v360 = vld [vmem:[%s2 + $0x30] sm:$0xff]
        %v361 = vld [vmem:[%s2 + $0x38] sm:$0xff]
        %v362 = vld [vmem:[%s2 + $0x40] sm:$0xff]
        %v363 = vld [vmem:[%s2 + $0x48] sm:$0xff]
        %v364 = vld [vmem:[%s2 + $0x50] sm:$0xff]
        %v365 = vld [vmem:[%s2 + $0x58] sm:$0xff]
        %v366 = vld [vmem:[%s2 + $0x60] sm:$0xff]
        %v367 = vld [vmem:[%s2 + $0x68] sm:$0xff]
        %v368 = vld [vmem:[%s2 + $0x70] sm:$0xff]
        %v369 = vld [vmem:[%s2 + $0x78] sm:$0xff]
        %371 = vset.pattern.permute.xlu0 0
        %372 = vperm.xlu0 %371, %v336
        %v373 = vpop.permute.xlu0 %372
        %376 = vset.pattern.permute.xlu0 0
        %377 = vperm.xlu0 %376, %v337
        %v378 = vpop.permute.xlu0 %377
        %381 = vset.pattern.permute.xlu0 0
        %382 = vperm.xlu0 %381, %v338
        %v383 = vpop.permute.xlu0 %382
        %386 = vset.pattern.permute.xlu0 0
        %387 = vperm.xlu0 %386, %v339
        %v388 = vpop.permute.xlu0 %387
        %391 = vset.pattern.permute.xlu0 0
        %392 = vperm.xlu0 %391, %v340
        %v393 = vpop.permute.xlu0 %392
        %396 = vset.pattern.permute.xlu0 0
        %397 = vperm.xlu0 %396, %v341
        %v398 = vpop.permute.xlu0 %397
        %401 = vset.pattern.permute.xlu0 0
        %402 = vperm.xlu0 %401, %v342
        %v403 = vpop.permute.xlu0 %402
        %406 = vset.pattern.permute.xlu0 0
        %407 = vperm.xlu0 %406, %v343
        %v408 = vpop.permute.xlu0 %407
        %411 = vset.pattern.permute.xlu0 0
        %412 = vperm.xlu0 %411, %v344
        %v413 = vpop.permute.xlu0 %412
        %416 = vset.pattern.permute.xlu0 0
        %417 = vperm.xlu0 %416, %v345
        %v418 = vpop.permute.xlu0 %417
        %421 = vset.pattern.permute.xlu0 0
        %422 = vperm.xlu0 %421, %v346
        %v423 = vpop.permute.xlu0 %422
        %426 = vset.pattern.permute.xlu0 0
        %427 = vperm.xlu0 %426, %v347
        %v428 = vpop.permute.xlu0 %427
        %431 = vset.pattern.permute.xlu0 0
        %432 = vperm.xlu0 %431, %v348
        %v433 = vpop.permute.xlu0 %432
        %436 = vset.pattern.permute.xlu0 0
        %437 = vperm.xlu0 %436, %v349
        %v438 = vpop.permute.xlu0 %437
        %441 = vset.pattern.permute.xlu0 0
        %442 = vperm.xlu0 %441, %v350
        %v443 = vpop.permute.xlu0 %442
        %446 = vset.pattern.permute.xlu0 0
        %447 = vperm.xlu0 %446, %v351
        %v448 = vpop.permute.xlu0 %447
        %v450 = vperm.slane %v332, 0
        %v451 = vperm.slane %v333, 0
        %v452 = vperm.slane %v334, 0
        %v453 = vperm.slane %v335, 0
        %v454 = vmul.f32 %v373, %v450
        %v455 = vmul.f32 %v378, %v450
        %v456 = vmul.f32 %v383, %v450
        %v457 = vmul.f32 %v388, %v450
        %v458 = vmul.f32 %v393, %v451
        %v459 = vmul.f32 %v398, %v451
        %v460 = vmul.f32 %v403, %v451
        %v461 = vmul.f32 %v408, %v451
        %v462 = vmul.f32 %v413, %v452
        %v463 = vmul.f32 %v418, %v452
        %v464 = vmul.f32 %v423, %v452
        %v465 = vmul.f32 %v428, %v452
        %v466 = vmul.f32 %v433, %v453
        %v467 = vmul.f32 %v438, %v453
        %v468 = vmul.f32 %v443, %v453
        %v469 = vmul.f32 %v448, %v453
        %471 = vset.pattern.permute.xlu0 0
        %472 = vperm.xlu0 %471, %v354
        %v473 = vpop.permute.xlu0 %472
        %476 = vset.pattern.permute.xlu0 0
        %477 = vperm.xlu0 %476, %v355
        %v478 = vpop.permute.xlu0 %477
        %481 = vset.pattern.permute.xlu0 0
        %482 = vperm.xlu0 %481, %v356
        %v483 = vpop.permute.xlu0 %482
        %486 = vset.pattern.permute.xlu0 0
        %487 = vperm.xlu0 %486, %v357
        %v488 = vpop.permute.xlu0 %487
        %491 = vset.pattern.permute.xlu0 0
        %492 = vperm.xlu0 %491, %v358
        %v493 = vpop.permute.xlu0 %492
        %496 = vset.pattern.permute.xlu0 0
        %497 = vperm.xlu0 %496, %v359
        %v498 = vpop.permute.xlu0 %497
        %501 = vset.pattern.permute.xlu0 0
        %502 = vperm.xlu0 %501, %v360
        %v503 = vpop.permute.xlu0 %502
        %506 = vset.pattern.permute.xlu0 0
        %507 = vperm.xlu0 %506, %v361
        %v508 = vpop.permute.xlu0 %507
        %511 = vset.pattern.permute.xlu0 0
        %512 = vperm.xlu0 %511, %v362
        %v513 = vpop.permute.xlu0 %512
        %516 = vset.pattern.permute.xlu0 0
        %517 = vperm.xlu0 %516, %v363
        %v518 = vpop.permute.xlu0 %517
        %521 = vset.pattern.permute.xlu0 0
        %522 = vperm.xlu0 %521, %v364
        %v523 = vpop.permute.xlu0 %522
        %526 = vset.pattern.permute.xlu0 0
        %527 = vperm.xlu0 %526, %v365
        %v528 = vpop.permute.xlu0 %527
        %531 = vset.pattern.permute.xlu0 0
        %532 = vperm.xlu0 %531, %v366
        %v533 = vpop.permute.xlu0 %532
        %536 = vset.pattern.permute.xlu0 0
        %537 = vperm.xlu0 %536, %v367
        %v538 = vpop.permute.xlu0 %537
        %541 = vset.pattern.permute.xlu0 0
        %542 = vperm.xlu0 %541, %v368
        %v543 = vpop.permute.xlu0 %542
        %546 = vset.pattern.permute.xlu0 0
        %547 = vperm.xlu0 %546, %v369
        %v548 = vpop.permute.xlu0 %547
        %v550 = vadd.f32 %v473, %v454
        %v551 = vadd.f32 %v478, %v455
        %v552 = vadd.f32 %v483, %v456
        %v553 = vadd.f32 %v488, %v457
        %v554 = vadd.f32 %v493, %v458
        %v555 = vadd.f32 %v498, %v459
        %v556 = vadd.f32 %v503, %v460
        %v557 = vadd.f32 %v508, %v461
        %v558 = vadd.f32 %v513, %v462
        %v559 = vadd.f32 %v518, %v463
        %v560 = vadd.f32 %v523, %v464
        %v561 = vadd.f32 %v528, %v465
        %v562 = vadd.f32 %v533, %v466
        %v563 = vadd.f32 %v538, %v467
        %v564 = vadd.f32 %v543, %v468
        %v565 = vadd.f32 %v548, %v469
        %566 = vset.pattern.permute.xlu0 1
        %567 = vperm.xlu0 %566, %v336
        %v568 = vpop.permute.xlu0 %567
        %570 = vset.pattern.permute.xlu0 1
        %571 = vperm.xlu0 %570, %v337
        %v572 = vpop.permute.xlu0 %571
        %574 = vset.pattern.permute.xlu0 1
        %575 = vperm.xlu0 %574, %v338
        %v576 = vpop.permute.xlu0 %575
        %578 = vset.pattern.permute.xlu0 1
        %579 = vperm.xlu0 %578, %v339
        %v580 = vpop.permute.xlu0 %579
        %582 = vset.pattern.permute.xlu0 1
        %583 = vperm.xlu0 %582, %v340
        %v584 = vpop.permute.xlu0 %583
        %586 = vset.pattern.permute.xlu0 1
        %587 = vperm.xlu0 %586, %v341
        %v588 = vpop.permute.xlu0 %587
        %590 = vset.pattern.permute.xlu0 1
        %591 = vperm.xlu0 %590, %v342
        %v592 = vpop.permute.xlu0 %591
        %594 = vset.pattern.permute.xlu0 1
        %595 = vperm.xlu0 %594, %v343
        %v596 = vpop.permute.xlu0 %595
        %598 = vset.pattern.permute.xlu0 1
        %599 = vperm.xlu0 %598, %v344
        %v600 = vpop.permute.xlu0 %599
        %602 = vset.pattern.permute.xlu0 1
        %603 = vperm.xlu0 %602, %v345
        %v604 = vpop.permute.xlu0 %603
        %606 = vset.pattern.permute.xlu0 1
        %607 = vperm.xlu0 %606, %v346
        %v608 = vpop.permute.xlu0 %607
        %610 = vset.pattern.permute.xlu0 1
        %611 = vperm.xlu0 %610, %v347
        %v612 = vpop.permute.xlu0 %611
        %614 = vset.pattern.permute.xlu0 1
        %615 = vperm.xlu0 %614, %v348
        %v616 = vpop.permute.xlu0 %615
        %618 = vset.pattern.permute.xlu0 1
        %619 = vperm.xlu0 %618, %v349
        %v620 = vpop.permute.xlu0 %619
        %622 = vset.pattern.permute.xlu0 1
        %623 = vperm.xlu0 %622, %v350
        %v624 = vpop.permute.xlu0 %623
        %626 = vset.pattern.permute.xlu0 1
        %627 = vperm.xlu0 %626, %v351
        %v628 = vpop.permute.xlu0 %627
        %v630 = vperm.slane %v332, 1
        %v631 = vperm.slane %v333, 1
        %v632 = vperm.slane %v334, 1
        %v633 = vperm.slane %v335, 1
        %v634 = vmul.f32 %v568, %v630
        %v635 = vmul.f32 %v572, %v630
        %v636 = vmul.f32 %v576, %v630
        %v637 = vmul.f32 %v580, %v630
        %v638 = vmul.f32 %v584, %v631
        %v639 = vmul.f32 %v588, %v631
        %v640 = vmul.f32 %v592, %v631
        %v641 = vmul.f32 %v596, %v631
        %v642 = vmul.f32 %v600, %v632
        %v643 = vmul.f32 %v604, %v632
        %v644 = vmul.f32 %v608, %v632
        %v645 = vmul.f32 %v612, %v632
        %v646 = vmul.f32 %v616, %v633
        %v647 = vmul.f32 %v620, %v633
        %v648 = vmul.f32 %v624, %v633
        %v649 = vmul.f32 %v628, %v633
        %v650 = vadd.f32 %v550, %v634
        %v651 = vadd.f32 %v551, %v635
        %v652 = vadd.f32 %v552, %v636
        %v653 = vadd.f32 %v553, %v637
        %v654 = vadd.f32 %v554, %v638
        %v655 = vadd.f32 %v555, %v639
        %v656 = vadd.f32 %v556, %v640
        %v657 = vadd.f32 %v557, %v641
        %v658 = vadd.f32 %v558, %v642
        %v659 = vadd.f32 %v559, %v643
        %v660 = vadd.f32 %v560, %v644
        %v661 = vadd.f32 %v561, %v645
        %v662 = vadd.f32 %v562, %v646
        %v663 = vadd.f32 %v563, %v647
        %v664 = vadd.f32 %v564, %v648
        %v665 = vadd.f32 %v565, %v649
        %v666 = vand.u32 2147483647, %v650
        %vm667 = vcmp.le.f32.partialorder %v666, 0.7853982
        %vm668 = vcmp.lt.s32.totalorder %v650, 0
        %v669 = vand.u32 %v650, 2139095040
        %v670 = vshrl.u32 %v669, 23
        %v671 = vsub.s32 %v670, 127
        %v672 = vand.u32 2147483647, %v650
        %v673 = vand.u32 %v672, 8388607
        %v674 = vor.u32 %v673, 8388608
        %v675 = vsub.s32 0, %v674
        %v676 = vadd.s32 %v671, 1
        %vm677 = vcmp.gt.s32.totalorder %v676, 0
        %v678 = vsel %vm677, %v676, 0
        %v679 = vshrl.u32 %v678, 5
        %v680 = vand.u32 %v678, 31
        %v681 = vsub.s32 32, %v680
        %v682 = vshrl.u32 683565275, %v681
        %v683 = vshll.u32 683565275, %v680
        %v684 = vshrl.u32 2475754826, %v681
        %v685 = vor.u32 %v683, %v684
        %v686 = vshll.u32 2475754826, %v680
        %v687 = vshrl.u32 2131351028, %v681
        %v688 = vor.u32 %v686, %v687
        %v689 = vshll.u32 2131351028, %v680
        %v690 = vshrl.u32 2102212464, %v681
        %v691 = vor.u32 %v689, %v690
        %v692 = vshll.u32 2102212464, %v680
        %v693 = vshrl.u32 920167782, %v681
        %v694 = vor.u32 %v692, %v693
        %v695 = vshll.u32 920167782, %v680
        %v696 = vshrl.u32 1326507024, %v681
        %v697 = vor.u32 %v695, %v696
        %vm698 = vcmp.lt.s32.totalorder %v679, 1
        %vm699 = vcmp.lt.s32.totalorder %v679, 2
        %vm700 = vcmp.lt.s32.totalorder %v679, 3
        %vm701 = vcmp.lt.s32.totalorder %v679, 4
        %v702 = vsel %vm698, %v682, %v685
        %v703 = vsel %vm701, %v691, 2102212464
        %v704 = vsel %vm700, %v688, %v703
        %v705 = vsel %vm699, %v702, %v704
        %v706 = vsel %vm698, %v685, %v688
        %v707 = vsel %vm701, %v694, 920167782
        %v708 = vsel %vm700, %v691, %v707
        %v709 = vsel %vm699, %v706, %v708
        %v710 = vsel %vm698, %v688, %v691
        %v711 = vsel %vm701, %v697, 1326507024
        %v712 = vsel %vm700, %v694, %v711
        %v713 = vsel %vm699, %v710, %v712
        %v714 = vshll.u32 %v674, 8
        %v715 = vand.u32 %v714, 65535
        %v716 = vshrl.u32 %v714, 16
        %v717 = vand.u32 %v713, 65535
        %v718 = vshrl.u32 %v713, 16
        %v719 = vmul.u32 %v715, %v717
        %v720 = vmul.u32 %v715, %v718
        %v721 = vmul.u32 %v716, %v717
        %v722 = vmul.u32 %v716, %v718
        %v723 = vshll.u32 %v720, 16
        %v724 = vshrl.u32 %v720, 16
        %v725 = vshll.u32 %v721, 16
        %v726 = vshrl.u32 %v721, 16
        %vm727 = vc.u32 %v719, %v723
        %v728 = vsel %vm727, 1, 0
        %v729 = vadd.s32 %v719, %v723
        %v730 = vadd.s32 %v722, %v728
        %vm731 = vc.u32 %v729, %v725
        %v732 = vsel %vm731, 1, 0
        %v733 = vadd.s32 %v729, %v725
        %v734 = vadd.s32 %v730, %v732
        %v735 = vadd.s32 %v734, %v724
        %v736 = vadd.s32 %v735, %v726
        %v737 = vand.u32 %v714, 65535
        %v738 = vshrl.u32 %v714, 16
        %v739 = vand.u32 %v709, 65535
        %v740 = vshrl.u32 %v709, 16
        %v741 = vmul.u32 %v737, %v739
        %v742 = vmul.u32 %v737, %v740
        %v743 = vmul.u32 %v738, %v739
        %v744 = vmul.u32 %v738, %v740
        %v745 = vshll.u32 %v742, 16
        %v746 = vshrl.u32 %v742, 16
        %v747 = vshll.u32 %v743, 16
        %v748 = vshrl.u32 %v743, 16
        %vm749 = vc.u32 %v741, %v745
        %v750 = vsel %vm749, 1, 0
        %v751 = vadd.s32 %v741, %v745
        %v752 = vadd.s32 %v744, %v750
        %vm753 = vc.u32 %v751, %v747
        %v754 = vsel %vm753, 1, 0
        %v755 = vadd.s32 %v751, %v747
        %v756 = vadd.s32 %v752, %v754
        %v757 = vadd.s32 %v756, %v746
        %v758 = vadd.s32 %v757, %v748
        %v759 = vmul.u32 %v714, %v705
        %v760 = vadd.s32 %v736, %v755
        %vm761 = vc.u32 %v736, %v755
        %v762 = vadd.s32 %v758, 1
        %v763 = vsel %vm761, %v762, %v758
        %v764 = vadd.s32 %v759, %v763
        %v765 = vadd.s32 %v764, 536870912
        %v766 = vshrl.u32 %v765, 30
        %v767 = vshll.u32 %v766, 30
        %v768 = vsub.s32 %v764, %v767
        %vm769 = vcmp.lt.s32.totalorder %v768, 0
        %v770 = vsub.s32 0, %v768
        %v771 = vsel %vm769, %v770, %v768
        %v772 = vclz %v771
        %v773 = vsub.s32 %v772, 2
        %vm774 = vcmp.gt.s32.totalorder 0, %v773
        %v775 = vsel %vm774, 0, %v773
        %v776 = vsub.s32 32, %v775
        %v777 = vshll.u32 %v768, %v775
        %v778 = vshrl.u32 %v760, %v776
        %v779 = vor.u32 %v777, %v778
        %v780 = vsub.s32 4294967266, %v775
        %v781 = vadd.s32 %v780, 127
        %v782 = vshll.u32 %v781, 23
        %v783 = vor.u32 4788187, %v782
        %v784 = vand.u32 2147483647, %v783
        %v786 = vcvt.s32.f32 %v779
        %v787 = vmul.f32 %v786, %v784
        %v788 = vxor.u32 %v787, 2147483648
        %v789 = vsel %vm668, %v788, %v787
        %v790 = vsub.s32 4, %v766
        %v791 = vsel %vm668, %v790, %v766
        %v792 = vsel %vm667, %v650, %v789
        %v793 = vsel %vm667, 0, %v791
        %v794 = vmul.f32 %v792, %v792
        %v795 = vmul.f32 %v794, -0.001358992
        %v796 = vadd.f32 %v795, 0.041655596
        %v797 = vmul.f32 %v794, %v796
        %v798 = vadd.f32 %v797, -0.4999988
        %v799 = vmul.f32 %v794, %v798
        %v800 = vadd.f32 1.0, %v799
        %v801 = vmul.f32 %v792, %v792
        %v802 = vmul.f32 %v801, -0.00019511016
        %v803 = vadd.f32 %v802, 0.008332121
        %v804 = vmul.f32 %v801, %v803
        %v805 = vadd.f32 %v804, -0.16666654
        %v806 = vmul.f32 %v801, %v805
        %v807 = vadd.f32 %v806, 1.0
        %v808 = vmul.f32 %v807, %v792
        %vm809 = vweird.f32 %v650
        %v810 = vand.u32 %v793, 3
        %vm811 = vcmp.lt.s32.totalorder %v810, 2
        %vm812 = vcmp.eq.s32.totalorder %v810, 0
        %v813 = vxor.u32 %v808, 2147483648
        %v814 = vsel %vm812, %v800, %v813
        %vm815 = vcmp.eq.s32.totalorder %v810, 2
        %v816 = vxor.u32 %v800, 2147483648
        %v817 = vsel %vm815, %v816, %v808
        %v818 = vsel %vm811, %v814, %v817
        %v819 = vsel %vm809, nan, %v818
        %v820 = vand.u32 2147483647, %v651
        %vm821 = vcmp.le.f32.partialorder %v820, 0.7853982
        %vm822 = vcmp.lt.s32.totalorder %v651, 0
        %v823 = vand.u32 %v651, 2139095040
        %v824 = vshrl.u32 %v823, 23
        %v825 = vsub.s32 %v824, 127
        %v826 = vand.u32 2147483647, %v651
        %v827 = vand.u32 %v826, 8388607
        %v828 = vor.u32 %v827, 8388608
        %v829 = vsub.s32 0, %v828
        %v830 = vadd.s32 %v825, 1
        %vm831 = vcmp.gt.s32.totalorder %v830, 0
        %v832 = vsel %vm831, %v830, 0
        %v833 = vshrl.u32 %v832, 5
        %v834 = vand.u32 %v832, 31
        %v835 = vsub.s32 32, %v834
        %v836 = vshrl.u32 683565275, %v835
        %v837 = vshll.u32 683565275, %v834
        %v838 = vshrl.u32 2475754826, %v835
        %v839 = vor.u32 %v837, %v838
        %v840 = vshll.u32 2475754826, %v834
        %v841 = vshrl.u32 2131351028, %v835
        %v842 = vor.u32 %v840, %v841
        %v843 = vshll.u32 2131351028, %v834
        %v844 = vshrl.u32 2102212464, %v835
        %v845 = vor.u32 %v843, %v844
        %v846 = vshll.u32 2102212464, %v834
        %v847 = vshrl.u32 920167782, %v835
        %v848 = vor.u32 %v846, %v847
        %v849 = vshll.u32 920167782, %v834
        %v850 = vshrl.u32 1326507024, %v835
        %v851 = vor.u32 %v849, %v850
        %vm852 = vcmp.lt.s32.totalorder %v833, 1
        %vm853 = vcmp.lt.s32.totalorder %v833, 2
        %vm854 = vcmp.lt.s32.totalorder %v833, 3
        %vm855 = vcmp.lt.s32.totalorder %v833, 4
        %v856 = vsel %vm852, %v836, %v839
        %v857 = vsel %vm855, %v845, 2102212464
        %v858 = vsel %vm854, %v842, %v857
        %v859 = vsel %vm853, %v856, %v858
        %v860 = vsel %vm852, %v839, %v842
        %v861 = vsel %vm855, %v848, 920167782
        %v862 = vsel %vm854, %v845, %v861
        %v863 = vsel %vm853, %v860, %v862
        %v864 = vsel %vm852, %v842, %v845
        %v865 = vsel %vm855, %v851, 1326507024
        %v866 = vsel %vm854, %v848, %v865
        %v867 = vsel %vm853, %v864, %v866
        %v868 = vshll.u32 %v828, 8
        %v869 = vand.u32 %v868, 65535
        %v870 = vshrl.u32 %v868, 16
        %v871 = vand.u32 %v867, 65535
        %v872 = vshrl.u32 %v867, 16
        %v873 = vmul.u32 %v869, %v871
        %v874 = vmul.u32 %v869, %v872
        %v875 = vmul.u32 %v870, %v871
        %v876 = vmul.u32 %v870, %v872
        %v877 = vshll.u32 %v874, 16
        %v878 = vshrl.u32 %v874, 16
        %v879 = vshll.u32 %v875, 16
        %v880 = vshrl.u32 %v875, 16
        %vm881 = vc.u32 %v873, %v877
        %v882 = vsel %vm881, 1, 0
        %v883 = vadd.s32 %v873, %v877
        %v884 = vadd.s32 %v876, %v882
        %vm885 = vc.u32 %v883, %v879
        %v886 = vsel %vm885, 1, 0
        %v887 = vadd.s32 %v883, %v879
        %v888 = vadd.s32 %v884, %v886
        %v889 = vadd.s32 %v888, %v878
        %v890 = vadd.s32 %v889, %v880
        %v891 = vand.u32 %v868, 65535
        %v892 = vshrl.u32 %v868, 16
        %v893 = vand.u32 %v863, 65535
        %v894 = vshrl.u32 %v863, 16
        %v895 = vmul.u32 %v891, %v893
        %v896 = vmul.u32 %v891, %v894
        %v897 = vmul.u32 %v892, %v893
        %v898 = vmul.u32 %v892, %v894
        %v899 = vshll.u32 %v896, 16
        %v900 = vshrl.u32 %v896, 16
        %v901 = vshll.u32 %v897, 16
        %v902 = vshrl.u32 %v897, 16
        %vm903 = vc.u32 %v895, %v899
        %v904 = vsel %vm903, 1, 0
        %v905 = vadd.s32 %v895, %v899
        %v906 = vadd.s32 %v898, %v904
        %vm907 = vc.u32 %v905, %v901
        %v908 = vsel %vm907, 1, 0
        %v909 = vadd.s32 %v905, %v901
        %v910 = vadd.s32 %v906, %v908
        %v911 = vadd.s32 %v910, %v900
        %v912 = vadd.s32 %v911, %v902
        %v913 = vmul.u32 %v868, %v859
        %v914 = vadd.s32 %v890, %v909
        %vm915 = vc.u32 %v890, %v909
        %v916 = vadd.s32 %v912, 1
        %v917 = vsel %vm915, %v916, %v912
        %v918 = vadd.s32 %v913, %v917
        %v919 = vadd.s32 %v918, 536870912
        %v920 = vshrl.u32 %v919, 30
        %v921 = vshll.u32 %v920, 30
        %v922 = vsub.s32 %v918, %v921
        %vm923 = vcmp.lt.s32.totalorder %v922, 0
        %v924 = vsub.s32 0, %v922
        %v925 = vsel %vm923, %v924, %v922
        %v926 = vclz %v925
        %v927 = vsub.s32 %v926, 2
        %vm928 = vcmp.gt.s32.totalorder 0, %v927
        %v929 = vsel %vm928, 0, %v927
        %v930 = vsub.s32 32, %v929
        %v931 = vshll.u32 %v922, %v929
        %v932 = vshrl.u32 %v914, %v930
        %v933 = vor.u32 %v931, %v932
        %v934 = vsub.s32 4294967266, %v929
        %v935 = vadd.s32 %v934, 127
        %v936 = vshll.u32 %v935, 23
        %v937 = vor.u32 4788187, %v936
        %v938 = vand.u32 2147483647, %v937
        %v940 = vcvt.s32.f32 %v933
        %v941 = vmul.f32 %v940, %v938
        %v942 = vxor.u32 %v941, 2147483648
        %v943 = vsel %vm822, %v942, %v941
        %v944 = vsub.s32 4, %v920
        %v945 = vsel %vm822, %v944, %v920
        %v946 = vsel %vm821, %v651, %v943
        %v947 = vsel %vm821, 0, %v945
        %v948 = vmul.f32 %v946, %v946
        %v949 = vmul.f32 %v948, -0.001358992
        %v950 = vadd.f32 %v949, 0.041655596
        %v951 = vmul.f32 %v948, %v950
        %v952 = vadd.f32 %v951, -0.4999988
        %v953 = vmul.f32 %v948, %v952
        %v954 = vadd.f32 1.0, %v953
        %v955 = vmul.f32 %v946, %v946
        %v956 = vmul.f32 %v955, -0.00019511016
        %v957 = vadd.f32 %v956, 0.008332121
        %v958 = vmul.f32 %v955, %v957
        %v959 = vadd.f32 %v958, -0.16666654
        %v960 = vmul.f32 %v955, %v959
        %v961 = vadd.f32 %v960, 1.0
        %v962 = vmul.f32 %v961, %v946
        %vm963 = vweird.f32 %v651
        %v964 = vand.u32 %v947, 3
        %vm965 = vcmp.lt.s32.totalorder %v964, 2
        %vm966 = vcmp.eq.s32.totalorder %v964, 0
        %v967 = vxor.u32 %v962, 2147483648
        %v968 = vsel %vm966, %v954, %v967
        %vm969 = vcmp.eq.s32.totalorder %v964, 2
        %v970 = vxor.u32 %v954, 2147483648
        %v971 = vsel %vm969, %v970, %v962
        %v972 = vsel %vm965, %v968, %v971
        %v973 = vsel %vm963, nan, %v972
        %v974 = vand.u32 2147483647, %v652
        %vm975 = vcmp.le.f32.partialorder %v974, 0.7853982
        %vm976 = vcmp.lt.s32.totalorder %v652, 0
        %v977 = vand.u32 %v652, 2139095040
        %v978 = vshrl.u32 %v977, 23
        %v979 = vsub.s32 %v978, 127
        %v980 = vand.u32 2147483647, %v652
        %v981 = vand.u32 %v980, 8388607
        %v982 = vor.u32 %v981, 8388608
        %v983 = vsub.s32 0, %v982
        %v984 = vadd.s32 %v979, 1
        %vm985 = vcmp.gt.s32.totalorder %v984, 0
        %v986 = vsel %vm985, %v984, 0
        %v987 = vshrl.u32 %v986, 5
        %v988 = vand.u32 %v986, 31
        %v989 = vsub.s32 32, %v988
        %v990 = vshrl.u32 683565275, %v989
        %v991 = vshll.u32 683565275, %v988
        %v992 = vshrl.u32 2475754826, %v989
        %v993 = vor.u32 %v991, %v992
        %v994 = vshll.u32 2475754826, %v988
        %v995 = vshrl.u32 2131351028, %v989
        %v996 = vor.u32 %v994, %v995
        %v997 = vshll.u32 2131351028, %v988
        %v998 = vshrl.u32 2102212464, %v989
        %v999 = vor.u32 %v997, %v998
        %v1000 = vshll.u32 2102212464, %v988
        %v1001 = vshrl.u32 920167782, %v989
        %v1002 = vor.u32 %v1000, %v1001
        %v1003 = vshll.u32 920167782, %v988
        %v1004 = vshrl.u32 1326507024, %v989
        %v1005 = vor.u32 %v1003, %v1004
        %vm1006 = vcmp.lt.s32.totalorder %v987, 1
        %vm1007 = vcmp.lt.s32.totalorder %v987, 2
        %vm1008 = vcmp.lt.s32.totalorder %v987, 3
        %vm1009 = vcmp.lt.s32.totalorder %v987, 4
        %v1010 = vsel %vm1006, %v990, %v993
        %v1011 = vsel %vm1009, %v999, 2102212464
        %v1012 = vsel %vm1008, %v996, %v1011
        %v1013 = vsel %vm1007, %v1010, %v1012
        %v1014 = vsel %vm1006, %v993, %v996
        %v1015 = vsel %vm1009, %v1002, 920167782
        %v1016 = vsel %vm1008, %v999, %v1015
        %v1017 = vsel %vm1007, %v1014, %v1016
        %v1018 = vsel %vm1006, %v996, %v999
        %v1019 = vsel %vm1009, %v1005, 1326507024
        %v1020 = vsel %vm1008, %v1002, %v1019
        %v1021 = vsel %vm1007, %v1018, %v1020
        %v1022 = vshll.u32 %v982, 8
        %v1023 = vand.u32 %v1022, 65535
        %v1024 = vshrl.u32 %v1022, 16
        %v1025 = vand.u32 %v1021, 65535
        %v1026 = vshrl.u32 %v1021, 16
        %v1027 = vmul.u32 %v1023, %v1025
        %v1028 = vmul.u32 %v1023, %v1026
        %v1029 = vmul.u32 %v1024, %v1025
        %v1030 = vmul.u32 %v1024, %v1026
        %v1031 = vshll.u32 %v1028, 16
        %v1032 = vshrl.u32 %v1028, 16
        %v1033 = vshll.u32 %v1029, 16
        %v1034 = vshrl.u32 %v1029, 16
        %vm1035 = vc.u32 %v1027, %v1031
        %v1036 = vsel %vm1035, 1, 0
        %v1037 = vadd.s32 %v1027, %v1031
        %v1038 = vadd.s32 %v1030, %v1036
        %vm1039 = vc.u32 %v1037, %v1033
        %v1040 = vsel %vm1039, 1, 0
        %v1041 = vadd.s32 %v1037, %v1033
        %v1042 = vadd.s32 %v1038, %v1040
        %v1043 = vadd.s32 %v1042, %v1032
        %v1044 = vadd.s32 %v1043, %v1034
        %v1045 = vand.u32 %v1022, 65535
        %v1046 = vshrl.u32 %v1022, 16
        %v1047 = vand.u32 %v1017, 65535
        %v1048 = vshrl.u32 %v1017, 16
        %v1049 = vmul.u32 %v1045, %v1047
        %v1050 = vmul.u32 %v1045, %v1048
        %v1051 = vmul.u32 %v1046, %v1047
        %v1052 = vmul.u32 %v1046, %v1048
        %v1053 = vshll.u32 %v1050, 16
        %v1054 = vshrl.u32 %v1050, 16
        %v1055 = vshll.u32 %v1051, 16
        %v1056 = vshrl.u32 %v1051, 16
        %vm1057 = vc.u32 %v1049, %v1053
        %v1058 = vsel %vm1057, 1, 0
        %v1059 = vadd.s32 %v1049, %v1053
        %v1060 = vadd.s32 %v1052, %v1058
        %vm1061 = vc.u32 %v1059, %v1055
        %v1062 = vsel %vm1061, 1, 0
        %v1063 = vadd.s32 %v1059, %v1055
        %v1064 = vadd.s32 %v1060, %v1062
        %v1065 = vadd.s32 %v1064, %v1054
        %v1066 = vadd.s32 %v1065, %v1056
        %v1067 = vmul.u32 %v1022, %v1013
        %v1068 = vadd.s32 %v1044, %v1063
        %vm1069 = vc.u32 %v1044, %v1063
        %v1070 = vadd.s32 %v1066, 1
        %v1071 = vsel %vm1069, %v1070, %v1066
        %v1072 = vadd.s32 %v1067, %v1071
        %v1073 = vadd.s32 %v1072, 536870912
        %v1074 = vshrl.u32 %v1073, 30
        %v1075 = vshll.u32 %v1074, 30
        %v1076 = vsub.s32 %v1072, %v1075
        %vm1077 = vcmp.lt.s32.totalorder %v1076, 0
        %v1078 = vsub.s32 0, %v1076
        %v1079 = vsel %vm1077, %v1078, %v1076
        %v1080 = vclz %v1079
        %v1081 = vsub.s32 %v1080, 2
        %vm1082 = vcmp.gt.s32.totalorder 0, %v1081
        %v1083 = vsel %vm1082, 0, %v1081
        %v1084 = vsub.s32 32, %v1083
        %v1085 = vshll.u32 %v1076, %v1083
        %v1086 = vshrl.u32 %v1068, %v1084
        %v1087 = vor.u32 %v1085, %v1086
        %v1088 = vsub.s32 4294967266, %v1083
        %v1089 = vadd.s32 %v1088, 127
        %v1090 = vshll.u32 %v1089, 23
        %v1091 = vor.u32 4788187, %v1090
        %v1092 = vand.u32 2147483647, %v1091
        %v1094 = vcvt.s32.f32 %v1087
        %v1095 = vmul.f32 %v1094, %v1092
        %v1096 = vxor.u32 %v1095, 2147483648
        %v1097 = vsel %vm976, %v1096, %v1095
        %v1098 = vsub.s32 4, %v1074
        %v1099 = vsel %vm976, %v1098, %v1074
        %v1100 = vsel %vm975, %v652, %v1097
        %v1101 = vsel %vm975, 0, %v1099
        %v1102 = vmul.f32 %v1100, %v1100
        %v1103 = vmul.f32 %v1102, -0.001358992
        %v1104 = vadd.f32 %v1103, 0.041655596
        %v1105 = vmul.f32 %v1102, %v1104
        %v1106 = vadd.f32 %v1105, -0.4999988
        %v1107 = vmul.f32 %v1102, %v1106
        %v1108 = vadd.f32 1.0, %v1107
        %v1109 = vmul.f32 %v1100, %v1100
        %v1110 = vmul.f32 %v1109, -0.00019511016
        %v1111 = vadd.f32 %v1110, 0.008332121
        %v1112 = vmul.f32 %v1109, %v1111
        %v1113 = vadd.f32 %v1112, -0.16666654
        %v1114 = vmul.f32 %v1109, %v1113
        %v1115 = vadd.f32 %v1114, 1.0
        %v1116 = vmul.f32 %v1115, %v1100
        %vm1117 = vweird.f32 %v652
        %v1118 = vand.u32 %v1101, 3
        %vm1119 = vcmp.lt.s32.totalorder %v1118, 2
        %vm1120 = vcmp.eq.s32.totalorder %v1118, 0
        %v1121 = vxor.u32 %v1116, 2147483648
        %v1122 = vsel %vm1120, %v1108, %v1121
        %vm1123 = vcmp.eq.s32.totalorder %v1118, 2
        %v1124 = vxor.u32 %v1108, 2147483648
        %v1125 = vsel %vm1123, %v1124, %v1116
        %v1126 = vsel %vm1119, %v1122, %v1125
        %v1127 = vsel %vm1117, nan, %v1126
        %v1128 = vand.u32 2147483647, %v653
        %vm1129 = vcmp.le.f32.partialorder %v1128, 0.7853982
        %vm1130 = vcmp.lt.s32.totalorder %v653, 0
        %v1131 = vand.u32 %v653, 2139095040
        %v1132 = vshrl.u32 %v1131, 23
        %v1133 = vsub.s32 %v1132, 127
        %v1134 = vand.u32 2147483647, %v653
        %v1135 = vand.u32 %v1134, 8388607
        %v1136 = vor.u32 %v1135, 8388608
        %v1137 = vsub.s32 0, %v1136
        %v1138 = vadd.s32 %v1133, 1
        %vm1139 = vcmp.gt.s32.totalorder %v1138, 0
        %v1140 = vsel %vm1139, %v1138, 0
        %v1141 = vshrl.u32 %v1140, 5
        %v1142 = vand.u32 %v1140, 31
        %v1143 = vsub.s32 32, %v1142
        %v1144 = vshrl.u32 683565275, %v1143
        %v1145 = vshll.u32 683565275, %v1142
        %v1146 = vshrl.u32 2475754826, %v1143
        %v1147 = vor.u32 %v1145, %v1146
        %v1148 = vshll.u32 2475754826, %v1142
        %v1149 = vshrl.u32 2131351028, %v1143
        %v1150 = vor.u32 %v1148, %v1149
        %v1151 = vshll.u32 2131351028, %v1142
        %v1152 = vshrl.u32 2102212464, %v1143
        %v1153 = vor.u32 %v1151, %v1152
        %v1154 = vshll.u32 2102212464, %v1142
        %v1155 = vshrl.u32 920167782, %v1143
        %v1156 = vor.u32 %v1154, %v1155
        %v1157 = vshll.u32 920167782, %v1142
        %v1158 = vshrl.u32 1326507024, %v1143
        %v1159 = vor.u32 %v1157, %v1158
        %vm1160 = vcmp.lt.s32.totalorder %v1141, 1
        %vm1161 = vcmp.lt.s32.totalorder %v1141, 2
        %vm1162 = vcmp.lt.s32.totalorder %v1141, 3
        %vm1163 = vcmp.lt.s32.totalorder %v1141, 4
        %v1164 = vsel %vm1160, %v1144, %v1147
        %v1165 = vsel %vm1163, %v1153, 2102212464
        %v1166 = vsel %vm1162, %v1150, %v1165
        %v1167 = vsel %vm1161, %v1164, %v1166
        %v1168 = vsel %vm1160, %v1147, %v1150
        %v1169 = vsel %vm1163, %v1156, 920167782
        %v1170 = vsel %vm1162, %v1153, %v1169
        %v1171 = vsel %vm1161, %v1168, %v1170
        %v1172 = vsel %vm1160, %v1150, %v1153
        %v1173 = vsel %vm1163, %v1159, 1326507024
        %v1174 = vsel %vm1162, %v1156, %v1173
        %v1175 = vsel %vm1161, %v1172, %v1174
        %v1176 = vshll.u32 %v1136, 8
        %v1177 = vand.u32 %v1176, 65535
        %v1178 = vshrl.u32 %v1176, 16
        %v1179 = vand.u32 %v1175, 65535
        %v1180 = vshrl.u32 %v1175, 16
        %v1181 = vmul.u32 %v1177, %v1179
        %v1182 = vmul.u32 %v1177, %v1180
        %v1183 = vmul.u32 %v1178, %v1179
        %v1184 = vmul.u32 %v1178, %v1180
        %v1185 = vshll.u32 %v1182, 16
        %v1186 = vshrl.u32 %v1182, 16
        %v1187 = vshll.u32 %v1183, 16
        %v1188 = vshrl.u32 %v1183, 16
        %vm1189 = vc.u32 %v1181, %v1185
        %v1190 = vsel %vm1189, 1, 0
        %v1191 = vadd.s32 %v1181, %v1185
        %v1192 = vadd.s32 %v1184, %v1190
        %vm1193 = vc.u32 %v1191, %v1187
        %v1194 = vsel %vm1193, 1, 0
        %v1195 = vadd.s32 %v1191, %v1187
        %v1196 = vadd.s32 %v1192, %v1194
        %v1197 = vadd.s32 %v1196, %v1186
        %v1198 = vadd.s32 %v1197, %v1188
        %v1199 = vand.u32 %v1176, 65535
        %v1200 = vshrl.u32 %v1176, 16
        %v1201 = vand.u32 %v1171, 65535
        %v1202 = vshrl.u32 %v1171, 16
        %v1203 = vmul.u32 %v1199, %v1201
        %v1204 = vmul.u32 %v1199, %v1202
        %v1205 = vmul.u32 %v1200, %v1201
        %v1206 = vmul.u32 %v1200, %v1202
        %v1207 = vshll.u32 %v1204, 16
        %v1208 = vshrl.u32 %v1204, 16
        %v1209 = vshll.u32 %v1205, 16
        %v1210 = vshrl.u32 %v1205, 16
        %vm1211 = vc.u32 %v1203, %v1207
        %v1212 = vsel %vm1211, 1, 0
        %v1213 = vadd.s32 %v1203, %v1207
        %v1214 = vadd.s32 %v1206, %v1212
        %vm1215 = vc.u32 %v1213, %v1209
        %v1216 = vsel %vm1215, 1, 0
        %v1217 = vadd.s32 %v1213, %v1209
        %v1218 = vadd.s32 %v1214, %v1216
        %v1219 = vadd.s32 %v1218, %v1208
        %v1220 = vadd.s32 %v1219, %v1210
        %v1221 = vmul.u32 %v1176, %v1167
        %v1222 = vadd.s32 %v1198, %v1217
        %vm1223 = vc.u32 %v1198, %v1217
        %v1224 = vadd.s32 %v1220, 1
        %v1225 = vsel %vm1223, %v1224, %v1220
        %v1226 = vadd.s32 %v1221, %v1225
        %v1227 = vadd.s32 %v1226, 536870912
        %v1228 = vshrl.u32 %v1227, 30
        %v1229 = vshll.u32 %v1228, 30
        %v1230 = vsub.s32 %v1226, %v1229
        %vm1231 = vcmp.lt.s32.totalorder %v1230, 0
        %v1232 = vsub.s32 0, %v1230
        %v1233 = vsel %vm1231, %v1232, %v1230
        %v1234 = vclz %v1233
        %v1235 = vsub.s32 %v1234, 2
        %vm1236 = vcmp.gt.s32.totalorder 0, %v1235
        %v1237 = vsel %vm1236, 0, %v1235
        %v1238 = vsub.s32 32, %v1237
        %v1239 = vshll.u32 %v1230, %v1237
        %v1240 = vshrl.u32 %v1222, %v1238
        %v1241 = vor.u32 %v1239, %v1240
        %v1242 = vsub.s32 4294967266, %v1237
        %v1243 = vadd.s32 %v1242, 127
        %v1244 = vshll.u32 %v1243, 23
        %v1245 = vor.u32 4788187, %v1244
        %v1246 = vand.u32 2147483647, %v1245
        %v1248 = vcvt.s32.f32 %v1241
        %v1249 = vmul.f32 %v1248, %v1246
        %v1250 = vxor.u32 %v1249, 2147483648
        %v1251 = vsel %vm1130, %v1250, %v1249
        %v1252 = vsub.s32 4, %v1228
        %v1253 = vsel %vm1130, %v1252, %v1228
        %v1254 = vsel %vm1129, %v653, %v1251
        %v1255 = vsel %vm1129, 0, %v1253
        %v1256 = vmul.f32 %v1254, %v1254
        %v1257 = vmul.f32 %v1256, -0.001358992
        %v1258 = vadd.f32 %v1257, 0.041655596
        %v1259 = vmul.f32 %v1256, %v1258
        %v1260 = vadd.f32 %v1259, -0.4999988
        %v1261 = vmul.f32 %v1256, %v1260
        %v1262 = vadd.f32 1.0, %v1261
        %v1263 = vmul.f32 %v1254, %v1254
        %v1264 = vmul.f32 %v1263, -0.00019511016
        %v1265 = vadd.f32 %v1264, 0.008332121
        %v1266 = vmul.f32 %v1263, %v1265
        %v1267 = vadd.f32 %v1266, -0.16666654
        %v1268 = vmul.f32 %v1263, %v1267
        %v1269 = vadd.f32 %v1268, 1.0
        %v1270 = vmul.f32 %v1269, %v1254
        %vm1271 = vweird.f32 %v653
        %v1272 = vand.u32 %v1255, 3
        %vm1273 = vcmp.lt.s32.totalorder %v1272, 2
        %vm1274 = vcmp.eq.s32.totalorder %v1272, 0
        %v1275 = vxor.u32 %v1270, 2147483648
        %v1276 = vsel %vm1274, %v1262, %v1275
        %vm1277 = vcmp.eq.s32.totalorder %v1272, 2
        %v1278 = vxor.u32 %v1262, 2147483648
        %v1279 = vsel %vm1277, %v1278, %v1270
        %v1280 = vsel %vm1273, %v1276, %v1279
        %v1281 = vsel %vm1271, nan, %v1280
        %v1282 = vand.u32 2147483647, %v654
        %vm1283 = vcmp.le.f32.partialorder %v1282, 0.7853982
        %vm1284 = vcmp.lt.s32.totalorder %v654, 0
        %v1285 = vand.u32 %v654, 2139095040
        %v1286 = vshrl.u32 %v1285, 23
        %v1287 = vsub.s32 %v1286, 127
        %v1288 = vand.u32 2147483647, %v654
        %v1289 = vand.u32 %v1288, 8388607
        %v1290 = vor.u32 %v1289, 8388608
        %v1291 = vsub.s32 0, %v1290
        %v1292 = vadd.s32 %v1287, 1
        %vm1293 = vcmp.gt.s32.totalorder %v1292, 0
        %v1294 = vsel %vm1293, %v1292, 0
        %v1295 = vshrl.u32 %v1294, 5
        %v1296 = vand.u32 %v1294, 31
        %v1297 = vsub.s32 32, %v1296
        %v1298 = vshrl.u32 683565275, %v1297
        %v1299 = vshll.u32 683565275, %v1296
        %v1300 = vshrl.u32 2475754826, %v1297
        %v1301 = vor.u32 %v1299, %v1300
        %v1302 = vshll.u32 2475754826, %v1296
        %v1303 = vshrl.u32 2131351028, %v1297
        %v1304 = vor.u32 %v1302, %v1303
        %v1305 = vshll.u32 2131351028, %v1296
        %v1306 = vshrl.u32 2102212464, %v1297
        %v1307 = vor.u32 %v1305, %v1306
        %v1308 = vshll.u32 2102212464, %v1296
        %v1309 = vshrl.u32 920167782, %v1297
        %v1310 = vor.u32 %v1308, %v1309
        %v1311 = vshll.u32 920167782, %v1296
        %v1312 = vshrl.u32 1326507024, %v1297
        %v1313 = vor.u32 %v1311, %v1312
        %vm1314 = vcmp.lt.s32.totalorder %v1295, 1
        %vm1315 = vcmp.lt.s32.totalorder %v1295, 2
        %vm1316 = vcmp.lt.s32.totalorder %v1295, 3
        %vm1317 = vcmp.lt.s32.totalorder %v1295, 4
        %v1318 = vsel %vm1314, %v1298, %v1301
        %v1319 = vsel %vm1317, %v1307, 2102212464
        %v1320 = vsel %vm1316, %v1304, %v1319
        %v1321 = vsel %vm1315, %v1318, %v1320
        %v1322 = vsel %vm1314, %v1301, %v1304
        %v1323 = vsel %vm1317, %v1310, 920167782
        %v1324 = vsel %vm1316, %v1307, %v1323
        %v1325 = vsel %vm1315, %v1322, %v1324
        %v1326 = vsel %vm1314, %v1304, %v1307
        %v1327 = vsel %vm1317, %v1313, 1326507024
        %v1328 = vsel %vm1316, %v1310, %v1327
        %v1329 = vsel %vm1315, %v1326, %v1328
        %v1330 = vshll.u32 %v1290, 8
        %v1331 = vand.u32 %v1330, 65535
        %v1332 = vshrl.u32 %v1330, 16
        %v1333 = vand.u32 %v1329, 65535
        %v1334 = vshrl.u32 %v1329, 16
        %v1335 = vmul.u32 %v1331, %v1333
        %v1336 = vmul.u32 %v1331, %v1334
        %v1337 = vmul.u32 %v1332, %v1333
        %v1338 = vmul.u32 %v1332, %v1334
        %v1339 = vshll.u32 %v1336, 16
        %v1340 = vshrl.u32 %v1336, 16
        %v1341 = vshll.u32 %v1337, 16
        %v1342 = vshrl.u32 %v1337, 16
        %vm1343 = vc.u32 %v1335, %v1339
        %v1344 = vsel %vm1343, 1, 0
        %v1345 = vadd.s32 %v1335, %v1339
        %v1346 = vadd.s32 %v1338, %v1344
        %vm1347 = vc.u32 %v1345, %v1341
        %v1348 = vsel %vm1347, 1, 0
        %v1349 = vadd.s32 %v1345, %v1341
        %v1350 = vadd.s32 %v1346, %v1348
        %v1351 = vadd.s32 %v1350, %v1340
        %v1352 = vadd.s32 %v1351, %v1342
        %v1353 = vand.u32 %v1330, 65535
        %v1354 = vshrl.u32 %v1330, 16
        %v1355 = vand.u32 %v1325, 65535
        %v1356 = vshrl.u32 %v1325, 16
        %v1357 = vmul.u32 %v1353, %v1355
        %v1358 = vmul.u32 %v1353, %v1356
        %v1359 = vmul.u32 %v1354, %v1355
        %v1360 = vmul.u32 %v1354, %v1356
        %v1361 = vshll.u32 %v1358, 16
        %v1362 = vshrl.u32 %v1358, 16
        %v1363 = vshll.u32 %v1359, 16
        %v1364 = vshrl.u32 %v1359, 16
        %vm1365 = vc.u32 %v1357, %v1361
        %v1366 = vsel %vm1365, 1, 0
        %v1367 = vadd.s32 %v1357, %v1361
        %v1368 = vadd.s32 %v1360, %v1366
        %vm1369 = vc.u32 %v1367, %v1363
        %v1370 = vsel %vm1369, 1, 0
        %v1371 = vadd.s32 %v1367, %v1363
        %v1372 = vadd.s32 %v1368, %v1370
        %v1373 = vadd.s32 %v1372, %v1362
        %v1374 = vadd.s32 %v1373, %v1364
        %v1375 = vmul.u32 %v1330, %v1321
        %v1376 = vadd.s32 %v1352, %v1371
        %vm1377 = vc.u32 %v1352, %v1371
        %v1378 = vadd.s32 %v1374, 1
        %v1379 = vsel %vm1377, %v1378, %v1374
        %v1380 = vadd.s32 %v1375, %v1379
        %v1381 = vadd.s32 %v1380, 536870912
        %v1382 = vshrl.u32 %v1381, 30
        %v1383 = vshll.u32 %v1382, 30
        %v1384 = vsub.s32 %v1380, %v1383
        %vm1385 = vcmp.lt.s32.totalorder %v1384, 0
        %v1386 = vsub.s32 0, %v1384
        %v1387 = vsel %vm1385, %v1386, %v1384
        %v1388 = vclz %v1387
        %v1389 = vsub.s32 %v1388, 2
        %vm1390 = vcmp.gt.s32.totalorder 0, %v1389
        %v1391 = vsel %vm1390, 0, %v1389
        %v1392 = vsub.s32 32, %v1391
        %v1393 = vshll.u32 %v1384, %v1391
        %v1394 = vshrl.u32 %v1376, %v1392
        %v1395 = vor.u32 %v1393, %v1394
        %v1396 = vsub.s32 4294967266, %v1391
        %v1397 = vadd.s32 %v1396, 127
        %v1398 = vshll.u32 %v1397, 23
        %v1399 = vor.u32 4788187, %v1398
        %v1400 = vand.u32 2147483647, %v1399
        %v1402 = vcvt.s32.f32 %v1395
        %v1403 = vmul.f32 %v1402, %v1400
        %v1404 = vxor.u32 %v1403, 2147483648
        %v1405 = vsel %vm1284, %v1404, %v1403
        %v1406 = vsub.s32 4, %v1382
        %v1407 = vsel %vm1284, %v1406, %v1382
        %v1408 = vsel %vm1283, %v654, %v1405
        %v1409 = vsel %vm1283, 0, %v1407
        %v1410 = vmul.f32 %v1408, %v1408
        %v1411 = vmul.f32 %v1410, -0.001358992
        %v1412 = vadd.f32 %v1411, 0.041655596
        %v1413 = vmul.f32 %v1410, %v1412
        %v1414 = vadd.f32 %v1413, -0.4999988
        %v1415 = vmul.f32 %v1410, %v1414
        %v1416 = vadd.f32 1.0, %v1415
        %v1417 = vmul.f32 %v1408, %v1408
        %v1418 = vmul.f32 %v1417, -0.00019511016
        %v1419 = vadd.f32 %v1418, 0.008332121
        %v1420 = vmul.f32 %v1417, %v1419
        %v1421 = vadd.f32 %v1420, -0.16666654
        %v1422 = vmul.f32 %v1417, %v1421
        %v1423 = vadd.f32 %v1422, 1.0
        %v1424 = vmul.f32 %v1423, %v1408
        %vm1425 = vweird.f32 %v654
        %v1426 = vand.u32 %v1409, 3
        %vm1427 = vcmp.lt.s32.totalorder %v1426, 2
        %vm1428 = vcmp.eq.s32.totalorder %v1426, 0
        %v1429 = vxor.u32 %v1424, 2147483648
        %v1430 = vsel %vm1428, %v1416, %v1429
        %vm1431 = vcmp.eq.s32.totalorder %v1426, 2
        %v1432 = vxor.u32 %v1416, 2147483648
        %v1433 = vsel %vm1431, %v1432, %v1424
        %v1434 = vsel %vm1427, %v1430, %v1433
        %v1435 = vsel %vm1425, nan, %v1434
        %v1436 = vand.u32 2147483647, %v655
        %vm1437 = vcmp.le.f32.partialorder %v1436, 0.7853982
        %vm1438 = vcmp.lt.s32.totalorder %v655, 0
        %v1439 = vand.u32 %v655, 2139095040
        %v1440 = vshrl.u32 %v1439, 23
        %v1441 = vsub.s32 %v1440, 127
        %v1442 = vand.u32 2147483647, %v655
        %v1443 = vand.u32 %v1442, 8388607
        %v1444 = vor.u32 %v1443, 8388608
        %v1445 = vsub.s32 0, %v1444
        %v1446 = vadd.s32 %v1441, 1
        %vm1447 = vcmp.gt.s32.totalorder %v1446, 0
        %v1448 = vsel %vm1447, %v1446, 0
        %v1449 = vshrl.u32 %v1448, 5
        %v1450 = vand.u32 %v1448, 31
        %v1451 = vsub.s32 32, %v1450
        %v1452 = vshrl.u32 683565275, %v1451
        %v1453 = vshll.u32 683565275, %v1450
        %v1454 = vshrl.u32 2475754826, %v1451
        %v1455 = vor.u32 %v1453, %v1454
        %v1456 = vshll.u32 2475754826, %v1450
        %v1457 = vshrl.u32 2131351028, %v1451
        %v1458 = vor.u32 %v1456, %v1457
        %v1459 = vshll.u32 2131351028, %v1450
        %v1460 = vshrl.u32 2102212464, %v1451
        %v1461 = vor.u32 %v1459, %v1460
        %v1462 = vshll.u32 2102212464, %v1450
        %v1463 = vshrl.u32 920167782, %v1451
        %v1464 = vor.u32 %v1462, %v1463
        %v1465 = vshll.u32 920167782, %v1450
        %v1466 = vshrl.u32 1326507024, %v1451
        %v1467 = vor.u32 %v1465, %v1466
        %vm1468 = vcmp.lt.s32.totalorder %v1449, 1
        %vm1469 = vcmp.lt.s32.totalorder %v1449, 2
        %vm1470 = vcmp.lt.s32.totalorder %v1449, 3
        %vm1471 = vcmp.lt.s32.totalorder %v1449, 4
        %v1472 = vsel %vm1468, %v1452, %v1455
        %v1473 = vsel %vm1471, %v1461, 2102212464
        %v1474 = vsel %vm1470, %v1458, %v1473
        %v1475 = vsel %vm1469, %v1472, %v1474
        %v1476 = vsel %vm1468, %v1455, %v1458
        %v1477 = vsel %vm1471, %v1464, 920167782
        %v1478 = vsel %vm1470, %v1461, %v1477
        %v1479 = vsel %vm1469, %v1476, %v1478
        %v1480 = vsel %vm1468, %v1458, %v1461
        %v1481 = vsel %vm1471, %v1467, 1326507024
        %v1482 = vsel %vm1470, %v1464, %v1481
        %v1483 = vsel %vm1469, %v1480, %v1482
        %v1484 = vshll.u32 %v1444, 8
        %v1485 = vand.u32 %v1484, 65535
        %v1486 = vshrl.u32 %v1484, 16
        %v1487 = vand.u32 %v1483, 65535
        %v1488 = vshrl.u32 %v1483, 16
        %v1489 = vmul.u32 %v1485, %v1487
        %v1490 = vmul.u32 %v1485, %v1488
        %v1491 = vmul.u32 %v1486, %v1487
        %v1492 = vmul.u32 %v1486, %v1488
        %v1493 = vshll.u32 %v1490, 16
        %v1494 = vshrl.u32 %v1490, 16
        %v1495 = vshll.u32 %v1491, 16
        %v1496 = vshrl.u32 %v1491, 16
        %vm1497 = vc.u32 %v1489, %v1493
        %v1498 = vsel %vm1497, 1, 0
        %v1499 = vadd.s32 %v1489, %v1493
        %v1500 = vadd.s32 %v1492, %v1498
        %vm1501 = vc.u32 %v1499, %v1495
        %v1502 = vsel %vm1501, 1, 0
        %v1503 = vadd.s32 %v1499, %v1495
        %v1504 = vadd.s32 %v1500, %v1502
        %v1505 = vadd.s32 %v1504, %v1494
        %v1506 = vadd.s32 %v1505, %v1496
        %v1507 = vand.u32 %v1484, 65535
        %v1508 = vshrl.u32 %v1484, 16
        %v1509 = vand.u32 %v1479, 65535
        %v1510 = vshrl.u32 %v1479, 16
        %v1511 = vmul.u32 %v1507, %v1509
        %v1512 = vmul.u32 %v1507, %v1510
        %v1513 = vmul.u32 %v1508, %v1509
        %v1514 = vmul.u32 %v1508, %v1510
        %v1515 = vshll.u32 %v1512, 16
        %v1516 = vshrl.u32 %v1512, 16
        %v1517 = vshll.u32 %v1513, 16
        %v1518 = vshrl.u32 %v1513, 16
        %vm1519 = vc.u32 %v1511, %v1515
        %v1520 = vsel %vm1519, 1, 0
        %v1521 = vadd.s32 %v1511, %v1515
        %v1522 = vadd.s32 %v1514, %v1520
        %vm1523 = vc.u32 %v1521, %v1517
        %v1524 = vsel %vm1523, 1, 0
        %v1525 = vadd.s32 %v1521, %v1517
        %v1526 = vadd.s32 %v1522, %v1524
        %v1527 = vadd.s32 %v1526, %v1516
        %v1528 = vadd.s32 %v1527, %v1518
        %v1529 = vmul.u32 %v1484, %v1475
        %v1530 = vadd.s32 %v1506, %v1525
        %vm1531 = vc.u32 %v1506, %v1525
        %v1532 = vadd.s32 %v1528, 1
        %v1533 = vsel %vm1531, %v1532, %v1528
        %v1534 = vadd.s32 %v1529, %v1533
        %v1535 = vadd.s32 %v1534, 536870912
        %v1536 = vshrl.u32 %v1535, 30
        %v1537 = vshll.u32 %v1536, 30
        %v1538 = vsub.s32 %v1534, %v1537
        %vm1539 = vcmp.lt.s32.totalorder %v1538, 0
        %v1540 = vsub.s32 0, %v1538
        %v1541 = vsel %vm1539, %v1540, %v1538
        %v1542 = vclz %v1541
        %v1543 = vsub.s32 %v1542, 2
        %vm1544 = vcmp.gt.s32.totalorder 0, %v1543
        %v1545 = vsel %vm1544, 0, %v1543
        %v1546 = vsub.s32 32, %v1545
        %v1547 = vshll.u32 %v1538, %v1545
        %v1548 = vshrl.u32 %v1530, %v1546
        %v1549 = vor.u32 %v1547, %v1548
        %v1550 = vsub.s32 4294967266, %v1545
        %v1551 = vadd.s32 %v1550, 127
        %v1552 = vshll.u32 %v1551, 23
        %v1553 = vor.u32 4788187, %v1552
        %v1554 = vand.u32 2147483647, %v1553
        %v1556 = vcvt.s32.f32 %v1549
        %v1557 = vmul.f32 %v1556, %v1554
        %v1558 = vxor.u32 %v1557, 2147483648
        %v1559 = vsel %vm1438, %v1558, %v1557
        %v1560 = vsub.s32 4, %v1536
        %v1561 = vsel %vm1438, %v1560, %v1536
        %v1562 = vsel %vm1437, %v655, %v1559
        %v1563 = vsel %vm1437, 0, %v1561
        %v1564 = vmul.f32 %v1562, %v1562
        %v1565 = vmul.f32 %v1564, -0.001358992
        %v1566 = vadd.f32 %v1565, 0.041655596
        %v1567 = vmul.f32 %v1564, %v1566
        %v1568 = vadd.f32 %v1567, -0.4999988
        %v1569 = vmul.f32 %v1564, %v1568
        %v1570 = vadd.f32 1.0, %v1569
        %v1571 = vmul.f32 %v1562, %v1562
        %v1572 = vmul.f32 %v1571, -0.00019511016
        %v1573 = vadd.f32 %v1572, 0.008332121
        %v1574 = vmul.f32 %v1571, %v1573
        %v1575 = vadd.f32 %v1574, -0.16666654
        %v1576 = vmul.f32 %v1571, %v1575
        %v1577 = vadd.f32 %v1576, 1.0
        %v1578 = vmul.f32 %v1577, %v1562
        %vm1579 = vweird.f32 %v655
        %v1580 = vand.u32 %v1563, 3
        %vm1581 = vcmp.lt.s32.totalorder %v1580, 2
        %vm1582 = vcmp.eq.s32.totalorder %v1580, 0
        %v1583 = vxor.u32 %v1578, 2147483648
        %v1584 = vsel %vm1582, %v1570, %v1583
        %vm1585 = vcmp.eq.s32.totalorder %v1580, 2
        %v1586 = vxor.u32 %v1570, 2147483648
        %v1587 = vsel %vm1585, %v1586, %v1578
        %v1588 = vsel %vm1581, %v1584, %v1587
        %v1589 = vsel %vm1579, nan, %v1588
        %v1590 = vand.u32 2147483647, %v656
        %vm1591 = vcmp.le.f32.partialorder %v1590, 0.7853982
        %vm1592 = vcmp.lt.s32.totalorder %v656, 0
        %v1593 = vand.u32 %v656, 2139095040
        %v1594 = vshrl.u32 %v1593, 23
        %v1595 = vsub.s32 %v1594, 127
        %v1596 = vand.u32 2147483647, %v656
        %v1597 = vand.u32 %v1596, 8388607
        %v1598 = vor.u32 %v1597, 8388608
        %v1599 = vsub.s32 0, %v1598
        %v1600 = vadd.s32 %v1595, 1
        %vm1601 = vcmp.gt.s32.totalorder %v1600, 0
        %v1602 = vsel %vm1601, %v1600, 0
        %v1603 = vshrl.u32 %v1602, 5
        %v1604 = vand.u32 %v1602, 31
        %v1605 = vsub.s32 32, %v1604
        %v1606 = vshrl.u32 683565275, %v1605
        %v1607 = vshll.u32 683565275, %v1604
        %v1608 = vshrl.u32 2475754826, %v1605
        %v1609 = vor.u32 %v1607, %v1608
        %v1610 = vshll.u32 2475754826, %v1604
        %v1611 = vshrl.u32 2131351028, %v1605
        %v1612 = vor.u32 %v1610, %v1611
        %v1613 = vshll.u32 2131351028, %v1604
        %v1614 = vshrl.u32 2102212464, %v1605
        %v1615 = vor.u32 %v1613, %v1614
        %v1616 = vshll.u32 2102212464, %v1604
        %v1617 = vshrl.u32 920167782, %v1605
        %v1618 = vor.u32 %v1616, %v1617
        %v1619 = vshll.u32 920167782, %v1604
        %v1620 = vshrl.u32 1326507024, %v1605
        %v1621 = vor.u32 %v1619, %v1620
        %vm1622 = vcmp.lt.s32.totalorder %v1603, 1
        %vm1623 = vcmp.lt.s32.totalorder %v1603, 2
        %vm1624 = vcmp.lt.s32.totalorder %v1603, 3
        %vm1625 = vcmp.lt.s32.totalorder %v1603, 4
        %v1626 = vsel %vm1622, %v1606, %v1609
        %v1627 = vsel %vm1625, %v1615, 2102212464
        %v1628 = vsel %vm1624, %v1612, %v1627
        %v1629 = vsel %vm1623, %v1626, %v1628
        %v1630 = vsel %vm1622, %v1609, %v1612
        %v1631 = vsel %vm1625, %v1618, 920167782
        %v1632 = vsel %vm1624, %v1615, %v1631
        %v1633 = vsel %vm1623, %v1630, %v1632
        %v1634 = vsel %vm1622, %v1612, %v1615
        %v1635 = vsel %vm1625, %v1621, 1326507024
        %v1636 = vsel %vm1624, %v1618, %v1635
        %v1637 = vsel %vm1623, %v1634, %v1636
        %v1638 = vshll.u32 %v1598, 8
        %v1639 = vand.u32 %v1638, 65535
        %v1640 = vshrl.u32 %v1638, 16
        %v1641 = vand.u32 %v1637, 65535
        %v1642 = vshrl.u32 %v1637, 16
        %v1643 = vmul.u32 %v1639, %v1641
        %v1644 = vmul.u32 %v1639, %v1642
        %v1645 = vmul.u32 %v1640, %v1641
        %v1646 = vmul.u32 %v1640, %v1642
        %v1647 = vshll.u32 %v1644, 16
        %v1648 = vshrl.u32 %v1644, 16
        %v1649 = vshll.u32 %v1645, 16
        %v1650 = vshrl.u32 %v1645, 16
        %vm1651 = vc.u32 %v1643, %v1647
        %v1652 = vsel %vm1651, 1, 0
        %v1653 = vadd.s32 %v1643, %v1647
        %v1654 = vadd.s32 %v1646, %v1652
        %vm1655 = vc.u32 %v1653, %v1649
        %v1656 = vsel %vm1655, 1, 0
        %v1657 = vadd.s32 %v1653, %v1649
        %v1658 = vadd.s32 %v1654, %v1656
        %v1659 = vadd.s32 %v1658, %v1648
        %v1660 = vadd.s32 %v1659, %v1650
        %v1661 = vand.u32 %v1638, 65535
        %v1662 = vshrl.u32 %v1638, 16
        %v1663 = vand.u32 %v1633, 65535
        %v1664 = vshrl.u32 %v1633, 16
        %v1665 = vmul.u32 %v1661, %v1663
        %v1666 = vmul.u32 %v1661, %v1664
        %v1667 = vmul.u32 %v1662, %v1663
        %v1668 = vmul.u32 %v1662, %v1664
        %v1669 = vshll.u32 %v1666, 16
        %v1670 = vshrl.u32 %v1666, 16
        %v1671 = vshll.u32 %v1667, 16
        %v1672 = vshrl.u32 %v1667, 16
        %vm1673 = vc.u32 %v1665, %v1669
        %v1674 = vsel %vm1673, 1, 0
        %v1675 = vadd.s32 %v1665, %v1669
        %v1676 = vadd.s32 %v1668, %v1674
        %vm1677 = vc.u32 %v1675, %v1671
        %v1678 = vsel %vm1677, 1, 0
        %v1679 = vadd.s32 %v1675, %v1671
        %v1680 = vadd.s32 %v1676, %v1678
        %v1681 = vadd.s32 %v1680, %v1670
        %v1682 = vadd.s32 %v1681, %v1672
        %v1683 = vmul.u32 %v1638, %v1629
        %v1684 = vadd.s32 %v1660, %v1679
        %vm1685 = vc.u32 %v1660, %v1679
        %v1686 = vadd.s32 %v1682, 1
        %v1687 = vsel %vm1685, %v1686, %v1682
        %v1688 = vadd.s32 %v1683, %v1687
        %v1689 = vadd.s32 %v1688, 536870912
        %v1690 = vshrl.u32 %v1689, 30
        %v1691 = vshll.u32 %v1690, 30
        %v1692 = vsub.s32 %v1688, %v1691
        %vm1693 = vcmp.lt.s32.totalorder %v1692, 0
        %v1694 = vsub.s32 0, %v1692
        %v1695 = vsel %vm1693, %v1694, %v1692
        %v1696 = vclz %v1695
        %v1697 = vsub.s32 %v1696, 2
        %vm1698 = vcmp.gt.s32.totalorder 0, %v1697
        %v1699 = vsel %vm1698, 0, %v1697
        %v1700 = vsub.s32 32, %v1699
        %v1701 = vshll.u32 %v1692, %v1699
        %v1702 = vshrl.u32 %v1684, %v1700
        %v1703 = vor.u32 %v1701, %v1702
        %v1704 = vsub.s32 4294967266, %v1699
        %v1705 = vadd.s32 %v1704, 127
        %v1706 = vshll.u32 %v1705, 23
        %v1707 = vor.u32 4788187, %v1706
        %v1708 = vand.u32 2147483647, %v1707
        %v1710 = vcvt.s32.f32 %v1703
        %v1711 = vmul.f32 %v1710, %v1708
        %v1712 = vxor.u32 %v1711, 2147483648
        %v1713 = vsel %vm1592, %v1712, %v1711
        %v1714 = vsub.s32 4, %v1690
        %v1715 = vsel %vm1592, %v1714, %v1690
        %v1716 = vsel %vm1591, %v656, %v1713
        %v1717 = vsel %vm1591, 0, %v1715
        %v1718 = vmul.f32 %v1716, %v1716
        %v1719 = vmul.f32 %v1718, -0.001358992
        %v1720 = vadd.f32 %v1719, 0.041655596
        %v1721 = vmul.f32 %v1718, %v1720
        %v1722 = vadd.f32 %v1721, -0.4999988
        %v1723 = vmul.f32 %v1718, %v1722
        %v1724 = vadd.f32 1.0, %v1723
        %v1725 = vmul.f32 %v1716, %v1716
        %v1726 = vmul.f32 %v1725, -0.00019511016
        %v1727 = vadd.f32 %v1726, 0.008332121
        %v1728 = vmul.f32 %v1725, %v1727
        %v1729 = vadd.f32 %v1728, -0.16666654
        %v1730 = vmul.f32 %v1725, %v1729
        %v1731 = vadd.f32 %v1730, 1.0
        %v1732 = vmul.f32 %v1731, %v1716
        %vm1733 = vweird.f32 %v656
        %v1734 = vand.u32 %v1717, 3
        %vm1735 = vcmp.lt.s32.totalorder %v1734, 2
        %vm1736 = vcmp.eq.s32.totalorder %v1734, 0
        %v1737 = vxor.u32 %v1732, 2147483648
        %v1738 = vsel %vm1736, %v1724, %v1737
        %vm1739 = vcmp.eq.s32.totalorder %v1734, 2
        %v1740 = vxor.u32 %v1724, 2147483648
        %v1741 = vsel %vm1739, %v1740, %v1732
        %v1742 = vsel %vm1735, %v1738, %v1741
        %v1743 = vsel %vm1733, nan, %v1742
        %v1744 = vand.u32 2147483647, %v657
        %vm1745 = vcmp.le.f32.partialorder %v1744, 0.7853982
        %vm1746 = vcmp.lt.s32.totalorder %v657, 0
        %v1747 = vand.u32 %v657, 2139095040
        %v1748 = vshrl.u32 %v1747, 23
        %v1749 = vsub.s32 %v1748, 127
        %v1750 = vand.u32 2147483647, %v657
        %v1751 = vand.u32 %v1750, 8388607
        %v1752 = vor.u32 %v1751, 8388608
        %v1753 = vsub.s32 0, %v1752
        %v1754 = vadd.s32 %v1749, 1
        %vm1755 = vcmp.gt.s32.totalorder %v1754, 0
        %v1756 = vsel %vm1755, %v1754, 0
        %v1757 = vshrl.u32 %v1756, 5
        %v1758 = vand.u32 %v1756, 31
        %v1759 = vsub.s32 32, %v1758
        %v1760 = vshrl.u32 683565275, %v1759
        %v1761 = vshll.u32 683565275, %v1758
        %v1762 = vshrl.u32 2475754826, %v1759
        %v1763 = vor.u32 %v1761, %v1762
        %v1764 = vshll.u32 2475754826, %v1758
        %v1765 = vshrl.u32 2131351028, %v1759
        %v1766 = vor.u32 %v1764, %v1765
        %v1767 = vshll.u32 2131351028, %v1758
        %v1768 = vshrl.u32 2102212464, %v1759
        %v1769 = vor.u32 %v1767, %v1768
        %v1770 = vshll.u32 2102212464, %v1758
        %v1771 = vshrl.u32 920167782, %v1759
        %v1772 = vor.u32 %v1770, %v1771
        %v1773 = vshll.u32 920167782, %v1758
        %v1774 = vshrl.u32 1326507024, %v1759
        %v1775 = vor.u32 %v1773, %v1774
        %vm1776 = vcmp.lt.s32.totalorder %v1757, 1
        %vm1777 = vcmp.lt.s32.totalorder %v1757, 2
        %vm1778 = vcmp.lt.s32.totalorder %v1757, 3
        %vm1779 = vcmp.lt.s32.totalorder %v1757, 4
        %v1780 = vsel %vm1776, %v1760, %v1763
        %v1781 = vsel %vm1779, %v1769, 2102212464
        %v1782 = vsel %vm1778, %v1766, %v1781
        %v1783 = vsel %vm1777, %v1780, %v1782
        %v1784 = vsel %vm1776, %v1763, %v1766
        %v1785 = vsel %vm1779, %v1772, 920167782
        %v1786 = vsel %vm1778, %v1769, %v1785
        %v1787 = vsel %vm1777, %v1784, %v1786
        %v1788 = vsel %vm1776, %v1766, %v1769
        %v1789 = vsel %vm1779, %v1775, 1326507024
        %v1790 = vsel %vm1778, %v1772, %v1789
        %v1791 = vsel %vm1777, %v1788, %v1790
        %v1792 = vshll.u32 %v1752, 8
        %v1793 = vand.u32 %v1792, 65535
        %v1794 = vshrl.u32 %v1792, 16
        %v1795 = vand.u32 %v1791, 65535
        %v1796 = vshrl.u32 %v1791, 16
        %v1797 = vmul.u32 %v1793, %v1795
        %v1798 = vmul.u32 %v1793, %v1796
        %v1799 = vmul.u32 %v1794, %v1795
        %v1800 = vmul.u32 %v1794, %v1796
        %v1801 = vshll.u32 %v1798, 16
        %v1802 = vshrl.u32 %v1798, 16
        %v1803 = vshll.u32 %v1799, 16
        %v1804 = vshrl.u32 %v1799, 16
        %vm1805 = vc.u32 %v1797, %v1801
        %v1806 = vsel %vm1805, 1, 0
        %v1807 = vadd.s32 %v1797, %v1801
        %v1808 = vadd.s32 %v1800, %v1806
        %vm1809 = vc.u32 %v1807, %v1803
        %v1810 = vsel %vm1809, 1, 0
        %v1811 = vadd.s32 %v1807, %v1803
        %v1812 = vadd.s32 %v1808, %v1810
        %v1813 = vadd.s32 %v1812, %v1802
        %v1814 = vadd.s32 %v1813, %v1804
        %v1815 = vand.u32 %v1792, 65535
        %v1816 = vshrl.u32 %v1792, 16
        %v1817 = vand.u32 %v1787, 65535
        %v1818 = vshrl.u32 %v1787, 16
        %v1819 = vmul.u32 %v1815, %v1817
        %v1820 = vmul.u32 %v1815, %v1818
        %v1821 = vmul.u32 %v1816, %v1817
        %v1822 = vmul.u32 %v1816, %v1818
        %v1823 = vshll.u32 %v1820, 16
        %v1824 = vshrl.u32 %v1820, 16
        %v1825 = vshll.u32 %v1821, 16
        %v1826 = vshrl.u32 %v1821, 16
        %vm1827 = vc.u32 %v1819, %v1823
        %v1828 = vsel %vm1827, 1, 0
        %v1829 = vadd.s32 %v1819, %v1823
        %v1830 = vadd.s32 %v1822, %v1828
        %vm1831 = vc.u32 %v1829, %v1825
        %v1832 = vsel %vm1831, 1, 0
        %v1833 = vadd.s32 %v1829, %v1825
        %v1834 = vadd.s32 %v1830, %v1832
        %v1835 = vadd.s32 %v1834, %v1824
        %v1836 = vadd.s32 %v1835, %v1826
        %v1837 = vmul.u32 %v1792, %v1783
        %v1838 = vadd.s32 %v1814, %v1833
        %vm1839 = vc.u32 %v1814, %v1833
        %v1840 = vadd.s32 %v1836, 1
        %v1841 = vsel %vm1839, %v1840, %v1836
        %v1842 = vadd.s32 %v1837, %v1841
        %v1843 = vadd.s32 %v1842, 536870912
        %v1844 = vshrl.u32 %v1843, 30
        %v1845 = vshll.u32 %v1844, 30
        %v1846 = vsub.s32 %v1842, %v1845
        %vm1847 = vcmp.lt.s32.totalorder %v1846, 0
        %v1848 = vsub.s32 0, %v1846
        %v1849 = vsel %vm1847, %v1848, %v1846
        %v1850 = vclz %v1849
        %v1851 = vsub.s32 %v1850, 2
        %vm1852 = vcmp.gt.s32.totalorder 0, %v1851
        %v1853 = vsel %vm1852, 0, %v1851
        %v1854 = vsub.s32 32, %v1853
        %v1855 = vshll.u32 %v1846, %v1853
        %v1856 = vshrl.u32 %v1838, %v1854
        %v1857 = vor.u32 %v1855, %v1856
        %v1858 = vsub.s32 4294967266, %v1853
        %v1859 = vadd.s32 %v1858, 127
        %v1860 = vshll.u32 %v1859, 23
        %v1861 = vor.u32 4788187, %v1860
        %v1862 = vand.u32 2147483647, %v1861
        %v1864 = vcvt.s32.f32 %v1857
        %v1865 = vmul.f32 %v1864, %v1862
        %v1866 = vxor.u32 %v1865, 2147483648
        %v1867 = vsel %vm1746, %v1866, %v1865
        %v1868 = vsub.s32 4, %v1844
        %v1869 = vsel %vm1746, %v1868, %v1844
        %v1870 = vsel %vm1745, %v657, %v1867
        %v1871 = vsel %vm1745, 0, %v1869
        %v1872 = vmul.f32 %v1870, %v1870
        %v1873 = vmul.f32 %v1872, -0.001358992
        %v1874 = vadd.f32 %v1873, 0.041655596
        %v1875 = vmul.f32 %v1872, %v1874
        %v1876 = vadd.f32 %v1875, -0.4999988
        %v1877 = vmul.f32 %v1872, %v1876
        %v1878 = vadd.f32 1.0, %v1877
        %v1879 = vmul.f32 %v1870, %v1870
        %v1880 = vmul.f32 %v1879, -0.00019511016
        %v1881 = vadd.f32 %v1880, 0.008332121
        %v1882 = vmul.f32 %v1879, %v1881
        %v1883 = vadd.f32 %v1882, -0.16666654
        %v1884 = vmul.f32 %v1879, %v1883
        %v1885 = vadd.f32 %v1884, 1.0
        %v1886 = vmul.f32 %v1885, %v1870
        %vm1887 = vweird.f32 %v657
        %v1888 = vand.u32 %v1871, 3
        %vm1889 = vcmp.lt.s32.totalorder %v1888, 2
        %vm1890 = vcmp.eq.s32.totalorder %v1888, 0
        %v1891 = vxor.u32 %v1886, 2147483648
        %v1892 = vsel %vm1890, %v1878, %v1891
        %vm1893 = vcmp.eq.s32.totalorder %v1888, 2
        %v1894 = vxor.u32 %v1878, 2147483648
        %v1895 = vsel %vm1893, %v1894, %v1886
        %v1896 = vsel %vm1889, %v1892, %v1895
        %v1897 = vsel %vm1887, nan, %v1896
        %v1898 = vand.u32 2147483647, %v658
        %vm1899 = vcmp.le.f32.partialorder %v1898, 0.7853982
        %vm1900 = vcmp.lt.s32.totalorder %v658, 0
        %v1901 = vand.u32 %v658, 2139095040
        %v1902 = vshrl.u32 %v1901, 23
        %v1903 = vsub.s32 %v1902, 127
        %v1904 = vand.u32 2147483647, %v658
        %v1905 = vand.u32 %v1904, 8388607
        %v1906 = vor.u32 %v1905, 8388608
        %v1907 = vsub.s32 0, %v1906
        %v1908 = vadd.s32 %v1903, 1
        %vm1909 = vcmp.gt.s32.totalorder %v1908, 0
        %v1910 = vsel %vm1909, %v1908, 0
        %v1911 = vshrl.u32 %v1910, 5
        %v1912 = vand.u32 %v1910, 31
        %v1913 = vsub.s32 32, %v1912
        %v1914 = vshrl.u32 683565275, %v1913
        %v1915 = vshll.u32 683565275, %v1912
        %v1916 = vshrl.u32 2475754826, %v1913
        %v1917 = vor.u32 %v1915, %v1916
        %v1918 = vshll.u32 2475754826, %v1912
        %v1919 = vshrl.u32 2131351028, %v1913
        %v1920 = vor.u32 %v1918, %v1919
        %v1921 = vshll.u32 2131351028, %v1912
        %v1922 = vshrl.u32 2102212464, %v1913
        %v1923 = vor.u32 %v1921, %v1922
        %v1924 = vshll.u32 2102212464, %v1912
        %v1925 = vshrl.u32 920167782, %v1913
        %v1926 = vor.u32 %v1924, %v1925
        %v1927 = vshll.u32 920167782, %v1912
        %v1928 = vshrl.u32 1326507024, %v1913
        %v1929 = vor.u32 %v1927, %v1928
        %vm1930 = vcmp.lt.s32.totalorder %v1911, 1
        %vm1931 = vcmp.lt.s32.totalorder %v1911, 2
        %vm1932 = vcmp.lt.s32.totalorder %v1911, 3
        %vm1933 = vcmp.lt.s32.totalorder %v1911, 4
        %v1934 = vsel %vm1930, %v1914, %v1917
        %v1935 = vsel %vm1933, %v1923, 2102212464
        %v1936 = vsel %vm1932, %v1920, %v1935
        %v1937 = vsel %vm1931, %v1934, %v1936
        %v1938 = vsel %vm1930, %v1917, %v1920
        %v1939 = vsel %vm1933, %v1926, 920167782
        %v1940 = vsel %vm1932, %v1923, %v1939
        %v1941 = vsel %vm1931, %v1938, %v1940
        %v1942 = vsel %vm1930, %v1920, %v1923
        %v1943 = vsel %vm1933, %v1929, 1326507024
        %v1944 = vsel %vm1932, %v1926, %v1943
        %v1945 = vsel %vm1931, %v1942, %v1944
        %v1946 = vshll.u32 %v1906, 8
        %v1947 = vand.u32 %v1946, 65535
        %v1948 = vshrl.u32 %v1946, 16
        %v1949 = vand.u32 %v1945, 65535
        %v1950 = vshrl.u32 %v1945, 16
        %v1951 = vmul.u32 %v1947, %v1949
        %v1952 = vmul.u32 %v1947, %v1950
        %v1953 = vmul.u32 %v1948, %v1949
        %v1954 = vmul.u32 %v1948, %v1950
        %v1955 = vshll.u32 %v1952, 16
        %v1956 = vshrl.u32 %v1952, 16
        %v1957 = vshll.u32 %v1953, 16
        %v1958 = vshrl.u32 %v1953, 16
        %vm1959 = vc.u32 %v1951, %v1955
        %v1960 = vsel %vm1959, 1, 0
        %v1961 = vadd.s32 %v1951, %v1955
        %v1962 = vadd.s32 %v1954, %v1960
        %vm1963 = vc.u32 %v1961, %v1957
        %v1964 = vsel %vm1963, 1, 0
        %v1965 = vadd.s32 %v1961, %v1957
        %v1966 = vadd.s32 %v1962, %v1964
        %v1967 = vadd.s32 %v1966, %v1956
        %v1968 = vadd.s32 %v1967, %v1958
        %v1969 = vand.u32 %v1946, 65535
        %v1970 = vshrl.u32 %v1946, 16
        %v1971 = vand.u32 %v1941, 65535
        %v1972 = vshrl.u32 %v1941, 16
        %v1973 = vmul.u32 %v1969, %v1971
        %v1974 = vmul.u32 %v1969, %v1972
        %v1975 = vmul.u32 %v1970, %v1971
        %v1976 = vmul.u32 %v1970, %v1972
        %v1977 = vshll.u32 %v1974, 16
        %v1978 = vshrl.u32 %v1974, 16
        %v1979 = vshll.u32 %v1975, 16
        %v1980 = vshrl.u32 %v1975, 16
        %vm1981 = vc.u32 %v1973, %v1977
        %v1982 = vsel %vm1981, 1, 0
        %v1983 = vadd.s32 %v1973, %v1977
        %v1984 = vadd.s32 %v1976, %v1982
        %vm1985 = vc.u32 %v1983, %v1979
        %v1986 = vsel %vm1985, 1, 0
        %v1987 = vadd.s32 %v1983, %v1979
        %v1988 = vadd.s32 %v1984, %v1986
        %v1989 = vadd.s32 %v1988, %v1978
        %v1990 = vadd.s32 %v1989, %v1980
        %v1991 = vmul.u32 %v1946, %v1937
        %v1992 = vadd.s32 %v1968, %v1987
        %vm1993 = vc.u32 %v1968, %v1987
        %v1994 = vadd.s32 %v1990, 1
        %v1995 = vsel %vm1993, %v1994, %v1990
        %v1996 = vadd.s32 %v1991, %v1995
        %v1997 = vadd.s32 %v1996, 536870912
        %v1998 = vshrl.u32 %v1997, 30
        %v1999 = vshll.u32 %v1998, 30
        %v2000 = vsub.s32 %v1996, %v1999
        %vm2001 = vcmp.lt.s32.totalorder %v2000, 0
        %v2002 = vsub.s32 0, %v2000
        %v2003 = vsel %vm2001, %v2002, %v2000
        %v2004 = vclz %v2003
        %v2005 = vsub.s32 %v2004, 2
        %vm2006 = vcmp.gt.s32.totalorder 0, %v2005
        %v2007 = vsel %vm2006, 0, %v2005
        %v2008 = vsub.s32 32, %v2007
        %v2009 = vshll.u32 %v2000, %v2007
        %v2010 = vshrl.u32 %v1992, %v2008
        %v2011 = vor.u32 %v2009, %v2010
        %v2012 = vsub.s32 4294967266, %v2007
        %v2013 = vadd.s32 %v2012, 127
        %v2014 = vshll.u32 %v2013, 23
        %v2015 = vor.u32 4788187, %v2014
        %v2016 = vand.u32 2147483647, %v2015
        %v2018 = vcvt.s32.f32 %v2011
        %v2019 = vmul.f32 %v2018, %v2016
        %v2020 = vxor.u32 %v2019, 2147483648
        %v2021 = vsel %vm1900, %v2020, %v2019
        %v2022 = vsub.s32 4, %v1998
        %v2023 = vsel %vm1900, %v2022, %v1998
        %v2024 = vsel %vm1899, %v658, %v2021
        %v2025 = vsel %vm1899, 0, %v2023
        %v2026 = vmul.f32 %v2024, %v2024
        %v2027 = vmul.f32 %v2026, -0.001358992
        %v2028 = vadd.f32 %v2027, 0.041655596
        %v2029 = vmul.f32 %v2026, %v2028
        %v2030 = vadd.f32 %v2029, -0.4999988
        %v2031 = vmul.f32 %v2026, %v2030
        %v2032 = vadd.f32 1.0, %v2031
        %v2033 = vmul.f32 %v2024, %v2024
        %v2034 = vmul.f32 %v2033, -0.00019511016
        %v2035 = vadd.f32 %v2034, 0.008332121
        %v2036 = vmul.f32 %v2033, %v2035
        %v2037 = vadd.f32 %v2036, -0.16666654
        %v2038 = vmul.f32 %v2033, %v2037
        %v2039 = vadd.f32 %v2038, 1.0
        %v2040 = vmul.f32 %v2039, %v2024
        %vm2041 = vweird.f32 %v658
        %v2042 = vand.u32 %v2025, 3
        %vm2043 = vcmp.lt.s32.totalorder %v2042, 2
        %vm2044 = vcmp.eq.s32.totalorder %v2042, 0
        %v2045 = vxor.u32 %v2040, 2147483648
        %v2046 = vsel %vm2044, %v2032, %v2045
        %vm2047 = vcmp.eq.s32.totalorder %v2042, 2
        %v2048 = vxor.u32 %v2032, 2147483648
        %v2049 = vsel %vm2047, %v2048, %v2040
        %v2050 = vsel %vm2043, %v2046, %v2049
        %v2051 = vsel %vm2041, nan, %v2050
        %v2052 = vand.u32 2147483647, %v659
        %vm2053 = vcmp.le.f32.partialorder %v2052, 0.7853982
        %vm2054 = vcmp.lt.s32.totalorder %v659, 0
        %v2055 = vand.u32 %v659, 2139095040
        %v2056 = vshrl.u32 %v2055, 23
        %v2057 = vsub.s32 %v2056, 127
        %v2058 = vand.u32 2147483647, %v659
        %v2059 = vand.u32 %v2058, 8388607
        %v2060 = vor.u32 %v2059, 8388608
        %v2061 = vsub.s32 0, %v2060
        %v2062 = vadd.s32 %v2057, 1
        %vm2063 = vcmp.gt.s32.totalorder %v2062, 0
        %v2064 = vsel %vm2063, %v2062, 0
        %v2065 = vshrl.u32 %v2064, 5
        %v2066 = vand.u32 %v2064, 31
        %v2067 = vsub.s32 32, %v2066
        %v2068 = vshrl.u32 683565275, %v2067
        %v2069 = vshll.u32 683565275, %v2066
        %v2070 = vshrl.u32 2475754826, %v2067
        %v2071 = vor.u32 %v2069, %v2070
        %v2072 = vshll.u32 2475754826, %v2066
        %v2073 = vshrl.u32 2131351028, %v2067
        %v2074 = vor.u32 %v2072, %v2073
        %v2075 = vshll.u32 2131351028, %v2066
        %v2076 = vshrl.u32 2102212464, %v2067
        %v2077 = vor.u32 %v2075, %v2076
        %v2078 = vshll.u32 2102212464, %v2066
        %v2079 = vshrl.u32 920167782, %v2067
        %v2080 = vor.u32 %v2078, %v2079
        %v2081 = vshll.u32 920167782, %v2066
        %v2082 = vshrl.u32 1326507024, %v2067
        %v2083 = vor.u32 %v2081, %v2082
        %vm2084 = vcmp.lt.s32.totalorder %v2065, 1
        %vm2085 = vcmp.lt.s32.totalorder %v2065, 2
        %vm2086 = vcmp.lt.s32.totalorder %v2065, 3
        %vm2087 = vcmp.lt.s32.totalorder %v2065, 4
        %v2088 = vsel %vm2084, %v2068, %v2071
        %v2089 = vsel %vm2087, %v2077, 2102212464
        %v2090 = vsel %vm2086, %v2074, %v2089
        %v2091 = vsel %vm2085, %v2088, %v2090
        %v2092 = vsel %vm2084, %v2071, %v2074
        %v2093 = vsel %vm2087, %v2080, 920167782
        %v2094 = vsel %vm2086, %v2077, %v2093
        %v2095 = vsel %vm2085, %v2092, %v2094
        %v2096 = vsel %vm2084, %v2074, %v2077
        %v2097 = vsel %vm2087, %v2083, 1326507024
        %v2098 = vsel %vm2086, %v2080, %v2097
        %v2099 = vsel %vm2085, %v2096, %v2098
        %v2100 = vshll.u32 %v2060, 8
        %v2101 = vand.u32 %v2100, 65535
        %v2102 = vshrl.u32 %v2100, 16
        %v2103 = vand.u32 %v2099, 65535
        %v2104 = vshrl.u32 %v2099, 16
        %v2105 = vmul.u32 %v2101, %v2103
        %v2106 = vmul.u32 %v2101, %v2104
        %v2107 = vmul.u32 %v2102, %v2103
        %v2108 = vmul.u32 %v2102, %v2104
        %v2109 = vshll.u32 %v2106, 16
        %v2110 = vshrl.u32 %v2106, 16
        %v2111 = vshll.u32 %v2107, 16
        %v2112 = vshrl.u32 %v2107, 16
        %vm2113 = vc.u32 %v2105, %v2109
        %v2114 = vsel %vm2113, 1, 0
        %v2115 = vadd.s32 %v2105, %v2109
        %v2116 = vadd.s32 %v2108, %v2114
        %vm2117 = vc.u32 %v2115, %v2111
        %v2118 = vsel %vm2117, 1, 0
        %v2119 = vadd.s32 %v2115, %v2111
        %v2120 = vadd.s32 %v2116, %v2118
        %v2121 = vadd.s32 %v2120, %v2110
        %v2122 = vadd.s32 %v2121, %v2112
        %v2123 = vand.u32 %v2100, 65535
        %v2124 = vshrl.u32 %v2100, 16
        %v2125 = vand.u32 %v2095, 65535
        %v2126 = vshrl.u32 %v2095, 16
        %v2127 = vmul.u32 %v2123, %v2125
        %v2128 = vmul.u32 %v2123, %v2126
        %v2129 = vmul.u32 %v2124, %v2125
        %v2130 = vmul.u32 %v2124, %v2126
        %v2131 = vshll.u32 %v2128, 16
        %v2132 = vshrl.u32 %v2128, 16
        %v2133 = vshll.u32 %v2129, 16
        %v2134 = vshrl.u32 %v2129, 16
        %vm2135 = vc.u32 %v2127, %v2131
        %v2136 = vsel %vm2135, 1, 0
        %v2137 = vadd.s32 %v2127, %v2131
        %v2138 = vadd.s32 %v2130, %v2136
        %vm2139 = vc.u32 %v2137, %v2133
        %v2140 = vsel %vm2139, 1, 0
        %v2141 = vadd.s32 %v2137, %v2133
        %v2142 = vadd.s32 %v2138, %v2140
        %v2143 = vadd.s32 %v2142, %v2132
        %v2144 = vadd.s32 %v2143, %v2134
        %v2145 = vmul.u32 %v2100, %v2091
        %v2146 = vadd.s32 %v2122, %v2141
        %vm2147 = vc.u32 %v2122, %v2141
        %v2148 = vadd.s32 %v2144, 1
        %v2149 = vsel %vm2147, %v2148, %v2144
        %v2150 = vadd.s32 %v2145, %v2149
        %v2151 = vadd.s32 %v2150, 536870912
        %v2152 = vshrl.u32 %v2151, 30
        %v2153 = vshll.u32 %v2152, 30
        %v2154 = vsub.s32 %v2150, %v2153
        %vm2155 = vcmp.lt.s32.totalorder %v2154, 0
        %v2156 = vsub.s32 0, %v2154
        %v2157 = vsel %vm2155, %v2156, %v2154
        %v2158 = vclz %v2157
        %v2159 = vsub.s32 %v2158, 2
        %vm2160 = vcmp.gt.s32.totalorder 0, %v2159
        %v2161 = vsel %vm2160, 0, %v2159
        %v2162 = vsub.s32 32, %v2161
        %v2163 = vshll.u32 %v2154, %v2161
        %v2164 = vshrl.u32 %v2146, %v2162
        %v2165 = vor.u32 %v2163, %v2164
        %v2166 = vsub.s32 4294967266, %v2161
        %v2167 = vadd.s32 %v2166, 127
        %v2168 = vshll.u32 %v2167, 23
        %v2169 = vor.u32 4788187, %v2168
        %v2170 = vand.u32 2147483647, %v2169
        %v2172 = vcvt.s32.f32 %v2165
        %v2173 = vmul.f32 %v2172, %v2170
        %v2174 = vxor.u32 %v2173, 2147483648
        %v2175 = vsel %vm2054, %v2174, %v2173
        %v2176 = vsub.s32 4, %v2152
        %v2177 = vsel %vm2054, %v2176, %v2152
        %v2178 = vsel %vm2053, %v659, %v2175
        %v2179 = vsel %vm2053, 0, %v2177
        %v2180 = vmul.f32 %v2178, %v2178
        %v2181 = vmul.f32 %v2180, -0.001358992
        %v2182 = vadd.f32 %v2181, 0.041655596
        %v2183 = vmul.f32 %v2180, %v2182
        %v2184 = vadd.f32 %v2183, -0.4999988
        %v2185 = vmul.f32 %v2180, %v2184
        %v2186 = vadd.f32 1.0, %v2185
        %v2187 = vmul.f32 %v2178, %v2178
        %v2188 = vmul.f32 %v2187, -0.00019511016
        %v2189 = vadd.f32 %v2188, 0.008332121
        %v2190 = vmul.f32 %v2187, %v2189
        %v2191 = vadd.f32 %v2190, -0.16666654
        %v2192 = vmul.f32 %v2187, %v2191
        %v2193 = vadd.f32 %v2192, 1.0
        %v2194 = vmul.f32 %v2193, %v2178
        %vm2195 = vweird.f32 %v659
        %v2196 = vand.u32 %v2179, 3
        %vm2197 = vcmp.lt.s32.totalorder %v2196, 2
        %vm2198 = vcmp.eq.s32.totalorder %v2196, 0
        %v2199 = vxor.u32 %v2194, 2147483648
        %v2200 = vsel %vm2198, %v2186, %v2199
        %vm2201 = vcmp.eq.s32.totalorder %v2196, 2
        %v2202 = vxor.u32 %v2186, 2147483648
        %v2203 = vsel %vm2201, %v2202, %v2194
        %v2204 = vsel %vm2197, %v2200, %v2203
        %v2205 = vsel %vm2195, nan, %v2204
        %v2206 = vand.u32 2147483647, %v660
        %vm2207 = vcmp.le.f32.partialorder %v2206, 0.7853982
        %vm2208 = vcmp.lt.s32.totalorder %v660, 0
        %v2209 = vand.u32 %v660, 2139095040
        %v2210 = vshrl.u32 %v2209, 23
        %v2211 = vsub.s32 %v2210, 127
        %v2212 = vand.u32 2147483647, %v660
        %v2213 = vand.u32 %v2212, 8388607
        %v2214 = vor.u32 %v2213, 8388608
        %v2215 = vsub.s32 0, %v2214
        %v2216 = vadd.s32 %v2211, 1
        %vm2217 = vcmp.gt.s32.totalorder %v2216, 0
        %v2218 = vsel %vm2217, %v2216, 0
        %v2219 = vshrl.u32 %v2218, 5
        %v2220 = vand.u32 %v2218, 31
        %v2221 = vsub.s32 32, %v2220
        %v2222 = vshrl.u32 683565275, %v2221
        %v2223 = vshll.u32 683565275, %v2220
        %v2224 = vshrl.u32 2475754826, %v2221
        %v2225 = vor.u32 %v2223, %v2224
        %v2226 = vshll.u32 2475754826, %v2220
        %v2227 = vshrl.u32 2131351028, %v2221
        %v2228 = vor.u32 %v2226, %v2227
        %v2229 = vshll.u32 2131351028, %v2220
        %v2230 = vshrl.u32 2102212464, %v2221
        %v2231 = vor.u32 %v2229, %v2230
        %v2232 = vshll.u32 2102212464, %v2220
        %v2233 = vshrl.u32 920167782, %v2221
        %v2234 = vor.u32 %v2232, %v2233
        %v2235 = vshll.u32 920167782, %v2220
        %v2236 = vshrl.u32 1326507024, %v2221
        %v2237 = vor.u32 %v2235, %v2236
        %vm2238 = vcmp.lt.s32.totalorder %v2219, 1
        %vm2239 = vcmp.lt.s32.totalorder %v2219, 2
        %vm2240 = vcmp.lt.s32.totalorder %v2219, 3
        %vm2241 = vcmp.lt.s32.totalorder %v2219, 4
        %v2242 = vsel %vm2238, %v2222, %v2225
        %v2243 = vsel %vm2241, %v2231, 2102212464
        %v2244 = vsel %vm2240, %v2228, %v2243
        %v2245 = vsel %vm2239, %v2242, %v2244
        %v2246 = vsel %vm2238, %v2225, %v2228
        %v2247 = vsel %vm2241, %v2234, 920167782
        %v2248 = vsel %vm2240, %v2231, %v2247
        %v2249 = vsel %vm2239, %v2246, %v2248
        %v2250 = vsel %vm2238, %v2228, %v2231
        %v2251 = vsel %vm2241, %v2237, 1326507024
        %v2252 = vsel %vm2240, %v2234, %v2251
        %v2253 = vsel %vm2239, %v2250, %v2252
        %v2254 = vshll.u32 %v2214, 8
        %v2255 = vand.u32 %v2254, 65535
        %v2256 = vshrl.u32 %v2254, 16
        %v2257 = vand.u32 %v2253, 65535
        %v2258 = vshrl.u32 %v2253, 16
        %v2259 = vmul.u32 %v2255, %v2257
        %v2260 = vmul.u32 %v2255, %v2258
        %v2261 = vmul.u32 %v2256, %v2257
        %v2262 = vmul.u32 %v2256, %v2258
        %v2263 = vshll.u32 %v2260, 16
        %v2264 = vshrl.u32 %v2260, 16
        %v2265 = vshll.u32 %v2261, 16
        %v2266 = vshrl.u32 %v2261, 16
        %vm2267 = vc.u32 %v2259, %v2263
        %v2268 = vsel %vm2267, 1, 0
        %v2269 = vadd.s32 %v2259, %v2263
        %v2270 = vadd.s32 %v2262, %v2268
        %vm2271 = vc.u32 %v2269, %v2265
        %v2272 = vsel %vm2271, 1, 0
        %v2273 = vadd.s32 %v2269, %v2265
        %v2274 = vadd.s32 %v2270, %v2272
        %v2275 = vadd.s32 %v2274, %v2264
        %v2276 = vadd.s32 %v2275, %v2266
        %v2277 = vand.u32 %v2254, 65535
        %v2278 = vshrl.u32 %v2254, 16
        %v2279 = vand.u32 %v2249, 65535
        %v2280 = vshrl.u32 %v2249, 16
        %v2281 = vmul.u32 %v2277, %v2279
        %v2282 = vmul.u32 %v2277, %v2280
        %v2283 = vmul.u32 %v2278, %v2279
        %v2284 = vmul.u32 %v2278, %v2280
        %v2285 = vshll.u32 %v2282, 16
        %v2286 = vshrl.u32 %v2282, 16
        %v2287 = vshll.u32 %v2283, 16
        %v2288 = vshrl.u32 %v2283, 16
        %vm2289 = vc.u32 %v2281, %v2285
        %v2290 = vsel %vm2289, 1, 0
        %v2291 = vadd.s32 %v2281, %v2285
        %v2292 = vadd.s32 %v2284, %v2290
        %vm2293 = vc.u32 %v2291, %v2287
        %v2294 = vsel %vm2293, 1, 0
        %v2295 = vadd.s32 %v2291, %v2287
        %v2296 = vadd.s32 %v2292, %v2294
        %v2297 = vadd.s32 %v2296, %v2286
        %v2298 = vadd.s32 %v2297, %v2288
        %v2299 = vmul.u32 %v2254, %v2245
        %v2300 = vadd.s32 %v2276, %v2295
        %vm2301 = vc.u32 %v2276, %v2295
        %v2302 = vadd.s32 %v2298, 1
        %v2303 = vsel %vm2301, %v2302, %v2298
        %v2304 = vadd.s32 %v2299, %v2303
        %v2305 = vadd.s32 %v2304, 536870912
        %v2306 = vshrl.u32 %v2305, 30
        %v2307 = vshll.u32 %v2306, 30
        %v2308 = vsub.s32 %v2304, %v2307
        %vm2309 = vcmp.lt.s32.totalorder %v2308, 0
        %v2310 = vsub.s32 0, %v2308
        %v2311 = vsel %vm2309, %v2310, %v2308
        %v2312 = vclz %v2311
        %v2313 = vsub.s32 %v2312, 2
        %vm2314 = vcmp.gt.s32.totalorder 0, %v2313
        %v2315 = vsel %vm2314, 0, %v2313
        %v2316 = vsub.s32 32, %v2315
        %v2317 = vshll.u32 %v2308, %v2315
        %v2318 = vshrl.u32 %v2300, %v2316
        %v2319 = vor.u32 %v2317, %v2318
        %v2320 = vsub.s32 4294967266, %v2315
        %v2321 = vadd.s32 %v2320, 127
        %v2322 = vshll.u32 %v2321, 23
        %v2323 = vor.u32 4788187, %v2322
        %v2324 = vand.u32 2147483647, %v2323
        %v2326 = vcvt.s32.f32 %v2319
        %v2327 = vmul.f32 %v2326, %v2324
        %v2328 = vxor.u32 %v2327, 2147483648
        %v2329 = vsel %vm2208, %v2328, %v2327
        %v2330 = vsub.s32 4, %v2306
        %v2331 = vsel %vm2208, %v2330, %v2306
        %v2332 = vsel %vm2207, %v660, %v2329
        %v2333 = vsel %vm2207, 0, %v2331
        %v2334 = vmul.f32 %v2332, %v2332
        %v2335 = vmul.f32 %v2334, -0.001358992
        %v2336 = vadd.f32 %v2335, 0.041655596
        %v2337 = vmul.f32 %v2334, %v2336
        %v2338 = vadd.f32 %v2337, -0.4999988
        %v2339 = vmul.f32 %v2334, %v2338
        %v2340 = vadd.f32 1.0, %v2339
        %v2341 = vmul.f32 %v2332, %v2332
        %v2342 = vmul.f32 %v2341, -0.00019511016
        %v2343 = vadd.f32 %v2342, 0.008332121
        %v2344 = vmul.f32 %v2341, %v2343
        %v2345 = vadd.f32 %v2344, -0.16666654
        %v2346 = vmul.f32 %v2341, %v2345
        %v2347 = vadd.f32 %v2346, 1.0
        %v2348 = vmul.f32 %v2347, %v2332
        %vm2349 = vweird.f32 %v660
        %v2350 = vand.u32 %v2333, 3
        %vm2351 = vcmp.lt.s32.totalorder %v2350, 2
        %vm2352 = vcmp.eq.s32.totalorder %v2350, 0
        %v2353 = vxor.u32 %v2348, 2147483648
        %v2354 = vsel %vm2352, %v2340, %v2353
        %vm2355 = vcmp.eq.s32.totalorder %v2350, 2
        %v2356 = vxor.u32 %v2340, 2147483648
        %v2357 = vsel %vm2355, %v2356, %v2348
        %v2358 = vsel %vm2351, %v2354, %v2357
        %v2359 = vsel %vm2349, nan, %v2358
        %v2360 = vand.u32 2147483647, %v661
        %vm2361 = vcmp.le.f32.partialorder %v2360, 0.7853982
        %vm2362 = vcmp.lt.s32.totalorder %v661, 0
        %v2363 = vand.u32 %v661, 2139095040
        %v2364 = vshrl.u32 %v2363, 23
        %v2365 = vsub.s32 %v2364, 127
        %v2366 = vand.u32 2147483647, %v661
        %v2367 = vand.u32 %v2366, 8388607
        %v2368 = vor.u32 %v2367, 8388608
        %v2369 = vsub.s32 0, %v2368
        %v2370 = vadd.s32 %v2365, 1
        %vm2371 = vcmp.gt.s32.totalorder %v2370, 0
        %v2372 = vsel %vm2371, %v2370, 0
        %v2373 = vshrl.u32 %v2372, 5
        %v2374 = vand.u32 %v2372, 31
        %v2375 = vsub.s32 32, %v2374
        %v2376 = vshrl.u32 683565275, %v2375
        %v2377 = vshll.u32 683565275, %v2374
        %v2378 = vshrl.u32 2475754826, %v2375
        %v2379 = vor.u32 %v2377, %v2378
        %v2380 = vshll.u32 2475754826, %v2374
        %v2381 = vshrl.u32 2131351028, %v2375
        %v2382 = vor.u32 %v2380, %v2381
        %v2383 = vshll.u32 2131351028, %v2374
        %v2384 = vshrl.u32 2102212464, %v2375
        %v2385 = vor.u32 %v2383, %v2384
        %v2386 = vshll.u32 2102212464, %v2374
        %v2387 = vshrl.u32 920167782, %v2375
        %v2388 = vor.u32 %v2386, %v2387
        %v2389 = vshll.u32 920167782, %v2374
        %v2390 = vshrl.u32 1326507024, %v2375
        %v2391 = vor.u32 %v2389, %v2390
        %vm2392 = vcmp.lt.s32.totalorder %v2373, 1
        %vm2393 = vcmp.lt.s32.totalorder %v2373, 2
        %vm2394 = vcmp.lt.s32.totalorder %v2373, 3
        %vm2395 = vcmp.lt.s32.totalorder %v2373, 4
        %v2396 = vsel %vm2392, %v2376, %v2379
        %v2397 = vsel %vm2395, %v2385, 2102212464
        %v2398 = vsel %vm2394, %v2382, %v2397
        %v2399 = vsel %vm2393, %v2396, %v2398
        %v2400 = vsel %vm2392, %v2379, %v2382
        %v2401 = vsel %vm2395, %v2388, 920167782
        %v2402 = vsel %vm2394, %v2385, %v2401
        %v2403 = vsel %vm2393, %v2400, %v2402
        %v2404 = vsel %vm2392, %v2382, %v2385
        %v2405 = vsel %vm2395, %v2391, 1326507024
        %v2406 = vsel %vm2394, %v2388, %v2405
        %v2407 = vsel %vm2393, %v2404, %v2406
        %v2408 = vshll.u32 %v2368, 8
        %v2409 = vand.u32 %v2408, 65535
        %v2410 = vshrl.u32 %v2408, 16
        %v2411 = vand.u32 %v2407, 65535
        %v2412 = vshrl.u32 %v2407, 16
        %v2413 = vmul.u32 %v2409, %v2411
        %v2414 = vmul.u32 %v2409, %v2412
        %v2415 = vmul.u32 %v2410, %v2411
        %v2416 = vmul.u32 %v2410, %v2412
        %v2417 = vshll.u32 %v2414, 16
        %v2418 = vshrl.u32 %v2414, 16
        %v2419 = vshll.u32 %v2415, 16
        %v2420 = vshrl.u32 %v2415, 16
        %vm2421 = vc.u32 %v2413, %v2417
        %v2422 = vsel %vm2421, 1, 0
        %v2423 = vadd.s32 %v2413, %v2417
        %v2424 = vadd.s32 %v2416, %v2422
        %vm2425 = vc.u32 %v2423, %v2419
        %v2426 = vsel %vm2425, 1, 0
        %v2427 = vadd.s32 %v2423, %v2419
        %v2428 = vadd.s32 %v2424, %v2426
        %v2429 = vadd.s32 %v2428, %v2418
        %v2430 = vadd.s32 %v2429, %v2420
        %v2431 = vand.u32 %v2408, 65535
        %v2432 = vshrl.u32 %v2408, 16
        %v2433 = vand.u32 %v2403, 65535
        %v2434 = vshrl.u32 %v2403, 16
        %v2435 = vmul.u32 %v2431, %v2433
        %v2436 = vmul.u32 %v2431, %v2434
        %v2437 = vmul.u32 %v2432, %v2433
        %v2438 = vmul.u32 %v2432, %v2434
        %v2439 = vshll.u32 %v2436, 16
        %v2440 = vshrl.u32 %v2436, 16
        %v2441 = vshll.u32 %v2437, 16
        %v2442 = vshrl.u32 %v2437, 16
        %vm2443 = vc.u32 %v2435, %v2439
        %v2444 = vsel %vm2443, 1, 0
        %v2445 = vadd.s32 %v2435, %v2439
        %v2446 = vadd.s32 %v2438, %v2444
        %vm2447 = vc.u32 %v2445, %v2441
        %v2448 = vsel %vm2447, 1, 0
        %v2449 = vadd.s32 %v2445, %v2441
        %v2450 = vadd.s32 %v2446, %v2448
        %v2451 = vadd.s32 %v2450, %v2440
        %v2452 = vadd.s32 %v2451, %v2442
        %v2453 = vmul.u32 %v2408, %v2399
        %v2454 = vadd.s32 %v2430, %v2449
        %vm2455 = vc.u32 %v2430, %v2449
        %v2456 = vadd.s32 %v2452, 1
        %v2457 = vsel %vm2455, %v2456, %v2452
        %v2458 = vadd.s32 %v2453, %v2457
        %v2459 = vadd.s32 %v2458, 536870912
        %v2460 = vshrl.u32 %v2459, 30
        %v2461 = vshll.u32 %v2460, 30
        %v2462 = vsub.s32 %v2458, %v2461
        %vm2463 = vcmp.lt.s32.totalorder %v2462, 0
        %v2464 = vsub.s32 0, %v2462
        %v2465 = vsel %vm2463, %v2464, %v2462
        %v2466 = vclz %v2465
        %v2467 = vsub.s32 %v2466, 2
        %vm2468 = vcmp.gt.s32.totalorder 0, %v2467
        %v2469 = vsel %vm2468, 0, %v2467
        %v2470 = vsub.s32 32, %v2469
        %v2471 = vshll.u32 %v2462, %v2469
        %v2472 = vshrl.u32 %v2454, %v2470
        %v2473 = vor.u32 %v2471, %v2472
        %v2474 = vsub.s32 4294967266, %v2469
        %v2475 = vadd.s32 %v2474, 127
        %v2476 = vshll.u32 %v2475, 23
        %v2477 = vor.u32 4788187, %v2476
        %v2478 = vand.u32 2147483647, %v2477
        %v2480 = vcvt.s32.f32 %v2473
        %v2481 = vmul.f32 %v2480, %v2478
        %v2482 = vxor.u32 %v2481, 2147483648
        %v2483 = vsel %vm2362, %v2482, %v2481
        %v2484 = vsub.s32 4, %v2460
        %v2485 = vsel %vm2362, %v2484, %v2460
        %v2486 = vsel %vm2361, %v661, %v2483
        %v2487 = vsel %vm2361, 0, %v2485
        %v2488 = vmul.f32 %v2486, %v2486
        %v2489 = vmul.f32 %v2488, -0.001358992
        %v2490 = vadd.f32 %v2489, 0.041655596
        %v2491 = vmul.f32 %v2488, %v2490
        %v2492 = vadd.f32 %v2491, -0.4999988
        %v2493 = vmul.f32 %v2488, %v2492
        %v2494 = vadd.f32 1.0, %v2493
        %v2495 = vmul.f32 %v2486, %v2486
        %v2496 = vmul.f32 %v2495, -0.00019511016
        %v2497 = vadd.f32 %v2496, 0.008332121
        %v2498 = vmul.f32 %v2495, %v2497
        %v2499 = vadd.f32 %v2498, -0.16666654
        %v2500 = vmul.f32 %v2495, %v2499
        %v2501 = vadd.f32 %v2500, 1.0
        %v2502 = vmul.f32 %v2501, %v2486
        %vm2503 = vweird.f32 %v661
        %v2504 = vand.u32 %v2487, 3
        %vm2505 = vcmp.lt.s32.totalorder %v2504, 2
        %vm2506 = vcmp.eq.s32.totalorder %v2504, 0
        %v2507 = vxor.u32 %v2502, 2147483648
        %v2508 = vsel %vm2506, %v2494, %v2507
        %vm2509 = vcmp.eq.s32.totalorder %v2504, 2
        %v2510 = vxor.u32 %v2494, 2147483648
        %v2511 = vsel %vm2509, %v2510, %v2502
        %v2512 = vsel %vm2505, %v2508, %v2511
        %v2513 = vsel %vm2503, nan, %v2512
        %v2514 = vand.u32 2147483647, %v662
        %vm2515 = vcmp.le.f32.partialorder %v2514, 0.7853982
        %vm2516 = vcmp.lt.s32.totalorder %v662, 0
        %v2517 = vand.u32 %v662, 2139095040
        %v2518 = vshrl.u32 %v2517, 23
        %v2519 = vsub.s32 %v2518, 127
        %v2520 = vand.u32 2147483647, %v662
        %v2521 = vand.u32 %v2520, 8388607
        %v2522 = vor.u32 %v2521, 8388608
        %v2523 = vsub.s32 0, %v2522
        %v2524 = vadd.s32 %v2519, 1
        %vm2525 = vcmp.gt.s32.totalorder %v2524, 0
        %v2526 = vsel %vm2525, %v2524, 0
        %v2527 = vshrl.u32 %v2526, 5
        %v2528 = vand.u32 %v2526, 31
        %v2529 = vsub.s32 32, %v2528
        %v2530 = vshrl.u32 683565275, %v2529
        %v2531 = vshll.u32 683565275, %v2528
        %v2532 = vshrl.u32 2475754826, %v2529
        %v2533 = vor.u32 %v2531, %v2532
        %v2534 = vshll.u32 2475754826, %v2528
        %v2535 = vshrl.u32 2131351028, %v2529
        %v2536 = vor.u32 %v2534, %v2535
        %v2537 = vshll.u32 2131351028, %v2528
        %v2538 = vshrl.u32 2102212464, %v2529
        %v2539 = vor.u32 %v2537, %v2538
        %v2540 = vshll.u32 2102212464, %v2528
        %v2541 = vshrl.u32 920167782, %v2529
        %v2542 = vor.u32 %v2540, %v2541
        %v2543 = vshll.u32 920167782, %v2528
        %v2544 = vshrl.u32 1326507024, %v2529
        %v2545 = vor.u32 %v2543, %v2544
        %vm2546 = vcmp.lt.s32.totalorder %v2527, 1
        %vm2547 = vcmp.lt.s32.totalorder %v2527, 2
        %vm2548 = vcmp.lt.s32.totalorder %v2527, 3
        %vm2549 = vcmp.lt.s32.totalorder %v2527, 4
        %v2550 = vsel %vm2546, %v2530, %v2533
        %v2551 = vsel %vm2549, %v2539, 2102212464
        %v2552 = vsel %vm2548, %v2536, %v2551
        %v2553 = vsel %vm2547, %v2550, %v2552
        %v2554 = vsel %vm2546, %v2533, %v2536
        %v2555 = vsel %vm2549, %v2542, 920167782
        %v2556 = vsel %vm2548, %v2539, %v2555
        %v2557 = vsel %vm2547, %v2554, %v2556
        %v2558 = vsel %vm2546, %v2536, %v2539
        %v2559 = vsel %vm2549, %v2545, 1326507024
        %v2560 = vsel %vm2548, %v2542, %v2559
        %v2561 = vsel %vm2547, %v2558, %v2560
        %v2562 = vshll.u32 %v2522, 8
        %v2563 = vand.u32 %v2562, 65535
        %v2564 = vshrl.u32 %v2562, 16
        %v2565 = vand.u32 %v2561, 65535
        %v2566 = vshrl.u32 %v2561, 16
        %v2567 = vmul.u32 %v2563, %v2565
        %v2568 = vmul.u32 %v2563, %v2566
        %v2569 = vmul.u32 %v2564, %v2565
        %v2570 = vmul.u32 %v2564, %v2566
        %v2571 = vshll.u32 %v2568, 16
        %v2572 = vshrl.u32 %v2568, 16
        %v2573 = vshll.u32 %v2569, 16
        %v2574 = vshrl.u32 %v2569, 16
        %vm2575 = vc.u32 %v2567, %v2571
        %v2576 = vsel %vm2575, 1, 0
        %v2577 = vadd.s32 %v2567, %v2571
        %v2578 = vadd.s32 %v2570, %v2576
        %vm2579 = vc.u32 %v2577, %v2573
        %v2580 = vsel %vm2579, 1, 0
        %v2581 = vadd.s32 %v2577, %v2573
        %v2582 = vadd.s32 %v2578, %v2580
        %v2583 = vadd.s32 %v2582, %v2572
        %v2584 = vadd.s32 %v2583, %v2574
        %v2585 = vand.u32 %v2562, 65535
        %v2586 = vshrl.u32 %v2562, 16
        %v2587 = vand.u32 %v2557, 65535
        %v2588 = vshrl.u32 %v2557, 16
        %v2589 = vmul.u32 %v2585, %v2587
        %v2590 = vmul.u32 %v2585, %v2588
        %v2591 = vmul.u32 %v2586, %v2587
        %v2592 = vmul.u32 %v2586, %v2588
        %v2593 = vshll.u32 %v2590, 16
        %v2594 = vshrl.u32 %v2590, 16
        %v2595 = vshll.u32 %v2591, 16
        %v2596 = vshrl.u32 %v2591, 16
        %vm2597 = vc.u32 %v2589, %v2593
        %v2598 = vsel %vm2597, 1, 0
        %v2599 = vadd.s32 %v2589, %v2593
        %v2600 = vadd.s32 %v2592, %v2598
        %vm2601 = vc.u32 %v2599, %v2595
        %v2602 = vsel %vm2601, 1, 0
        %v2603 = vadd.s32 %v2599, %v2595
        %v2604 = vadd.s32 %v2600, %v2602
        %v2605 = vadd.s32 %v2604, %v2594
        %v2606 = vadd.s32 %v2605, %v2596
        %v2607 = vmul.u32 %v2562, %v2553
        %v2608 = vadd.s32 %v2584, %v2603
        %vm2609 = vc.u32 %v2584, %v2603
        %v2610 = vadd.s32 %v2606, 1
        %v2611 = vsel %vm2609, %v2610, %v2606
        %v2612 = vadd.s32 %v2607, %v2611
        %v2613 = vadd.s32 %v2612, 536870912
        %v2614 = vshrl.u32 %v2613, 30
        %v2615 = vshll.u32 %v2614, 30
        %v2616 = vsub.s32 %v2612, %v2615
        %vm2617 = vcmp.lt.s32.totalorder %v2616, 0
        %v2618 = vsub.s32 0, %v2616
        %v2619 = vsel %vm2617, %v2618, %v2616
        %v2620 = vclz %v2619
        %v2621 = vsub.s32 %v2620, 2
        %vm2622 = vcmp.gt.s32.totalorder 0, %v2621
        %v2623 = vsel %vm2622, 0, %v2621
        %v2624 = vsub.s32 32, %v2623
        %v2625 = vshll.u32 %v2616, %v2623
        %v2626 = vshrl.u32 %v2608, %v2624
        %v2627 = vor.u32 %v2625, %v2626
        %v2628 = vsub.s32 4294967266, %v2623
        %v2629 = vadd.s32 %v2628, 127
        %v2630 = vshll.u32 %v2629, 23
        %v2631 = vor.u32 4788187, %v2630
        %v2632 = vand.u32 2147483647, %v2631
        %v2634 = vcvt.s32.f32 %v2627
        %v2635 = vmul.f32 %v2634, %v2632
        %v2636 = vxor.u32 %v2635, 2147483648
        %v2637 = vsel %vm2516, %v2636, %v2635
        %v2638 = vsub.s32 4, %v2614
        %v2639 = vsel %vm2516, %v2638, %v2614
        %v2640 = vsel %vm2515, %v662, %v2637
        %v2641 = vsel %vm2515, 0, %v2639
        %v2642 = vmul.f32 %v2640, %v2640
        %v2643 = vmul.f32 %v2642, -0.001358992
        %v2644 = vadd.f32 %v2643, 0.041655596
        %v2645 = vmul.f32 %v2642, %v2644
        %v2646 = vadd.f32 %v2645, -0.4999988
        %v2647 = vmul.f32 %v2642, %v2646
        %v2648 = vadd.f32 1.0, %v2647
        %v2649 = vmul.f32 %v2640, %v2640
        %v2650 = vmul.f32 %v2649, -0.00019511016
        %v2651 = vadd.f32 %v2650, 0.008332121
        %v2652 = vmul.f32 %v2649, %v2651
        %v2653 = vadd.f32 %v2652, -0.16666654
        %v2654 = vmul.f32 %v2649, %v2653
        %v2655 = vadd.f32 %v2654, 1.0
        %v2656 = vmul.f32 %v2655, %v2640
        %vm2657 = vweird.f32 %v662
        %v2658 = vand.u32 %v2641, 3
        %vm2659 = vcmp.lt.s32.totalorder %v2658, 2
        %vm2660 = vcmp.eq.s32.totalorder %v2658, 0
        %v2661 = vxor.u32 %v2656, 2147483648
        %v2662 = vsel %vm2660, %v2648, %v2661
        %vm2663 = vcmp.eq.s32.totalorder %v2658, 2
        %v2664 = vxor.u32 %v2648, 2147483648
        %v2665 = vsel %vm2663, %v2664, %v2656
        %v2666 = vsel %vm2659, %v2662, %v2665
        %v2667 = vsel %vm2657, nan, %v2666
        %v2668 = vand.u32 2147483647, %v663
        %vm2669 = vcmp.le.f32.partialorder %v2668, 0.7853982
        %vm2670 = vcmp.lt.s32.totalorder %v663, 0
        %v2671 = vand.u32 %v663, 2139095040
        %v2672 = vshrl.u32 %v2671, 23
        %v2673 = vsub.s32 %v2672, 127
        %v2674 = vand.u32 2147483647, %v663
        %v2675 = vand.u32 %v2674, 8388607
        %v2676 = vor.u32 %v2675, 8388608
        %v2677 = vsub.s32 0, %v2676
        %v2678 = vadd.s32 %v2673, 1
        %vm2679 = vcmp.gt.s32.totalorder %v2678, 0
        %v2680 = vsel %vm2679, %v2678, 0
        %v2681 = vshrl.u32 %v2680, 5
        %v2682 = vand.u32 %v2680, 31
        %v2683 = vsub.s32 32, %v2682
        %v2684 = vshrl.u32 683565275, %v2683
        %v2685 = vshll.u32 683565275, %v2682
        %v2686 = vshrl.u32 2475754826, %v2683
        %v2687 = vor.u32 %v2685, %v2686
        %v2688 = vshll.u32 2475754826, %v2682
        %v2689 = vshrl.u32 2131351028, %v2683
        %v2690 = vor.u32 %v2688, %v2689
        %v2691 = vshll.u32 2131351028, %v2682
        %v2692 = vshrl.u32 2102212464, %v2683
        %v2693 = vor.u32 %v2691, %v2692
        %v2694 = vshll.u32 2102212464, %v2682
        %v2695 = vshrl.u32 920167782, %v2683
        %v2696 = vor.u32 %v2694, %v2695
        %v2697 = vshll.u32 920167782, %v2682
        %v2698 = vshrl.u32 1326507024, %v2683
        %v2699 = vor.u32 %v2697, %v2698
        %vm2700 = vcmp.lt.s32.totalorder %v2681, 1
        %vm2701 = vcmp.lt.s32.totalorder %v2681, 2
        %vm2702 = vcmp.lt.s32.totalorder %v2681, 3
        %vm2703 = vcmp.lt.s32.totalorder %v2681, 4
        %v2704 = vsel %vm2700, %v2684, %v2687
        %v2705 = vsel %vm2703, %v2693, 2102212464
        %v2706 = vsel %vm2702, %v2690, %v2705
        %v2707 = vsel %vm2701, %v2704, %v2706
        %v2708 = vsel %vm2700, %v2687, %v2690
        %v2709 = vsel %vm2703, %v2696, 920167782
        %v2710 = vsel %vm2702, %v2693, %v2709
        %v2711 = vsel %vm2701, %v2708, %v2710
        %v2712 = vsel %vm2700, %v2690, %v2693
        %v2713 = vsel %vm2703, %v2699, 1326507024
        %v2714 = vsel %vm2702, %v2696, %v2713
        %v2715 = vsel %vm2701, %v2712, %v2714
        %v2716 = vshll.u32 %v2676, 8
        %v2717 = vand.u32 %v2716, 65535
        %v2718 = vshrl.u32 %v2716, 16
        %v2719 = vand.u32 %v2715, 65535
        %v2720 = vshrl.u32 %v2715, 16
        %v2721 = vmul.u32 %v2717, %v2719
        %v2722 = vmul.u32 %v2717, %v2720
        %v2723 = vmul.u32 %v2718, %v2719
        %v2724 = vmul.u32 %v2718, %v2720
        %v2725 = vshll.u32 %v2722, 16
        %v2726 = vshrl.u32 %v2722, 16
        %v2727 = vshll.u32 %v2723, 16
        %v2728 = vshrl.u32 %v2723, 16
        %vm2729 = vc.u32 %v2721, %v2725
        %v2730 = vsel %vm2729, 1, 0
        %v2731 = vadd.s32 %v2721, %v2725
        %v2732 = vadd.s32 %v2724, %v2730
        %vm2733 = vc.u32 %v2731, %v2727
        %v2734 = vsel %vm2733, 1, 0
        %v2735 = vadd.s32 %v2731, %v2727
        %v2736 = vadd.s32 %v2732, %v2734
        %v2737 = vadd.s32 %v2736, %v2726
        %v2738 = vadd.s32 %v2737, %v2728
        %v2739 = vand.u32 %v2716, 65535
        %v2740 = vshrl.u32 %v2716, 16
        %v2741 = vand.u32 %v2711, 65535
        %v2742 = vshrl.u32 %v2711, 16
        %v2743 = vmul.u32 %v2739, %v2741
        %v2744 = vmul.u32 %v2739, %v2742
        %v2745 = vmul.u32 %v2740, %v2741
        %v2746 = vmul.u32 %v2740, %v2742
        %v2747 = vshll.u32 %v2744, 16
        %v2748 = vshrl.u32 %v2744, 16
        %v2749 = vshll.u32 %v2745, 16
        %v2750 = vshrl.u32 %v2745, 16
        %vm2751 = vc.u32 %v2743, %v2747
        %v2752 = vsel %vm2751, 1, 0
        %v2753 = vadd.s32 %v2743, %v2747
        %v2754 = vadd.s32 %v2746, %v2752
        %vm2755 = vc.u32 %v2753, %v2749
        %v2756 = vsel %vm2755, 1, 0
        %v2757 = vadd.s32 %v2753, %v2749
        %v2758 = vadd.s32 %v2754, %v2756
        %v2759 = vadd.s32 %v2758, %v2748
        %v2760 = vadd.s32 %v2759, %v2750
        %v2761 = vmul.u32 %v2716, %v2707
        %v2762 = vadd.s32 %v2738, %v2757
        %vm2763 = vc.u32 %v2738, %v2757
        %v2764 = vadd.s32 %v2760, 1
        %v2765 = vsel %vm2763, %v2764, %v2760
        %v2766 = vadd.s32 %v2761, %v2765
        %v2767 = vadd.s32 %v2766, 536870912
        %v2768 = vshrl.u32 %v2767, 30
        %v2769 = vshll.u32 %v2768, 30
        %v2770 = vsub.s32 %v2766, %v2769
        %vm2771 = vcmp.lt.s32.totalorder %v2770, 0
        %v2772 = vsub.s32 0, %v2770
        %v2773 = vsel %vm2771, %v2772, %v2770
        %v2774 = vclz %v2773
        %v2775 = vsub.s32 %v2774, 2
        %vm2776 = vcmp.gt.s32.totalorder 0, %v2775
        %v2777 = vsel %vm2776, 0, %v2775
        %v2778 = vsub.s32 32, %v2777
        %v2779 = vshll.u32 %v2770, %v2777
        %v2780 = vshrl.u32 %v2762, %v2778
        %v2781 = vor.u32 %v2779, %v2780
        %v2782 = vsub.s32 4294967266, %v2777
        %v2783 = vadd.s32 %v2782, 127
        %v2784 = vshll.u32 %v2783, 23
        %v2785 = vor.u32 4788187, %v2784
        %v2786 = vand.u32 2147483647, %v2785
        %v2788 = vcvt.s32.f32 %v2781
        %v2789 = vmul.f32 %v2788, %v2786
        %v2790 = vxor.u32 %v2789, 2147483648
        %v2791 = vsel %vm2670, %v2790, %v2789
        %v2792 = vsub.s32 4, %v2768
        %v2793 = vsel %vm2670, %v2792, %v2768
        %v2794 = vsel %vm2669, %v663, %v2791
        %v2795 = vsel %vm2669, 0, %v2793
        %v2796 = vmul.f32 %v2794, %v2794
        %v2797 = vmul.f32 %v2796, -0.001358992
        %v2798 = vadd.f32 %v2797, 0.041655596
        %v2799 = vmul.f32 %v2796, %v2798
        %v2800 = vadd.f32 %v2799, -0.4999988
        %v2801 = vmul.f32 %v2796, %v2800
        %v2802 = vadd.f32 1.0, %v2801
        %v2803 = vmul.f32 %v2794, %v2794
        %v2804 = vmul.f32 %v2803, -0.00019511016
        %v2805 = vadd.f32 %v2804, 0.008332121
        %v2806 = vmul.f32 %v2803, %v2805
        %v2807 = vadd.f32 %v2806, -0.16666654
        %v2808 = vmul.f32 %v2803, %v2807
        %v2809 = vadd.f32 %v2808, 1.0
        %v2810 = vmul.f32 %v2809, %v2794
        %vm2811 = vweird.f32 %v663
        %v2812 = vand.u32 %v2795, 3
        %vm2813 = vcmp.lt.s32.totalorder %v2812, 2
        %vm2814 = vcmp.eq.s32.totalorder %v2812, 0
        %v2815 = vxor.u32 %v2810, 2147483648
        %v2816 = vsel %vm2814, %v2802, %v2815
        %vm2817 = vcmp.eq.s32.totalorder %v2812, 2
        %v2818 = vxor.u32 %v2802, 2147483648
        %v2819 = vsel %vm2817, %v2818, %v2810
        %v2820 = vsel %vm2813, %v2816, %v2819
        %v2821 = vsel %vm2811, nan, %v2820
        %v2822 = vand.u32 2147483647, %v664
        %vm2823 = vcmp.le.f32.partialorder %v2822, 0.7853982
        %vm2824 = vcmp.lt.s32.totalorder %v664, 0
        %v2825 = vand.u32 %v664, 2139095040
        %v2826 = vshrl.u32 %v2825, 23
        %v2827 = vsub.s32 %v2826, 127
        %v2828 = vand.u32 2147483647, %v664
        %v2829 = vand.u32 %v2828, 8388607
        %v2830 = vor.u32 %v2829, 8388608
        %v2831 = vsub.s32 0, %v2830
        %v2832 = vadd.s32 %v2827, 1
        %vm2833 = vcmp.gt.s32.totalorder %v2832, 0
        %v2834 = vsel %vm2833, %v2832, 0
        %v2835 = vshrl.u32 %v2834, 5
        %v2836 = vand.u32 %v2834, 31
        %v2837 = vsub.s32 32, %v2836
        %v2838 = vshrl.u32 683565275, %v2837
        %v2839 = vshll.u32 683565275, %v2836
        %v2840 = vshrl.u32 2475754826, %v2837
        %v2841 = vor.u32 %v2839, %v2840
        %v2842 = vshll.u32 2475754826, %v2836
        %v2843 = vshrl.u32 2131351028, %v2837
        %v2844 = vor.u32 %v2842, %v2843
        %v2845 = vshll.u32 2131351028, %v2836
        %v2846 = vshrl.u32 2102212464, %v2837
        %v2847 = vor.u32 %v2845, %v2846
        %v2848 = vshll.u32 2102212464, %v2836
        %v2849 = vshrl.u32 920167782, %v2837
        %v2850 = vor.u32 %v2848, %v2849
        %v2851 = vshll.u32 920167782, %v2836
        %v2852 = vshrl.u32 1326507024, %v2837
        %v2853 = vor.u32 %v2851, %v2852
        %vm2854 = vcmp.lt.s32.totalorder %v2835, 1
        %vm2855 = vcmp.lt.s32.totalorder %v2835, 2
        %vm2856 = vcmp.lt.s32.totalorder %v2835, 3
        %vm2857 = vcmp.lt.s32.totalorder %v2835, 4
        %v2858 = vsel %vm2854, %v2838, %v2841
        %v2859 = vsel %vm2857, %v2847, 2102212464
        %v2860 = vsel %vm2856, %v2844, %v2859
        %v2861 = vsel %vm2855, %v2858, %v2860
        %v2862 = vsel %vm2854, %v2841, %v2844
        %v2863 = vsel %vm2857, %v2850, 920167782
        %v2864 = vsel %vm2856, %v2847, %v2863
        %v2865 = vsel %vm2855, %v2862, %v2864
        %v2866 = vsel %vm2854, %v2844, %v2847
        %v2867 = vsel %vm2857, %v2853, 1326507024
        %v2868 = vsel %vm2856, %v2850, %v2867
        %v2869 = vsel %vm2855, %v2866, %v2868
        %v2870 = vshll.u32 %v2830, 8
        %v2871 = vand.u32 %v2870, 65535
        %v2872 = vshrl.u32 %v2870, 16
        %v2873 = vand.u32 %v2869, 65535
        %v2874 = vshrl.u32 %v2869, 16
        %v2875 = vmul.u32 %v2871, %v2873
        %v2876 = vmul.u32 %v2871, %v2874
        %v2877 = vmul.u32 %v2872, %v2873
        %v2878 = vmul.u32 %v2872, %v2874
        %v2879 = vshll.u32 %v2876, 16
        %v2880 = vshrl.u32 %v2876, 16
        %v2881 = vshll.u32 %v2877, 16
        %v2882 = vshrl.u32 %v2877, 16
        %vm2883 = vc.u32 %v2875, %v2879
        %v2884 = vsel %vm2883, 1, 0
        %v2885 = vadd.s32 %v2875, %v2879
        %v2886 = vadd.s32 %v2878, %v2884
        %vm2887 = vc.u32 %v2885, %v2881
        %v2888 = vsel %vm2887, 1, 0
        %v2889 = vadd.s32 %v2885, %v2881
        %v2890 = vadd.s32 %v2886, %v2888
        %v2891 = vadd.s32 %v2890, %v2880
        %v2892 = vadd.s32 %v2891, %v2882
        %v2893 = vand.u32 %v2870, 65535
        %v2894 = vshrl.u32 %v2870, 16
        %v2895 = vand.u32 %v2865, 65535
        %v2896 = vshrl.u32 %v2865, 16
        %v2897 = vmul.u32 %v2893, %v2895
        %v2898 = vmul.u32 %v2893, %v2896
        %v2899 = vmul.u32 %v2894, %v2895
        %v2900 = vmul.u32 %v2894, %v2896
        %v2901 = vshll.u32 %v2898, 16
        %v2902 = vshrl.u32 %v2898, 16
        %v2903 = vshll.u32 %v2899, 16
        %v2904 = vshrl.u32 %v2899, 16
        %vm2905 = vc.u32 %v2897, %v2901
        %v2906 = vsel %vm2905, 1, 0
        %v2907 = vadd.s32 %v2897, %v2901
        %v2908 = vadd.s32 %v2900, %v2906
        %vm2909 = vc.u32 %v2907, %v2903
        %v2910 = vsel %vm2909, 1, 0
        %v2911 = vadd.s32 %v2907, %v2903
        %v2912 = vadd.s32 %v2908, %v2910
        %v2913 = vadd.s32 %v2912, %v2902
        %v2914 = vadd.s32 %v2913, %v2904
        %v2915 = vmul.u32 %v2870, %v2861
        %v2916 = vadd.s32 %v2892, %v2911
        %vm2917 = vc.u32 %v2892, %v2911
        %v2918 = vadd.s32 %v2914, 1
        %v2919 = vsel %vm2917, %v2918, %v2914
        %v2920 = vadd.s32 %v2915, %v2919
        %v2921 = vadd.s32 %v2920, 536870912
        %v2922 = vshrl.u32 %v2921, 30
        %v2923 = vshll.u32 %v2922, 30
        %v2924 = vsub.s32 %v2920, %v2923
        %vm2925 = vcmp.lt.s32.totalorder %v2924, 0
        %v2926 = vsub.s32 0, %v2924
        %v2927 = vsel %vm2925, %v2926, %v2924
        %v2928 = vclz %v2927
        %v2929 = vsub.s32 %v2928, 2
        %vm2930 = vcmp.gt.s32.totalorder 0, %v2929
        %v2931 = vsel %vm2930, 0, %v2929
        %v2932 = vsub.s32 32, %v2931
        %v2933 = vshll.u32 %v2924, %v2931
        %v2934 = vshrl.u32 %v2916, %v2932
        %v2935 = vor.u32 %v2933, %v2934
        %v2936 = vsub.s32 4294967266, %v2931
        %v2937 = vadd.s32 %v2936, 127
        %v2938 = vshll.u32 %v2937, 23
        %v2939 = vor.u32 4788187, %v2938
        %v2940 = vand.u32 2147483647, %v2939
        %v2942 = vcvt.s32.f32 %v2935
        %v2943 = vmul.f32 %v2942, %v2940
        %v2944 = vxor.u32 %v2943, 2147483648
        %v2945 = vsel %vm2824, %v2944, %v2943
        %v2946 = vsub.s32 4, %v2922
        %v2947 = vsel %vm2824, %v2946, %v2922
        %v2948 = vsel %vm2823, %v664, %v2945
        %v2949 = vsel %vm2823, 0, %v2947
        %v2950 = vmul.f32 %v2948, %v2948
        %v2951 = vmul.f32 %v2950, -0.001358992
        %v2952 = vadd.f32 %v2951, 0.041655596
        %v2953 = vmul.f32 %v2950, %v2952
        %v2954 = vadd.f32 %v2953, -0.4999988
        %v2955 = vmul.f32 %v2950, %v2954
        %v2956 = vadd.f32 1.0, %v2955
        %v2957 = vmul.f32 %v2948, %v2948
        %v2958 = vmul.f32 %v2957, -0.00019511016
        %v2959 = vadd.f32 %v2958, 0.008332121
        %v2960 = vmul.f32 %v2957, %v2959
        %v2961 = vadd.f32 %v2960, -0.16666654
        %v2962 = vmul.f32 %v2957, %v2961
        %v2963 = vadd.f32 %v2962, 1.0
        %v2964 = vmul.f32 %v2963, %v2948
        %vm2965 = vweird.f32 %v664
        %v2966 = vand.u32 %v2949, 3
        %vm2967 = vcmp.lt.s32.totalorder %v2966, 2
        %vm2968 = vcmp.eq.s32.totalorder %v2966, 0
        %v2969 = vxor.u32 %v2964, 2147483648
        %v2970 = vsel %vm2968, %v2956, %v2969
        %vm2971 = vcmp.eq.s32.totalorder %v2966, 2
        %v2972 = vxor.u32 %v2956, 2147483648
        %v2973 = vsel %vm2971, %v2972, %v2964
        %v2974 = vsel %vm2967, %v2970, %v2973
        %v2975 = vsel %vm2965, nan, %v2974
        %v2976 = vand.u32 2147483647, %v665
        %vm2977 = vcmp.le.f32.partialorder %v2976, 0.7853982
        %vm2978 = vcmp.lt.s32.totalorder %v665, 0
        %v2979 = vand.u32 %v665, 2139095040
        %v2980 = vshrl.u32 %v2979, 23
        %v2981 = vsub.s32 %v2980, 127
        %v2982 = vand.u32 2147483647, %v665
        %v2983 = vand.u32 %v2982, 8388607
        %v2984 = vor.u32 %v2983, 8388608
        %v2985 = vsub.s32 0, %v2984
        %v2986 = vadd.s32 %v2981, 1
        %vm2987 = vcmp.gt.s32.totalorder %v2986, 0
        %v2988 = vsel %vm2987, %v2986, 0
        %v2989 = vshrl.u32 %v2988, 5
        %v2990 = vand.u32 %v2988, 31
        %v2991 = vsub.s32 32, %v2990
        %v2992 = vshrl.u32 683565275, %v2991
        %v2993 = vshll.u32 683565275, %v2990
        %v2994 = vshrl.u32 2475754826, %v2991
        %v2995 = vor.u32 %v2993, %v2994
        %v2996 = vshll.u32 2475754826, %v2990
        %v2997 = vshrl.u32 2131351028, %v2991
        %v2998 = vor.u32 %v2996, %v2997
        %v2999 = vshll.u32 2131351028, %v2990
        %v3000 = vshrl.u32 2102212464, %v2991
        %v3001 = vor.u32 %v2999, %v3000
        %v3002 = vshll.u32 2102212464, %v2990
        %v3003 = vshrl.u32 920167782, %v2991
        %v3004 = vor.u32 %v3002, %v3003
        %v3005 = vshll.u32 920167782, %v2990
        %v3006 = vshrl.u32 1326507024, %v2991
        %v3007 = vor.u32 %v3005, %v3006
        %vm3008 = vcmp.lt.s32.totalorder %v2989, 1
        %vm3009 = vcmp.lt.s32.totalorder %v2989, 2
        %vm3010 = vcmp.lt.s32.totalorder %v2989, 3
        %vm3011 = vcmp.lt.s32.totalorder %v2989, 4
        %v3012 = vsel %vm3008, %v2992, %v2995
        %v3013 = vsel %vm3011, %v3001, 2102212464
        %v3014 = vsel %vm3010, %v2998, %v3013
        %v3015 = vsel %vm3009, %v3012, %v3014
        %v3016 = vsel %vm3008, %v2995, %v2998
        %v3017 = vsel %vm3011, %v3004, 920167782
        %v3018 = vsel %vm3010, %v3001, %v3017
        %v3019 = vsel %vm3009, %v3016, %v3018
        %v3020 = vsel %vm3008, %v2998, %v3001
        %v3021 = vsel %vm3011, %v3007, 1326507024
        %v3022 = vsel %vm3010, %v3004, %v3021
        %v3023 = vsel %vm3009, %v3020, %v3022
        %v3024 = vshll.u32 %v2984, 8
        %v3025 = vand.u32 %v3024, 65535
        %v3026 = vshrl.u32 %v3024, 16
        %v3027 = vand.u32 %v3023, 65535
        %v3028 = vshrl.u32 %v3023, 16
        %v3029 = vmul.u32 %v3025, %v3027
        %v3030 = vmul.u32 %v3025, %v3028
        %v3031 = vmul.u32 %v3026, %v3027
        %v3032 = vmul.u32 %v3026, %v3028
        %v3033 = vshll.u32 %v3030, 16
        %v3034 = vshrl.u32 %v3030, 16
        %v3035 = vshll.u32 %v3031, 16
        %v3036 = vshrl.u32 %v3031, 16
        %vm3037 = vc.u32 %v3029, %v3033
        %v3038 = vsel %vm3037, 1, 0
        %v3039 = vadd.s32 %v3029, %v3033
        %v3040 = vadd.s32 %v3032, %v3038
        %vm3041 = vc.u32 %v3039, %v3035
        %v3042 = vsel %vm3041, 1, 0
        %v3043 = vadd.s32 %v3039, %v3035
        %v3044 = vadd.s32 %v3040, %v3042
        %v3045 = vadd.s32 %v3044, %v3034
        %v3046 = vadd.s32 %v3045, %v3036
        %v3047 = vand.u32 %v3024, 65535
        %v3048 = vshrl.u32 %v3024, 16
        %v3049 = vand.u32 %v3019, 65535
        %v3050 = vshrl.u32 %v3019, 16
        %v3051 = vmul.u32 %v3047, %v3049
        %v3052 = vmul.u32 %v3047, %v3050
        %v3053 = vmul.u32 %v3048, %v3049
        %v3054 = vmul.u32 %v3048, %v3050
        %v3055 = vshll.u32 %v3052, 16
        %v3056 = vshrl.u32 %v3052, 16
        %v3057 = vshll.u32 %v3053, 16
        %v3058 = vshrl.u32 %v3053, 16
        %vm3059 = vc.u32 %v3051, %v3055
        %v3060 = vsel %vm3059, 1, 0
        %v3061 = vadd.s32 %v3051, %v3055
        %v3062 = vadd.s32 %v3054, %v3060
        %vm3063 = vc.u32 %v3061, %v3057
        %v3064 = vsel %vm3063, 1, 0
        %v3065 = vadd.s32 %v3061, %v3057
        %v3066 = vadd.s32 %v3062, %v3064
        %v3067 = vadd.s32 %v3066, %v3056
        %v3068 = vadd.s32 %v3067, %v3058
        %v3069 = vmul.u32 %v3024, %v3015
        %v3070 = vadd.s32 %v3046, %v3065
        %vm3071 = vc.u32 %v3046, %v3065
        %v3072 = vadd.s32 %v3068, 1
        %v3073 = vsel %vm3071, %v3072, %v3068
        %v3074 = vadd.s32 %v3069, %v3073
        %v3075 = vadd.s32 %v3074, 536870912
        %v3076 = vshrl.u32 %v3075, 30
        %v3077 = vshll.u32 %v3076, 30
        %v3078 = vsub.s32 %v3074, %v3077
        %vm3079 = vcmp.lt.s32.totalorder %v3078, 0
        %v3080 = vsub.s32 0, %v3078
        %v3081 = vsel %vm3079, %v3080, %v3078
        %v3082 = vclz %v3081
        %v3083 = vsub.s32 %v3082, 2
        %vm3084 = vcmp.gt.s32.totalorder 0, %v3083
        %v3085 = vsel %vm3084, 0, %v3083
        %v3086 = vsub.s32 32, %v3085
        %v3087 = vshll.u32 %v3078, %v3085
        %v3088 = vshrl.u32 %v3070, %v3086
        %v3089 = vor.u32 %v3087, %v3088
        %v3090 = vsub.s32 4294967266, %v3085
        %v3091 = vadd.s32 %v3090, 127
        %v3092 = vshll.u32 %v3091, 23
        %v3093 = vor.u32 4788187, %v3092
        %v3094 = vand.u32 2147483647, %v3093
        %v3096 = vcvt.s32.f32 %v3089
        %v3097 = vmul.f32 %v3096, %v3094
        %v3098 = vxor.u32 %v3097, 2147483648
        %v3099 = vsel %vm2978, %v3098, %v3097
        %v3100 = vsub.s32 4, %v3076
        %v3101 = vsel %vm2978, %v3100, %v3076
        %v3102 = vsel %vm2977, %v665, %v3099
        %v3103 = vsel %vm2977, 0, %v3101
        %v3104 = vmul.f32 %v3102, %v3102
        %v3105 = vmul.f32 %v3104, -0.001358992
        %v3106 = vadd.f32 %v3105, 0.041655596
        %v3107 = vmul.f32 %v3104, %v3106
        %v3108 = vadd.f32 %v3107, -0.4999988
        %v3109 = vmul.f32 %v3104, %v3108
        %v3110 = vadd.f32 1.0, %v3109
        %v3111 = vmul.f32 %v3102, %v3102
        %v3112 = vmul.f32 %v3111, -0.00019511016
        %v3113 = vadd.f32 %v3112, 0.008332121
        %v3114 = vmul.f32 %v3111, %v3113
        %v3115 = vadd.f32 %v3114, -0.16666654
        %v3116 = vmul.f32 %v3111, %v3115
        %v3117 = vadd.f32 %v3116, 1.0
        %v3118 = vmul.f32 %v3117, %v3102
        %vm3119 = vweird.f32 %v665
        %v3120 = vand.u32 %v3103, 3
        %vm3121 = vcmp.lt.s32.totalorder %v3120, 2
        %vm3122 = vcmp.eq.s32.totalorder %v3120, 0
        %v3123 = vxor.u32 %v3118, 2147483648
        %v3124 = vsel %vm3122, %v3110, %v3123
        %vm3125 = vcmp.eq.s32.totalorder %v3120, 2
        %v3126 = vxor.u32 %v3110, 2147483648
        %v3127 = vsel %vm3125, %v3126, %v3118
        %v3128 = vsel %vm3121, %v3124, %v3127
        %v3129 = vsel %vm3119, nan, %v3128
        %v3130 = vld [vmem:[%s3] sm:$0xff]
        %v3131 = vld [vmem:[%s3 + $0x8] sm:$0xff]
        %v3132 = vld [vmem:[%s3 + $0x10] sm:$0xff]
        %v3133 = vld [vmem:[%s3 + $0x18] sm:$0xff]
        %v3134 = vld [vmem:[%s3 + $0x20] sm:$0xff]
        %v3135 = vld [vmem:[%s3 + $0x28] sm:$0xff]
        %v3136 = vld [vmem:[%s3 + $0x30] sm:$0xff]
        %v3137 = vld [vmem:[%s3 + $0x38] sm:$0xff]
        %v3138 = vld [vmem:[%s3 + $0x40] sm:$0xff]
        %v3139 = vld [vmem:[%s3 + $0x48] sm:$0xff]
        %v3140 = vld [vmem:[%s3 + $0x50] sm:$0xff]
        %v3141 = vld [vmem:[%s3 + $0x58] sm:$0xff]
        %v3142 = vld [vmem:[%s3 + $0x60] sm:$0xff]
        %v3143 = vld [vmem:[%s3 + $0x68] sm:$0xff]
        %v3144 = vld [vmem:[%s3 + $0x70] sm:$0xff]
        %v3145 = vld [vmem:[%s3 + $0x78] sm:$0xff]
        %3147 = vset.pattern.permute.xlu0 0
        %3148 = vperm.xlu0 %3147, %v3130
        %v3149 = vpop.permute.xlu0 %3148
        %3152 = vset.pattern.permute.xlu0 0
        %3153 = vperm.xlu0 %3152, %v3131
        %v3154 = vpop.permute.xlu0 %3153
        %3157 = vset.pattern.permute.xlu0 0
        %3158 = vperm.xlu0 %3157, %v3132
        %v3159 = vpop.permute.xlu0 %3158
        %3162 = vset.pattern.permute.xlu0 0
        %3163 = vperm.xlu0 %3162, %v3133
        %v3164 = vpop.permute.xlu0 %3163
        %3167 = vset.pattern.permute.xlu0 0
        %3168 = vperm.xlu0 %3167, %v3134
        %v3169 = vpop.permute.xlu0 %3168
        %3172 = vset.pattern.permute.xlu0 0
        %3173 = vperm.xlu0 %3172, %v3135
        %v3174 = vpop.permute.xlu0 %3173
        %3177 = vset.pattern.permute.xlu0 0
        %3178 = vperm.xlu0 %3177, %v3136
        %v3179 = vpop.permute.xlu0 %3178
        %3182 = vset.pattern.permute.xlu0 0
        %3183 = vperm.xlu0 %3182, %v3137
        %v3184 = vpop.permute.xlu0 %3183
        %3187 = vset.pattern.permute.xlu0 0
        %3188 = vperm.xlu0 %3187, %v3138
        %v3189 = vpop.permute.xlu0 %3188
        %3192 = vset.pattern.permute.xlu0 0
        %3193 = vperm.xlu0 %3192, %v3139
        %v3194 = vpop.permute.xlu0 %3193
        %3197 = vset.pattern.permute.xlu0 0
        %3198 = vperm.xlu0 %3197, %v3140
        %v3199 = vpop.permute.xlu0 %3198
        %3202 = vset.pattern.permute.xlu0 0
        %3203 = vperm.xlu0 %3202, %v3141
        %v3204 = vpop.permute.xlu0 %3203
        %3207 = vset.pattern.permute.xlu0 0
        %3208 = vperm.xlu0 %3207, %v3142
        %v3209 = vpop.permute.xlu0 %3208
        %3212 = vset.pattern.permute.xlu0 0
        %3213 = vperm.xlu0 %3212, %v3143
        %v3214 = vpop.permute.xlu0 %3213
        %3217 = vset.pattern.permute.xlu0 0
        %3218 = vperm.xlu0 %3217, %v3144
        %v3219 = vpop.permute.xlu0 %3218
        %3222 = vset.pattern.permute.xlu0 0
        %3223 = vperm.xlu0 %3222, %v3145
        %v3224 = vpop.permute.xlu0 %3223
        %v3226 = vmul.f32 %v3149, %v819
        %v3227 = vmul.f32 %v3154, %v973
        %v3228 = vmul.f32 %v3159, %v1127
        %v3229 = vmul.f32 %v3164, %v1281
        %v3230 = vmul.f32 %v3169, %v1435
        %v3231 = vmul.f32 %v3174, %v1589
        %v3232 = vmul.f32 %v3179, %v1743
        %v3233 = vmul.f32 %v3184, %v1897
        %v3234 = vmul.f32 %v3189, %v2051
        %v3235 = vmul.f32 %v3194, %v2205
        %v3236 = vmul.f32 %v3199, %v2359
        %v3237 = vmul.f32 %v3204, %v2513
        %v3238 = vmul.f32 %v3209, %v2667
        %v3239 = vmul.f32 %v3214, %v2821
        %v3240 = vmul.f32 %v3219, %v2975
        %v3241 = vmul.f32 %v3224, %v3129
        %v3242 = vadd.f32 %v3226, %v3227
        %v3243 = vadd.f32 %v3242, %v3228
        %v3244 = vadd.f32 %v3243, %v3229
        %v3245 = vrot.slane %v3244, 4
        %v3246 = vadd.f32 %v3244, %v3245
        %v3247 = vrot.slane %v3246, 2
        %v3248 = vadd.f32 %v3246, %v3247
        %v3249 = vrot.slane %v3248, 1
        %v3250 = vadd.f32 %v3248, %v3249
        %v3251 = vadd.f32 %v3230, %v3231
        %v3252 = vadd.f32 %v3251, %v3232
        %v3253 = vadd.f32 %v3252, %v3233
        %v3254 = vrot.slane %v3253, 4
        %v3255 = vadd.f32 %v3253, %v3254
        %v3256 = vrot.slane %v3255, 2
        %v3257 = vadd.f32 %v3255, %v3256
        %v3258 = vrot.slane %v3257, 1
        %v3259 = vadd.f32 %v3257, %v3258
        %v3260 = vadd.f32 %v3234, %v3235
        %v3261 = vadd.f32 %v3260, %v3236
        %v3262 = vadd.f32 %v3261, %v3237
        %v3263 = vrot.slane %v3262, 4
        %v3264 = vadd.f32 %v3262, %v3263
        %v3265 = vrot.slane %v3264, 2
        %v3266 = vadd.f32 %v3264, %v3265
        %v3267 = vrot.slane %v3266, 1
        %v3268 = vadd.f32 %v3266, %v3267
        %v3269 = vadd.f32 %v3238, %v3239
        %v3270 = vadd.f32 %v3269, %v3240
        %v3271 = vadd.f32 %v3270, %v3241
        %v3272 = vrot.slane %v3271, 4
        %v3273 = vadd.f32 %v3271, %v3272
        %v3274 = vrot.slane %v3273, 2
        %v3275 = vadd.f32 %v3273, %v3274
        %v3276 = vrot.slane %v3275, 1
        %v3277 = vadd.f32 %v3275, %v3276
        %v3278 = vld [vmem:[%s6] sm:$0x3]
        %3280 = vset.pattern.permute.xlu0 0
        %3281 = vperm.xlu0 %3280, %v3278
        %v3282 = vpop.permute.xlu0 %3281
        %v3284 = vmul.f32 %v332, %v3282
        %v3285 = vmul.f32 %v333, %v3282
        %v3286 = vmul.f32 %v334, %v3282
        %v3287 = vmul.f32 %v335, %v3282
        %v3288 = vperm.slane %v3284, 0
        %v3289 = vperm.slane %v3285, 0
        %v3290 = vperm.slane %v3286, 0
        %v3291 = vperm.slane %v3287, 0
        %3293 = vset.pattern.permute.xlu0 0
        %3294 = vperm.xlu0 %3293, %v352
        %v3295 = vpop.permute.xlu0 %3294
        %3298 = vset.pattern.permute.xlu0 0
        %3299 = vperm.xlu0 %3298, %v353
        %v3300 = vpop.permute.xlu0 %3299
        %v3302 = vsub.f32 %v3288, %v3295
        %v3303 = vsub.f32 %v3288, %v3300
        %v3304 = vsub.f32 %v3289, %v3295
        %v3305 = vsub.f32 %v3289, %v3300
        %v3306 = vsub.f32 %v3290, %v3295
        %v3307 = vsub.f32 %v3290, %v3300
        %v3308 = vsub.f32 %v3291, %v3295
        %v3309 = vsub.f32 %v3291, %v3300
        %v3310 = vmul.f32 %v3302, %v3302
        %v3311 = vmul.f32 %v3303, %v3303
        %v3312 = vmul.f32 %v3304, %v3304
        %v3313 = vmul.f32 %v3305, %v3305
        %v3314 = vmul.f32 %v3306, %v3306
        %v3315 = vmul.f32 %v3307, %v3307
        %v3316 = vmul.f32 %v3308, %v3308
        %v3317 = vmul.f32 %v3309, %v3309
        %v3318 = vperm.slane %v3284, 1
        %v3319 = vperm.slane %v3285, 1
        %v3320 = vperm.slane %v3286, 1
        %v3321 = vperm.slane %v3287, 1
        %3322 = vset.pattern.permute.xlu0 1
        %3323 = vperm.xlu0 %3322, %v352
        %v3324 = vpop.permute.xlu0 %3323
        %3326 = vset.pattern.permute.xlu0 1
        %3327 = vperm.xlu0 %3326, %v353
        %v3328 = vpop.permute.xlu0 %3327
        %v3330 = vsub.f32 %v3318, %v3324
        %v3331 = vsub.f32 %v3318, %v3328
        %v3332 = vsub.f32 %v3319, %v3324
        %v3333 = vsub.f32 %v3319, %v3328
        %v3334 = vsub.f32 %v3320, %v3324
        %v3335 = vsub.f32 %v3320, %v3328
        %v3336 = vsub.f32 %v3321, %v3324
        %v3337 = vsub.f32 %v3321, %v3328
        %v3338 = vmul.f32 %v3330, %v3330
        %v3339 = vmul.f32 %v3331, %v3331
        %v3340 = vmul.f32 %v3332, %v3332
        %v3341 = vmul.f32 %v3333, %v3333
        %v3342 = vmul.f32 %v3334, %v3334
        %v3343 = vmul.f32 %v3335, %v3335
        %v3344 = vmul.f32 %v3336, %v3336
        %v3345 = vmul.f32 %v3337, %v3337
        %v3346 = vadd.f32 %v3310, %v3338
        %v3347 = vadd.f32 %v3311, %v3339
        %v3348 = vadd.f32 %v3312, %v3340
        %v3349 = vadd.f32 %v3313, %v3341
        %v3350 = vadd.f32 %v3314, %v3342
        %v3351 = vadd.f32 %v3315, %v3343
        %v3352 = vadd.f32 %v3316, %v3344
        %v3353 = vadd.f32 %v3317, %v3345
        %v3354 = vmul.f32 %v3346, -0.5
        %v3355 = vmul.f32 %v3347, -0.5
        %v3356 = vmul.f32 %v3348, -0.5
        %v3357 = vmul.f32 %v3349, -0.5
        %v3358 = vmul.f32 %v3350, -0.5
        %v3359 = vmul.f32 %v3351, -0.5
        %v3360 = vmul.f32 %v3352, -0.5
        %v3361 = vmul.f32 %v3353, -0.5
        %v3362 = vmul.f32 %v3354, 1.442695
        %v3363 = vpow.pop %v3362
        %v3364 = vmul.f32 %v3355, 1.442695
        %v3365 = vpow.pop %v3364
        %v3366 = vmul.f32 %v3356, 1.442695
        %v3367 = vpow.pop %v3366
        %v3368 = vmul.f32 %v3357, 1.442695
        %v3369 = vpow.pop %v3368
        %v3370 = vmul.f32 %v3358, 1.442695
        %v3371 = vpow.pop %v3370
        %v3372 = vmul.f32 %v3359, 1.442695
        %v3373 = vpow.pop %v3372
        %v3374 = vmul.f32 %v3360, 1.442695
        %v3375 = vpow.pop %v3374
        %v3376 = vmul.f32 %v3361, 1.442695
        %v3377 = vpow.pop %v3376
        %v3378 = vld [vmem:[%s4] sm:$0xff]
        %v3379 = vld [vmem:[%s4 + $0x8] sm:$0xff]
        %v3380 = vld [vmem:[%s4 + $0x10] sm:$0xff]
        %v3381 = vld [vmem:[%s4 + $0x18] sm:$0xff]
        %v3382 = vld [vmem:[%s4 + $0x20] sm:$0xff]
        %v3383 = vld [vmem:[%s4 + $0x28] sm:$0xff]
        %v3384 = vld [vmem:[%s4 + $0x30] sm:$0xff]
        %v3385 = vld [vmem:[%s4 + $0x38] sm:$0xff]
        %3387 = vset.pattern.permute.xlu0 0
        %3388 = vperm.xlu0 %3387, %v3378
        %v3389 = vpop.permute.xlu0 %3388
        %3392 = vset.pattern.permute.xlu0 0
        %3393 = vperm.xlu0 %3392, %v3379
        %v3394 = vpop.permute.xlu0 %3393
        %3397 = vset.pattern.permute.xlu0 0
        %3398 = vperm.xlu0 %3397, %v3380
        %v3399 = vpop.permute.xlu0 %3398
        %3402 = vset.pattern.permute.xlu0 0
        %3403 = vperm.xlu0 %3402, %v3381
        %v3404 = vpop.permute.xlu0 %3403
        %3407 = vset.pattern.permute.xlu0 0
        %3408 = vperm.xlu0 %3407, %v3382
        %v3409 = vpop.permute.xlu0 %3408
        %3412 = vset.pattern.permute.xlu0 0
        %3413 = vperm.xlu0 %3412, %v3383
        %v3414 = vpop.permute.xlu0 %3413
        %3417 = vset.pattern.permute.xlu0 0
        %3418 = vperm.xlu0 %3417, %v3384
        %v3419 = vpop.permute.xlu0 %3418
        %3422 = vset.pattern.permute.xlu0 0
        %3423 = vperm.xlu0 %3422, %v3385
        %v3424 = vpop.permute.xlu0 %3423
        %v3426 = vmul.f32 %v3389, %v3363
        %v3427 = vmul.f32 %v3394, %v3365
        %v3428 = vmul.f32 %v3399, %v3367
        %v3429 = vmul.f32 %v3404, %v3369
        %v3430 = vmul.f32 %v3409, %v3371
        %v3431 = vmul.f32 %v3414, %v3373
        %v3432 = vmul.f32 %v3419, %v3375
        %v3433 = vmul.f32 %v3424, %v3377
        %v3434 = vadd.f32 %v3426, %v3427
        %v3435 = vrot.slane %v3434, 4
        %v3436 = vadd.f32 %v3434, %v3435
        %v3437 = vrot.slane %v3436, 2
        %v3438 = vadd.f32 %v3436, %v3437
        %v3439 = vrot.slane %v3438, 1
        %v3440 = vadd.f32 %v3438, %v3439
        %v3441 = vadd.f32 %v3428, %v3429
        %v3442 = vrot.slane %v3441, 4
        %v3443 = vadd.f32 %v3441, %v3442
        %v3444 = vrot.slane %v3443, 2
        %v3445 = vadd.f32 %v3443, %v3444
        %v3446 = vrot.slane %v3445, 1
        %v3447 = vadd.f32 %v3445, %v3446
        %v3448 = vadd.f32 %v3430, %v3431
        %v3449 = vrot.slane %v3448, 4
        %v3450 = vadd.f32 %v3448, %v3449
        %v3451 = vrot.slane %v3450, 2
        %v3452 = vadd.f32 %v3450, %v3451
        %v3453 = vrot.slane %v3452, 1
        %v3454 = vadd.f32 %v3452, %v3453
        %v3455 = vadd.f32 %v3432, %v3433
        %v3456 = vrot.slane %v3455, 4
        %v3457 = vadd.f32 %v3455, %v3456
        %v3458 = vrot.slane %v3457, 2
        %v3459 = vadd.f32 %v3457, %v3458
        %v3460 = vrot.slane %v3459, 1
        %v3461 = vadd.f32 %v3459, %v3460
        %v3462 = vadd.f32 %v3440, %v3250
        %v3463 = vadd.f32 %v3447, %v3259
        %v3464 = vadd.f32 %v3454, %v3268
        %v3465 = vadd.f32 %v3461, %v3277
        %vm3470 = vcmask 1041409
        %v3471 = vsel %vm3470, %v3463, %v3462
        %vm3472 = vcmask 1042434
        %v3473 = vsel %vm3472, %v3464, %v3471
        %vm3474 = vcmask 1043459
        %v3475 = vsel %vm3474, %v3465, %v3473
        %3477 = vst [vmem:[%s331] sm:$0xf] %v3475
        %s3478 = sand.u32 %s181, 1
        %s3479 = scalar_lea.sflag [#allocation4], %s3478
        %s3480 = sand.u32 %s181, 1
        %s3481 = smul.addr %s3480, 4
        %s3482 = scalar_lea.vmem [#allocation3], %s3481
        // Predicated region
        $region90: #{tpu_custom_call.1} parent=84 // pred_check
          %p3483 = pneg %p191
        $region91: #{tpu_custom_call.1} parent=84 // pred_check_branch
          %3485 = sbr.rel (%p3483) target = $region93
        $region92: #{tpu_custom_call.1} parent=84 // pred_region
          %3487 = vsyncadd %s3479, 0
          %s3488 = smul.addr %s21, 4
          %s3489 = scalar_lea.hbm %s7, %s3488
          %s3491 = sshll.u32 %s3482, 4
          %s3492 = int_to_ptr.vmem [resolvable:$true] %s3491
          %s3493 = sshll.u32 %s3489, 4
          %s3494 = int_to_ptr.hbm [resolvable:$true] %s3493
          %3496 = dma.vmem_to_hbm [thread:$0]  %s3492, 64, %s3494, %s3479
        $region93: #{tpu_custom_call.1} parent=84 // pred_fallthru
          _
      $region85: #{tpu_custom_call.1} parent=5 // pred_fallthru
        _
      %p3497 = scmp.le.s32.totalorder 2, %s16
      // Predicated region
      $region94: #{tpu_custom_call.1} parent=5 // pred_check
        %p3498 = pneg %p3497
      $region95: #{tpu_custom_call.1} parent=5 // pred_check_branch
        %3500 = sbr.rel (%p3498) target = $region97
      $region96: #{tpu_custom_call.1} parent=5 // pred_region
        %s3501 = ssub.s32 %s16, 2
        // Predicated region
        $region98: #{tpu_custom_call.1} parent=96 // pred_check
          %p3502 = pneg %p197
        $region99: #{tpu_custom_call.1} parent=96 // pred_check_branch
          %3504 = sbr.rel (%p3502) target = $region101
        $region100: #{tpu_custom_call.1} parent=96 // pred_region
          %s3505 = sand.u32 %s182, 1
          %s3506 = scalar_lea.sflag [#allocation4], %s3505
          %s3507 = sand.u32 %s182, 1
          %s3508 = smul.addr %s3507, 4
          %s3509 = scalar_lea.vmem [#allocation3], %s3508
          %3511 = dma.done %s3506, 64
        $region101: #{tpu_custom_call.1} parent=96 // pred_fallthru
          _
      $region97: #{tpu_custom_call.1} parent=5 // pred_fallthru
        _
    $region6: #{tpu_custom_call.1} parent=1 // loop_footer
      %s20 = sadd.s32 1, %s16
    $region7: #{tpu_custom_call.1} parent=1 // loop_footer_branch
      %15 = sbr.rel target = $region3
    $region8: #{tpu_custom_call.1} parent=1 // loop_exit
      _
    %3512 = vsyncpa [#allocation4], 1
    %s3513 = scalar_lea.sflag [#allocation4], 1
    %3514 = vsyncpa %s3513, 1

</llo_original>
